<compile_context>
chip_gen: v7x
topology: tpu7x:2x2x1
jax: 0.10.0
libtpu: 0.0.40
codegen_flags: <defaults>
</compile_context>

<pallas_src>
import jax
import jax.numpy as jnp
from jax.experimental import pallas as pl
from jax.experimental.pallas import tpu as pltpu


# ---------------------------------------------------------------------------
# Fused kernel: build conv operand -> conv1x1+ReLU -> fc1+ReLU -> fc2+ReLU
# ---------------------------------------------------------------------------
def _fused_sar_kernel(state_ref, action_ref, reward_ref,
                      cwt_ref, cb_ref, w1_ref, b1_ref, w2_ref, b2_ref,
                      o_ref, x_s, y_s, a_s):
    B, C0, HW = state_ref.shape
    A = action_ref.shape[1]
    G = reward_ref.shape[1]
    nb, _ = cwt_ref.shape
    Ct = C0 + A + G

    # -- stage 0: assemble the channel-major conv operand (C_pad, B*HW) in
    #    VMEM.  Replaces the host-side concat / NCHW->NHWC transpose / pad.
    x_s[...] = jnp.zeros_like(x_s)                      # zero padded channels
    for b in range(B):                                  # B is small & static
        cols = slice(b * HW, (b + 1) * HW)
        x_s[0:C0, cols] = state_ref[b]
        x_s[C0:C0 + A, cols] = action_ref[b]
        x_s[C0 + A:Ct, cols] = reward_ref[b]

    # -- stage 1: 1x1 conv == one channel-contraction matmul, + bias, ReLU.
    y = jnp.dot(cwt_ref[...], x_s[...].astype(jnp.bfloat16),
                preferred_element_type=jnp.float32)     # (nb, B*HW) f32
    y_s[...] = jnp.maximum(y + cb_ref[...], 0.0)

    # -- stage 2: relayout the conv activation into the fc1 operand (B, K),
    #    K ordered exactly like torch's x.view(-1, nb*H*W): k = c*HW + p.
    #    Done with static (1, HW) VMEM copies (no reshape / transpose).
    for b in range(B):
        src = slice(b * HW, (b + 1) * HW)
        for c in range(nb):
            a_s[b:b + 1, c * HW:(c + 1) * HW] = y_s[c:c + 1, src]

    # -- stage 3: fc1 as ONE deep-K matmul (pixel reduction happens inside
    #    the MXU accumulator), + bias, ReLU.
    h1 = jnp.dot(a_s[...].astype(jnp.bfloat16), w1_ref[...],
                 preferred_element_type=jnp.float32)    # (B, D)
    h1 = jnp.maximum(h1 + b1_ref[...], 0.0)

    # -- stage 4: fc2 + bias + ReLU; lane-dense (B, 128) store.
    h2 = jnp.dot(h1.astype(jnp.bfloat16), w2_ref[...],
                 preferred_element_type=jnp.float32)
    o_ref[...] = jnp.maximum(h2 + b2_ref[...], 0.0)


def _full_spec(shape):
    n = len(shape)

    def imap(i):
        return (0,) * n

    return pl.BlockSpec(shape, imap)


def fused_forward(state, action, reward, cwt, cb, w1, b1, w2, b2):
    """state/action/reward: (B, C, H*W) f32; returns (B, D) f32."""
    B, _, HW = state.shape
    nb, Cp = cwt.shape
    K, D = w1.shape
    return pl.pallas_call(
        _fused_sar_kernel,
        out_shape=jax.ShapeDtypeStruct((B, D), jnp.float32),
        grid_spec=pltpu.PrefetchScalarGridSpec(
            num_scalar_prefetch=0,
            grid=(1,),                      # everything fits in VMEM (<3 MiB)
            in_specs=[
                _full_spec(state.shape),
                _full_spec(action.shape),
                _full_spec(reward.shape),
                _full_spec(cwt.shape),
                _full_spec(cb.shape),
                _full_spec(w1.shape),
                _full_spec(b1.shape),
                _full_spec(w2.shape),
                _full_spec(b2.shape),
            ],
            out_specs=_full_spec((B, D)),
            scratch_shapes=[
                pltpu.VMEM((Cp, B * HW), jnp.float32),   # conv operand
                pltpu.VMEM((nb, B * HW), jnp.float32),   # conv activation
                pltpu.VMEM((B, K), jnp.float32),         # fc1 LHS
            ]),
        compiler_params=pltpu.CompilerParams(
            dimension_semantics=("arbitrary",)),
    )(state, action, reward, cwt, cb, w1, b1, w2, b2)


# ---------------------------------------------------------------------------
# Module
# ---------------------------------------------------------------------------
class StateActionRewardEncoder:
    def __init__(self, input_dim, action_size, goal_dim, nb_channels=64,
                 state_action_reward_embed_dim=128, key=None):
        if key is None:
            key = jax.random.PRNGKey(0)
        self.input_dim = tuple(input_dim)
        self.action_size = action_size
        self.goal_dim = goal_dim
        self.nb_channels = nb_channels
        self.embed_dim = state_action_reward_embed_dim
        H, W = input_dim[1], input_dim[2]
        self.hw = H * W
        self.conv_feat_dim = self.hw * nb_channels
        self.c_total = input_dim[0] + action_size + goal_dim
        self.c_pad = ((self.c_total + 7) // 8) * 8       # pad channels to 8

        # TODO(synk): torch's weights_init scheme is not replicated; synthetic
        # deterministic init is used instead (load real weights for parity).
        k = jax.random.split(key, 6)
        # cwt: (nb, C_pad) == conv1.weight[:, :, 0, 0] with zero-padded cols.
        cw = 0.05 * jax.random.normal(k[0], (nb_channels, self.c_total),
                                      jnp.float32)
        cw = jnp.pad(cw, ((0, 0), (0, self.c_pad - self.c_total)))
        self.cwt = cw.astype(jnp.bfloat16)
        self.cb = 0.05 * jax.random.normal(k[1], (nb_channels, 1), jnp.float32)
        # w1 == fc1.weight.T, torch feature order k = c*H*W + p, bf16.
        self.w1 = (0.02 * jax.random.normal(
            k[2], (self.conv_feat_dim, self.embed_dim), jnp.float32)
        ).astype(jnp.bfloat16)
        self.b1 = 0.02 * jax.random.normal(k[3], (1, self.embed_dim),
                                           jnp.float32)
        self.w2 = (0.05 * jax.random.normal(
            k[4], (self.embed_dim, self.embed_dim), jnp.float32)
        ).astype(jnp.bfloat16)
        self.b2 = 0.05 * jax.random.normal(k[5], (1, self.embed_dim),
                                           jnp.float32)

        self._fwd = jax.jit(self._forward)   # whole forward under one jit

    def _forward(self, state, action_2d, reward_2d):
        C0, H, W = self.input_dim
        state = state.reshape(-1, C0, H * W)             # torch's .view(...)
        B = state.shape[0]
        action = action_2d.reshape(B, self.action_size, H * W)
        reward = reward_2d.reshape(B, self.goal_dim, H * W)
        return fused_forward(state, action, reward, self.cwt, self.cb,
                             self.w1, self.b1, self.w2, self.b2)

    def __call__(self, state, action_2d, reward_2d):
        return self._fwd(state, action_2d, reward_2d)


# ---------------------------------------------------------------------------
# Pure-JAX reference following the PyTorch (NCHW) forward exactly
# (mirrors the kernel's bf16 operand casts; f32 accumulation).
# ---------------------------------------------------------------------------
def _reference(enc, state, action_2d, reward_2d):
    C0, H, W = enc.input_dim
    state = state.reshape(-1, C0, H, W)
    B = state.shape[0]
    sar = jnp.concatenate([state, action_2d, reward_2d], axis=1)   # NCHW
    x = sar.reshape(B, enc.c_total, H * W)
    xb = x.astype(jnp.bfloat16).astype(jnp.float32)
    cw = enc.cwt[:, :enc.c_total].astype(jnp.float32)              # (nb, Ct)
    y = jnp.einsum('oc,bcp->bop', cw, xb) + enc.cb.reshape(1, -1, 1)
    y = jnp.maximum(y, 0.0)                                        # (B, nb, HW)
    a = y.reshape(B, enc.conv_feat_dim)        # torch x.view(-1, nb*H*W)
    ab = a.astype(jnp.bfloat16).astype(jnp.float32)
    h1 = jnp.maximum(ab @ enc.w1.astype(jnp.float32) + enc.b1, 0.0)
    h1b = h1.astype(jnp.bfloat16).astype(jnp.float32)
    return jnp.maximum(h1b @ enc.w2.astype(jnp.float32) + enc.b2, 0.0)


if __name__ == "__main__":
    input_dim = (4, 8, 8)     # (C, H, W)
    action_size = 2
    goal_dim = 1
    batch = 2

    enc = StateActionRewardEncoder(input_dim, action_size, goal_dim,
                                   nb_channels=64,
                                   state_action_reward_embed_dim=128,
                                   key=jax.random.PRNGKey(0))

    ks, ka, kr = jax.random.split(jax.random.PRNGKey(0), 3)
    state = jax.random.normal(ks, (batch, *input_dim), jnp.float32)
    action_2d = jax.random.normal(
        ka, (batch, action_size, input_dim[1], input_dim[2]), jnp.float32)
    reward_2d = jax.random.normal(
        kr, (batch, goal_dim, input_dim[1], input_dim[2]), jnp.float32)

    out = jax.block_until_ready(enc(state, action_2d, reward_2d))
    ref = _reference(enc, state, action_2d, reward_2d)

    assert out.shape == (batch, 128), out.shape
    max_err = float(jnp.max(jnp.abs(out - ref)))
    assert jnp.allclose(out, ref, atol=2e-3, rtol=2e-3), max_err

    print("KERNEL_OK")
</pallas_src>

<mosaic_0001>
module attributes {stable_mosaic.version = 11 : i64} {
  func.func @_fused_sar_kernel(%arg0: i32, %arg1: memref<2x4x64xf32, #tpu.memory_space<vmem>>, %arg2: memref<2x2x64xf32, #tpu.memory_space<vmem>>, %arg3: memref<2x1x64xf32, #tpu.memory_space<vmem>>, %arg4: memref<64x8xbf16, #tpu.memory_space<vmem>>, %arg5: memref<64x1xf32, #tpu.memory_space<vmem>>, %arg6: memref<4096x128xbf16, #tpu.memory_space<vmem>>, %arg7: memref<1x128xf32, #tpu.memory_space<vmem>>, %arg8: memref<128x128xbf16, #tpu.memory_space<vmem>>, %arg9: memref<1x128xf32, #tpu.memory_space<vmem>>, %arg10: memref<2x128xf32, #tpu.memory_space<vmem>>, %arg11: memref<8x128xf32, #tpu.memory_space<vmem>>, %arg12: memref<64x128xf32, #tpu.memory_space<vmem>>, %arg13: memref<2x4096xf32, #tpu.memory_space<vmem>>) attributes {dimension_semantics = [#tpu.dimension_semantics<arbitrary>], iteration_bounds = array<i64: 1>, scalar_prefetch = 0 : i64, scratch_operands = 3 : i64, tpu.core_type = #tpu.core_type<tc>, window_params = [{pipeline_mode = #tpu.pipeline_mode<synchronous>, transform_indices = @transform_0, window_bounds = array<i64: 2, 4, 64>}, {pipeline_mode = #tpu.pipeline_mode<synchronous>, transform_indices = @transform_1, window_bounds = array<i64: 2, 2, 64>}, {pipeline_mode = #tpu.pipeline_mode<synchronous>, transform_indices = @transform_2, window_bounds = array<i64: 2, 1, 64>}, {pipeline_mode = #tpu.pipeline_mode<synchronous>, transform_indices = @transform_3, window_bounds = array<i64: 64, 8>}, {pipeline_mode = #tpu.pipeline_mode<synchronous>, transform_indices = @transform_4, window_bounds = array<i64: 64, 1>}, {pipeline_mode = #tpu.pipeline_mode<synchronous>, transform_indices = @transform_5, window_bounds = array<i64: 4096, 128>}, {pipeline_mode = #tpu.pipeline_mode<synchronous>, transform_indices = @transform_6, window_bounds = array<i64: 1, 128>}, {pipeline_mode = #tpu.pipeline_mode<synchronous>, transform_indices = @transform_7, window_bounds = array<i64: 128, 128>}, {pipeline_mode = #tpu.pipeline_mode<synchronous>, transform_indices = @transform_8, window_bounds = array<i64: 1, 128>}, {pipeline_mode = #tpu.pipeline_mode<synchronous>, transform_indices = @transform_9, window_bounds = array<i64: 2, 128>}]} {
    %cst = arith.constant 0.000000e+00 : f32
    %0 = vector.broadcast %cst : f32 to vector<8x128xf32>
    %c0 = arith.constant 0 : index
    %c0_0 = arith.constant 0 : index
    %1 = vector.load %arg11[%c0, %c0_0] : memref<8x128xf32, #tpu.memory_space<vmem>>, vector<8x128xf32>
    tpu.vector_store %arg11[%c0, %c0_0], %0 {strides = array<i32>} : memref<8x128xf32, #tpu.memory_space<vmem>>, vector<8x128xf32>,
    %c0_1 = arith.constant 0 : index
    %c0_2 = arith.constant 0 : index
    %c0_3 = arith.constant 0 : index
    %2 = vector.load %arg1[%c0_1, %c0_2, %c0_3] : memref<2x4x64xf32, #tpu.memory_space<vmem>>, vector<1x4x64xf32>
    %3 = vector.shape_cast %2 : vector<1x4x64xf32> to vector<4x64xf32>
    %c0_4 = arith.constant 0 : index
    %c0_5 = arith.constant 0 : index
    %4 = vector.load %arg11[%c0_4, %c0_5] : memref<8x128xf32, #tpu.memory_space<vmem>>, vector<4x64xf32>
    tpu.vector_store %arg11[%c0_4, %c0_5], %3 {strides = array<i32>} : memref<8x128xf32, #tpu.memory_space<vmem>>, vector<4x64xf32>,
    %c0_6 = arith.constant 0 : index
    %c0_7 = arith.constant 0 : index
    %c0_8 = arith.constant 0 : index
    %5 = vector.load %arg2[%c0_6, %c0_7, %c0_8] : memref<2x2x64xf32, #tpu.memory_space<vmem>>, vector<1x2x64xf32>
    %6 = vector.shape_cast %5 : vector<1x2x64xf32> to vector<2x64xf32>
    %c4 = arith.constant 4 : index
    %c0_9 = arith.constant 0 : index
    %7 = vector.load %arg11[%c4, %c0_9] : memref<8x128xf32, #tpu.memory_space<vmem>>, vector<2x64xf32>
    tpu.vector_store %arg11[%c4, %c0_9], %6 {strides = array<i32>} : memref<8x128xf32, #tpu.memory_space<vmem>>, vector<2x64xf32>,
    %c0_10 = arith.constant 0 : index
    %c0_11 = arith.constant 0 : index
    %c0_12 = arith.constant 0 : index
    %8 = vector.load %arg3[%c0_10, %c0_11, %c0_12] : memref<2x1x64xf32, #tpu.memory_space<vmem>>, vector<1x1x64xf32>
    %9 = vector.shape_cast %8 : vector<1x1x64xf32> to vector<1x64xf32>
    %c6 = arith.constant 6 : index
    %c0_13 = arith.constant 0 : index
    %10 = vector.load %arg11[%c6, %c0_13] : memref<8x128xf32, #tpu.memory_space<vmem>>, vector<1x64xf32>
    tpu.vector_store %arg11[%c6, %c0_13], %9 {strides = array<i32>} : memref<8x128xf32, #tpu.memory_space<vmem>>, vector<1x64xf32>,
    %c1 = arith.constant 1 : index
    %c0_14 = arith.constant 0 : index
    %c0_15 = arith.constant 0 : index
    %11 = vector.load %arg1[%c1, %c0_14, %c0_15] : memref<2x4x64xf32, #tpu.memory_space<vmem>>, vector<1x4x64xf32>
    %12 = vector.shape_cast %11 : vector<1x4x64xf32> to vector<4x64xf32>
    %c0_16 = arith.constant 0 : index
    %c64 = arith.constant 64 : index
    %13 = vector.load %arg11[%c0_16, %c64] : memref<8x128xf32, #tpu.memory_space<vmem>>, vector<4x64xf32>
    tpu.vector_store %arg11[%c0_16, %c64], %12 {strides = array<i32>} : memref<8x128xf32, #tpu.memory_space<vmem>>, vector<4x64xf32>,
    %c1_17 = arith.constant 1 : index
    %c0_18 = arith.constant 0 : index
    %c0_19 = arith.constant 0 : index
    %14 = vector.load %arg2[%c1_17, %c0_18, %c0_19] : memref<2x2x64xf32, #tpu.memory_space<vmem>>, vector<1x2x64xf32>
    %15 = vector.shape_cast %14 : vector<1x2x64xf32> to vector<2x64xf32>
    %c4_20 = arith.constant 4 : index
    %c64_21 = arith.constant 64 : index
    %16 = vector.load %arg11[%c4_20, %c64_21] : memref<8x128xf32, #tpu.memory_space<vmem>>, vector<2x64xf32>
    tpu.vector_store %arg11[%c4_20, %c64_21], %15 {strides = array<i32>} : memref<8x128xf32, #tpu.memory_space<vmem>>, vector<2x64xf32>,
    %c1_22 = arith.constant 1 : index
    %c0_23 = arith.constant 0 : index
    %c0_24 = arith.constant 0 : index
    %17 = vector.load %arg3[%c1_22, %c0_23, %c0_24] : memref<2x1x64xf32, #tpu.memory_space<vmem>>, vector<1x1x64xf32>
    %18 = vector.shape_cast %17 : vector<1x1x64xf32> to vector<1x64xf32>
    %c6_25 = arith.constant 6 : index
    %c64_26 = arith.constant 64 : index
    %19 = vector.load %arg11[%c6_25, %c64_26] : memref<8x128xf32, #tpu.memory_space<vmem>>, vector<1x64xf32>
    tpu.vector_store %arg11[%c6_25, %c64_26], %18 {strides = array<i32>} : memref<8x128xf32, #tpu.memory_space<vmem>>, vector<1x64xf32>,
    %c0_27 = arith.constant 0 : index
    %c0_28 = arith.constant 0 : index
    %20 = vector.load %arg4[%c0_27, %c0_28] : memref<64x8xbf16, #tpu.memory_space<vmem>>, vector<64x8xbf16>
    %c0_29 = arith.constant 0 : index
    %c0_30 = arith.constant 0 : index
    %21 = vector.load %arg11[%c0_29, %c0_30] : memref<8x128xf32, #tpu.memory_space<vmem>>, vector<8x128xf32>
    %22 = arith.truncf %21 : vector<8x128xf32> to vector<8x128xbf16>
    %cst_31 = arith.constant dense<0.000000e+00> : vector<64x128xf32>
    %23 = tpu.matmul %20, %22, %cst_31 {dimension_numbers = #tpu.dot_dimension_numbers<[1], [0], [0], [1], [0, 0, 1, 1], [], []>} : vector<64x8xbf16>, vector<8x128xbf16>, vector<64x128xf32> -> vector<64x128xf32>
    %c0_32 = arith.constant 0 : index
    %c0_33 = arith.constant 0 : index
    %24 = vector.load %arg5[%c0_32, %c0_33] : memref<64x1xf32, #tpu.memory_space<vmem>>, vector<64x1xf32>
    %25 = vector.broadcast %24 : vector<64x1xf32> to vector<64x128xf32>
    %26 = arith.addf %23, %25 : vector<64x128xf32>
    %cst_34 = arith.constant 0.000000e+00 : f32
    %27 = vector.broadcast %cst_34 : f32 to vector<64x128xf32>
    %28 = arith.maximumf %26, %27 : vector<64x128xf32>
    %c0_35 = arith.constant 0 : index
    %c0_36 = arith.constant 0 : index
    %29 = vector.load %arg12[%c0_35, %c0_36] : memref<64x128xf32, #tpu.memory_space<vmem>>, vector<64x128xf32>
    tpu.vector_store %arg12[%c0_35, %c0_36], %28 {strides = array<i32>} : memref<64x128xf32, #tpu.memory_space<vmem>>, vector<64x128xf32>,
    %c0_37 = arith.constant 0 : index
    %c0_38 = arith.constant 0 : index
    %30 = vector.load %arg12[%c0_37, %c0_38] : memref<64x128xf32, #tpu.memory_space<vmem>>, vector<1x64xf32>
    %c0_39 = arith.constant 0 : index
    %c0_40 = arith.constant 0 : index
    %31 = vector.load %arg13[%c0_39, %c0_40] : memref<2x4096xf32, #tpu.memory_space<vmem>>, vector<1x64xf32>
    tpu.vector_store %arg13[%c0_39, %c0_40], %30 {strides = array<i32>} : memref<2x4096xf32, #tpu.memory_space<vmem>>, vector<1x64xf32>,
    %c1_41 = arith.constant 1 : index
    %c0_42 = arith.constant 0 : index
    %32 = vector.load %arg12[%c1_41, %c0_42] : memref<64x128xf32, #tpu.memory_space<vmem>>, vector<1x64xf32>
    %c0_43 = arith.constant 0 : index
    %c64_44 = arith.constant 64 : index
    %33 = vector.load %arg13[%c0_43, %c64_44] : memref<2x4096xf32, #tpu.memory_space<vmem>>, vector<1x64xf32>
    tpu.vector_store %arg13[%c0_43, %c64_44], %32 {strides = array<i32>} : memref<2x4096xf32, #tpu.memory_space<vmem>>, vector<1x64xf32>,
    %c2 = arith.constant 2 : index
    %c0_45 = arith.constant 0 : index
    %34 = vector.load %arg12[%c2, %c0_45] : memref<64x128xf32, #tpu.memory_space<vmem>>, vector<1x64xf32>
    %c0_46 = arith.constant 0 : index
    %c128 = arith.constant 128 : index
    %35 = vector.load %arg13[%c0_46, %c128] : memref<2x4096xf32, #tpu.memory_space<vmem>>, vector<1x64xf32>
    tpu.vector_store %arg13[%c0_46, %c128], %34 {strides = array<i32>} : memref<2x4096xf32, #tpu.memory_space<vmem>>, vector<1x64xf32>,
    %c3 = arith.constant 3 : index
    %c0_47 = arith.constant 0 : index
    %36 = vector.load %arg12[%c3, %c0_47] : memref<64x128xf32, #tpu.memory_space<vmem>>, vector<1x64xf32>
    %c0_48 = arith.constant 0 : index
    %c192 = arith.constant 192 : index
    %37 = vector.load %arg13[%c0_48, %c192] : memref<2x4096xf32, #tpu.memory_space<vmem>>, vector<1x64xf32>
    tpu.vector_store %arg13[%c0_48, %c192], %36 {strides = array<i32>} : memref<2x4096xf32, #tpu.memory_space<vmem>>, vector<1x64xf32>,
    %c4_49 = arith.constant 4 : index
    %c0_50 = arith.constant 0 : index
    %38 = vector.load %arg12[%c4_49, %c0_50] : memref<64x128xf32, #tpu.memory_space<vmem>>, vector<1x64xf32>
    %c0_51 = arith.constant 0 : index
    %c256 = arith.constant 256 : index
    %39 = vector.load %arg13[%c0_51, %c256] : memref<2x4096xf32, #tpu.memory_space<vmem>>, vector<1x64xf32>
    tpu.vector_store %arg13[%c0_51, %c256], %38 {strides = array<i32>} : memref<2x4096xf32, #tpu.memory_space<vmem>>, vector<1x64xf32>,
    %c5 = arith.constant 5 : index
    %c0_52 = arith.constant 0 : index
    %40 = vector.load %arg12[%c5, %c0_52] : memref<64x128xf32, #tpu.memory_space<vmem>>, vector<1x64xf32>
    %c0_53 = arith.constant 0 : index
    %c320 = arith.constant 320 : index
    %41 = vector.load %arg13[%c0_53, %c320] : memref<2x4096xf32, #tpu.memory_space<vmem>>, vector<1x64xf32>
    tpu.vector_store %arg13[%c0_53, %c320], %40 {strides = array<i32>} : memref<2x4096xf32, #tpu.memory_space<vmem>>, vector<1x64xf32>,
    %c6_54 = arith.constant 6 : index
    %c0_55 = arith.constant 0 : index
    %42 = vector.load %arg12[%c6_54, %c0_55] : memref<64x128xf32, #tpu.memory_space<vmem>>, vector<1x64xf32>
    %c0_56 = arith.constant 0 : index
    %c384 = arith.constant 384 : index
    %43 = vector.load %arg13[%c0_56, %c384] : memref<2x4096xf32, #tpu.memory_space<vmem>>, vector<1x64xf32>
    tpu.vector_store %arg13[%c0_56, %c384], %42 {strides = array<i32>} : memref<2x4096xf32, #tpu.memory_space<vmem>>, vector<1x64xf32>,
    %c7 = arith.constant 7 : index
    %c0_57 = arith.constant 0 : index
    %44 = vector.load %arg12[%c7, %c0_57] : memref<64x128xf32, #tpu.memory_space<vmem>>, vector<1x64xf32>
    %c0_58 = arith.constant 0 : index
    %c448 = arith.constant 448 : index
    %45 = vector.load %arg13[%c0_58, %c448] : memref<2x4096xf32, #tpu.memory_space<vmem>>, vector<1x64xf32>
    tpu.vector_store %arg13[%c0_58, %c448], %44 {strides = array<i32>} : memref<2x4096xf32, #tpu.memory_space<vmem>>, vector<1x64xf32>,
    %c8 = arith.constant 8 : index
    %c0_59 = arith.constant 0 : index
    %46 = vector.load %arg12[%c8, %c0_59] : memref<64x128xf32, #tpu.memory_space<vmem>>, vector<1x64xf32>
    %c0_60 = arith.constant 0 : index
    %c512 = arith.constant 512 : index
    %47 = vector.load %arg13[%c0_60, %c512] : memref<2x4096xf32, #tpu.memory_space<vmem>>, vector<1x64xf32>
    tpu.vector_store %arg13[%c0_60, %c512], %46 {strides = array<i32>} : memref<2x4096xf32, #tpu.memory_space<vmem>>, vector<1x64xf32>,
    %c9 = arith.constant 9 : index
    %c0_61 = arith.constant 0 : index
    %48 = vector.load %arg12[%c9, %c0_61] : memref<64x128xf32, #tpu.memory_space<vmem>>, vector<1x64xf32>
    %c0_62 = arith.constant 0 : index
    %c576 = arith.constant 576 : index
    %49 = vector.load %arg13[%c0_62, %c576] : memref<2x4096xf32, #tpu.memory_space<vmem>>, vector<1x64xf32>
    tpu.vector_store %arg13[%c0_62, %c576], %48 {strides = array<i32>} : memref<2x4096xf32, #tpu.memory_space<vmem>>, vector<1x64xf32>,
    %c10 = arith.constant 10 : index
    %c0_63 = arith.constant 0 : index
    %50 = vector.load %arg12[%c10, %c0_63] : memref<64x128xf32, #tpu.memory_space<vmem>>, vector<1x64xf32>
    %c0_64 = arith.constant 0 : index
    %c640 = arith.constant 640 : index
    %51 = vector.load %arg13[%c0_64, %c640] : memref<2x4096xf32, #tpu.memory_space<vmem>>, vector<1x64xf32>
    tpu.vector_store %arg13[%c0_64, %c640], %50 {strides = array<i32>} : memref<2x4096xf32, #tpu.memory_space<vmem>>, vector<1x64xf32>,
    %c11 = arith.constant 11 : index
    %c0_65 = arith.constant 0 : index
    %52 = vector.load %arg12[%c11, %c0_65] : memref<64x128xf32, #tpu.memory_space<vmem>>, vector<1x64xf32>
    %c0_66 = arith.constant 0 : index
    %c704 = arith.constant 704 : index
    %53 = vector.load %arg13[%c0_66, %c704] : memref<2x4096xf32, #tpu.memory_space<vmem>>, vector<1x64xf32>
    tpu.vector_store %arg13[%c0_66, %c704], %52 {strides = array<i32>} : memref<2x4096xf32, #tpu.memory_space<vmem>>, vector<1x64xf32>,
    %c12 = arith.constant 12 : index
    %c0_67 = arith.constant 0 : index
    %54 = vector.load %arg12[%c12, %c0_67] : memref<64x128xf32, #tpu.memory_space<vmem>>, vector<1x64xf32>
    %c0_68 = arith.constant 0 : index
    %c768 = arith.constant 768 : index
    %55 = vector.load %arg13[%c0_68, %c768] : memref<2x4096xf32, #tpu.memory_space<vmem>>, vector<1x64xf32>
    tpu.vector_store %arg13[%c0_68, %c768], %54 {strides = array<i32>} : memref<2x4096xf32, #tpu.memory_space<vmem>>, vector<1x64xf32>,
    %c13 = arith.constant 13 : index
    %c0_69 = arith.constant 0 : index
    %56 = vector.load %arg12[%c13, %c0_69] : memref<64x128xf32, #tpu.memory_space<vmem>>, vector<1x64xf32>
    %c0_70 = arith.constant 0 : index
    %c832 = arith.constant 832 : index
    %57 = vector.load %arg13[%c0_70, %c832] : memref<2x4096xf32, #tpu.memory_space<vmem>>, vector<1x64xf32>
    tpu.vector_store %arg13[%c0_70, %c832], %56 {strides = array<i32>} : memref<2x4096xf32, #tpu.memory_space<vmem>>, vector<1x64xf32>,
    %c14 = arith.constant 14 : index
    %c0_71 = arith.constant 0 : index
    %58 = vector.load %arg12[%c14, %c0_71] : memref<64x128xf32, #tpu.memory_space<vmem>>, vector<1x64xf32>
    %c0_72 = arith.constant 0 : index
    %c896 = arith.constant 896 : index
    %59 = vector.load %arg13[%c0_72, %c896] : memref<2x4096xf32, #tpu.memory_space<vmem>>, vector<1x64xf32>
    tpu.vector_store %arg13[%c0_72, %c896], %58 {strides = array<i32>} : memref<2x4096xf32, #tpu.memory_space<vmem>>, vector<1x64xf32>,
    %c15 = arith.constant 15 : index
    %c0_73 = arith.constant 0 : index
    %60 = vector.load %arg12[%c15, %c0_73] : memref<64x128xf32, #tpu.memory_space<vmem>>, vector<1x64xf32>
    %c0_74 = arith.constant 0 : index
    %c960 = arith.constant 960 : index
    %61 = vector.load %arg13[%c0_74, %c960] : memref<2x4096xf32, #tpu.memory_space<vmem>>, vector<1x64xf32>
    tpu.vector_store %arg13[%c0_74, %c960], %60 {strides = array<i32>} : memref<2x4096xf32, #tpu.memory_space<vmem>>, vector<1x64xf32>,
    %c16 = arith.constant 16 : index
    %c0_75 = arith.constant 0 : index
    %62 = vector.load %arg12[%c16, %c0_75] : memref<64x128xf32, #tpu.memory_space<vmem>>, vector<1x64xf32>
    %c0_76 = arith.constant 0 : index
    %c1024 = arith.constant 1024 : index
    %63 = vector.load %arg13[%c0_76, %c1024] : memref<2x4096xf32, #tpu.memory_space<vmem>>, vector<1x64xf32>
    tpu.vector_store %arg13[%c0_76, %c1024], %62 {strides = array<i32>} : memref<2x4096xf32, #tpu.memory_space<vmem>>, vector<1x64xf32>,
    %c17 = arith.constant 17 : index
    %c0_77 = arith.constant 0 : index
    %64 = vector.load %arg12[%c17, %c0_77] : memref<64x128xf32, #tpu.memory_space<vmem>>, vector<1x64xf32>
    %c0_78 = arith.constant 0 : index
    %c1088 = arith.constant 1088 : index
    %65 = vector.load %arg13[%c0_78, %c1088] : memref<2x4096xf32, #tpu.memory_space<vmem>>, vector<1x64xf32>
    tpu.vector_store %arg13[%c0_78, %c1088], %64 {strides = array<i32>} : memref<2x4096xf32, #tpu.memory_space<vmem>>, vector<1x64xf32>,
    %c18 = arith.constant 18 : index
    %c0_79 = arith.constant 0 : index
    %66 = vector.load %arg12[%c18, %c0_79] : memref<64x128xf32, #tpu.memory_space<vmem>>, vector<1x64xf32>
    %c0_80 = arith.constant 0 : index
    %c1152 = arith.constant 1152 : index
    %67 = vector.load %arg13[%c0_80, %c1152] : memref<2x4096xf32, #tpu.memory_space<vmem>>, vector<1x64xf32>
    tpu.vector_store %arg13[%c0_80, %c1152], %66 {strides = array<i32>} : memref<2x4096xf32, #tpu.memory_space<vmem>>, vector<1x64xf32>,
    %c19 = arith.constant 19 : index
    %c0_81 = arith.constant 0 : index
    %68 = vector.load %arg12[%c19, %c0_81] : memref<64x128xf32, #tpu.memory_space<vmem>>, vector<1x64xf32>
    %c0_82 = arith.constant 0 : index
    %c1216 = arith.constant 1216 : index
    %69 = vector.load %arg13[%c0_82, %c1216] : memref<2x4096xf32, #tpu.memory_space<vmem>>, vector<1x64xf32>
    tpu.vector_store %arg13[%c0_82, %c1216], %68 {strides = array<i32>} : memref<2x4096xf32, #tpu.memory_space<vmem>>, vector<1x64xf32>,
    %c20 = arith.constant 20 : index
    %c0_83 = arith.constant 0 : index
    %70 = vector.load %arg12[%c20, %c0_83] : memref<64x128xf32, #tpu.memory_space<vmem>>, vector<1x64xf32>
    %c0_84 = arith.constant 0 : index
    %c1280 = arith.constant 1280 : index
    %71 = vector.load %arg13[%c0_84, %c1280] : memref<2x4096xf32, #tpu.memory_space<vmem>>, vector<1x64xf32>
    tpu.vector_store %arg13[%c0_84, %c1280], %70 {strides = array<i32>} : memref<2x4096xf32, #tpu.memory_space<vmem>>, vector<1x64xf32>,
    %c21 = arith.constant 21 : index
    %c0_85 = arith.constant 0 : index
    %72 = vector.load %arg12[%c21, %c0_85] : memref<64x128xf32, #tpu.memory_space<vmem>>, vector<1x64xf32>
    %c0_86 = arith.constant 0 : index
    %c1344 = arith.constant 1344 : index
    %73 = vector.load %arg13[%c0_86, %c1344] : memref<2x4096xf32, #tpu.memory_space<vmem>>, vector<1x64xf32>
    tpu.vector_store %arg13[%c0_86, %c1344], %72 {strides = array<i32>} : memref<2x4096xf32, #tpu.memory_space<vmem>>, vector<1x64xf32>,
    %c22 = arith.constant 22 : index
    %c0_87 = arith.constant 0 : index
    %74 = vector.load %arg12[%c22, %c0_87] : memref<64x128xf32, #tpu.memory_space<vmem>>, vector<1x64xf32>
    %c0_88 = arith.constant 0 : index
    %c1408 = arith.constant 1408 : index
    %75 = vector.load %arg13[%c0_88, %c1408] : memref<2x4096xf32, #tpu.memory_space<vmem>>, vector<1x64xf32>
    tpu.vector_store %arg13[%c0_88, %c1408], %74 {strides = array<i32>} : memref<2x4096xf32, #tpu.memory_space<vmem>>, vector<1x64xf32>,
    %c23 = arith.constant 23 : index
    %c0_89 = arith.constant 0 : index
    %76 = vector.load %arg12[%c23, %c0_89] : memref<64x128xf32, #tpu.memory_space<vmem>>, vector<1x64xf32>
    %c0_90 = arith.constant 0 : index
    %c1472 = arith.constant 1472 : index
    %77 = vector.load %arg13[%c0_90, %c1472] : memref<2x4096xf32, #tpu.memory_space<vmem>>, vector<1x64xf32>
    tpu.vector_store %arg13[%c0_90, %c1472], %76 {strides = array<i32>} : memref<2x4096xf32, #tpu.memory_space<vmem>>, vector<1x64xf32>,
    %c24 = arith.constant 24 : index
    %c0_91 = arith.constant 0 : index
    %78 = vector.load %arg12[%c24, %c0_91] : memref<64x128xf32, #tpu.memory_space<vmem>>, vector<1x64xf32>
    %c0_92 = arith.constant 0 : index
    %c1536 = arith.constant 1536 : index
    %79 = vector.load %arg13[%c0_92, %c1536] : memref<2x4096xf32, #tpu.memory_space<vmem>>, vector<1x64xf32>
    tpu.vector_store %arg13[%c0_92, %c1536], %78 {strides = array<i32>} : memref<2x4096xf32, #tpu.memory_space<vmem>>, vector<1x64xf32>,
    %c25 = arith.constant 25 : index
    %c0_93 = arith.constant 0 : index
    %80 = vector.load %arg12[%c25, %c0_93] : memref<64x128xf32, #tpu.memory_space<vmem>>, vector<1x64xf32>
    %c0_94 = arith.constant 0 : index
    %c1600 = arith.constant 1600 : index
    %81 = vector.load %arg13[%c0_94, %c1600] : memref<2x4096xf32, #tpu.memory_space<vmem>>, vector<1x64xf32>
    tpu.vector_store %arg13[%c0_94, %c1600], %80 {strides = array<i32>} : memref<2x4096xf32, #tpu.memory_space<vmem>>, vector<1x64xf32>,
    %c26 = arith.constant 26 : index
    %c0_95 = arith.constant 0 : index
    %82 = vector.load %arg12[%c26, %c0_95] : memref<64x128xf32, #tpu.memory_space<vmem>>, vector<1x64xf32>
    %c0_96 = arith.constant 0 : index
    %c1664 = arith.constant 1664 : index
    %83 = vector.load %arg13[%c0_96, %c1664] : memref<2x4096xf32, #tpu.memory_space<vmem>>, vector<1x64xf32>
    tpu.vector_store %arg13[%c0_96, %c1664], %82 {strides = array<i32>} : memref<2x4096xf32, #tpu.memory_space<vmem>>, vector<1x64xf32>,
    %c27 = arith.constant 27 : index
    %c0_97 = arith.constant 0 : index
    %84 = vector.load %arg12[%c27, %c0_97] : memref<64x128xf32, #tpu.memory_space<vmem>>, vector<1x64xf32>
    %c0_98 = arith.constant 0 : index
    %c1728 = arith.constant 1728 : index
    %85 = vector.load %arg13[%c0_98, %c1728] : memref<2x4096xf32, #tpu.memory_space<vmem>>, vector<1x64xf32>
    tpu.vector_store %arg13[%c0_98, %c1728], %84 {strides = array<i32>} : memref<2x4096xf32, #tpu.memory_space<vmem>>, vector<1x64xf32>,
    %c28 = arith.constant 28 : index
    %c0_99 = arith.constant 0 : index
    %86 = vector.load %arg12[%c28, %c0_99] : memref<64x128xf32, #tpu.memory_space<vmem>>, vector<1x64xf32>
    %c0_100 = arith.constant 0 : index
    %c1792 = arith.constant 1792 : index
    %87 = vector.load %arg13[%c0_100, %c1792] : memref<2x4096xf32, #tpu.memory_space<vmem>>, vector<1x64xf32>
    tpu.vector_store %arg13[%c0_100, %c1792], %86 {strides = array<i32>} : memref<2x4096xf32, #tpu.memory_space<vmem>>, vector<1x64xf32>,
    %c29 = arith.constant 29 : index
    %c0_101 = arith.constant 0 : index
    %88 = vector.load %arg12[%c29, %c0_101] : memref<64x128xf32, #tpu.memory_space<vmem>>, vector<1x64xf32>
    %c0_102 = arith.constant 0 : index
    %c1856 = arith.constant 1856 : index
    %89 = vector.load %arg13[%c0_102, %c1856] : memref<2x4096xf32, #tpu.memory_space<vmem>>, vector<1x64xf32>
    tpu.vector_store %arg13[%c0_102, %c1856], %88 {strides = array<i32>} : memref<2x4096xf32, #tpu.memory_space<vmem>>, vector<1x64xf32>,
    %c30 = arith.constant 30 : index
    %c0_103 = arith.constant 0 : index
    %90 = vector.load %arg12[%c30, %c0_103] : memref<64x128xf32, #tpu.memory_space<vmem>>, vector<1x64xf32>
    %c0_104 = arith.constant 0 : index
    %c1920 = arith.constant 1920 : index
    %91 = vector.load %arg13[%c0_104, %c1920] : memref<2x4096xf32, #tpu.memory_space<vmem>>, vector<1x64xf32>
    tpu.vector_store %arg13[%c0_104, %c1920], %90 {strides = array<i32>} : memref<2x4096xf32, #tpu.memory_space<vmem>>, vector<1x64xf32>,
    %c31 = arith.constant 31 : index
    %c0_105 = arith.constant 0 : index
    %92 = vector.load %arg12[%c31, %c0_105] : memref<64x128xf32, #tpu.memory_space<vmem>>, vector<1x64xf32>
    %c0_106 = arith.constant 0 : index
    %c1984 = arith.constant 1984 : index
    %93 = vector.load %arg13[%c0_106, %c1984] : memref<2x4096xf32, #tpu.memory_space<vmem>>, vector<1x64xf32>
    tpu.vector_store %arg13[%c0_106, %c1984], %92 {strides = array<i32>} : memref<2x4096xf32, #tpu.memory_space<vmem>>, vector<1x64xf32>,
    %c32 = arith.constant 32 : index
    %c0_107 = arith.constant 0 : index
    %94 = vector.load %arg12[%c32, %c0_107] : memref<64x128xf32, #tpu.memory_space<vmem>>, vector<1x64xf32>
    %c0_108 = arith.constant 0 : index
    %c2048 = arith.constant 2048 : index
    %95 = vector.load %arg13[%c0_108, %c2048] : memref<2x4096xf32, #tpu.memory_space<vmem>>, vector<1x64xf32>
    tpu.vector_store %arg13[%c0_108, %c2048], %94 {strides = array<i32>} : memref<2x4096xf32, #tpu.memory_space<vmem>>, vector<1x64xf32>,
    %c33 = arith.constant 33 : index
    %c0_109 = arith.constant 0 : index
    %96 = vector.load %arg12[%c33, %c0_109] : memref<64x128xf32, #tpu.memory_space<vmem>>, vector<1x64xf32>
    %c0_110 = arith.constant 0 : index
    %c2112 = arith.constant 2112 : index
    %97 = vector.load %arg13[%c0_110, %c2112] : memref<2x4096xf32, #tpu.memory_space<vmem>>, vector<1x64xf32>
    tpu.vector_store %arg13[%c0_110, %c2112], %96 {strides = array<i32>} : memref<2x4096xf32, #tpu.memory_space<vmem>>, vector<1x64xf32>,
    %c34 = arith.constant 34 : index
    %c0_111 = arith.constant 0 : index
    %98 = vector.load %arg12[%c34, %c0_111] : memref<64x128xf32, #tpu.memory_space<vmem>>, vector<1x64xf32>
    %c0_112 = arith.constant 0 : index
    %c2176 = arith.constant 2176 : index
    %99 = vector.load %arg13[%c0_112, %c2176] : memref<2x4096xf32, #tpu.memory_space<vmem>>, vector<1x64xf32>
    tpu.vector_store %arg13[%c0_112, %c2176], %98 {strides = array<i32>} : memref<2x4096xf32, #tpu.memory_space<vmem>>, vector<1x64xf32>,
    %c35 = arith.constant 35 : index
    %c0_113 = arith.constant 0 : index
    %100 = vector.load %arg12[%c35, %c0_113] : memref<64x128xf32, #tpu.memory_space<vmem>>, vector<1x64xf32>
    %c0_114 = arith.constant 0 : index
    %c2240 = arith.constant 2240 : index
    %101 = vector.load %arg13[%c0_114, %c2240] : memref<2x4096xf32, #tpu.memory_space<vmem>>, vector<1x64xf32>
    tpu.vector_store %arg13[%c0_114, %c2240], %100 {strides = array<i32>} : memref<2x4096xf32, #tpu.memory_space<vmem>>, vector<1x64xf32>,
    %c36 = arith.constant 36 : index
    %c0_115 = arith.constant 0 : index
    %102 = vector.load %arg12[%c36, %c0_115] : memref<64x128xf32, #tpu.memory_space<vmem>>, vector<1x64xf32>
    %c0_116 = arith.constant 0 : index
    %c2304 = arith.constant 2304 : index
    %103 = vector.load %arg13[%c0_116, %c2304] : memref<2x4096xf32, #tpu.memory_space<vmem>>, vector<1x64xf32>
    tpu.vector_store %arg13[%c0_116, %c2304], %102 {strides = array<i32>} : memref<2x4096xf32, #tpu.memory_space<vmem>>, vector<1x64xf32>,
    %c37 = arith.constant 37 : index
    %c0_117 = arith.constant 0 : index
    %104 = vector.load %arg12[%c37, %c0_117] : memref<64x128xf32, #tpu.memory_space<vmem>>, vector<1x64xf32>
    %c0_118 = arith.constant 0 : index
    %c2368 = arith.constant 2368 : index
    %105 = vector.load %arg13[%c0_118, %c2368] : memref<2x4096xf32, #tpu.memory_space<vmem>>, vector<1x64xf32>
    tpu.vector_store %arg13[%c0_118, %c2368], %104 {strides = array<i32>} : memref<2x4096xf32, #tpu.memory_space<vmem>>, vector<1x64xf32>,
    %c38 = arith.constant 38 : index
    %c0_119 = arith.constant 0 : index
    %106 = vector.load %arg12[%c38, %c0_119] : memref<64x128xf32, #tpu.memory_space<vmem>>, vector<1x64xf32>
    %c0_120 = arith.constant 0 : index
    %c2432 = arith.constant 2432 : index
    %107 = vector.load %arg13[%c0_120, %c2432] : memref<2x4096xf32, #tpu.memory_space<vmem>>, vector<1x64xf32>
    tpu.vector_store %arg13[%c0_120, %c2432], %106 {strides = array<i32>} : memref<2x4096xf32, #tpu.memory_space<vmem>>, vector<1x64xf32>,
    %c39 = arith.constant 39 : index
    %c0_121 = arith.constant 0 : index
    %108 = vector.load %arg12[%c39, %c0_121] : memref<64x128xf32, #tpu.memory_space<vmem>>, vector<1x64xf32>
    %c0_122 = arith.constant 0 : index
    %c2496 = arith.constant 2496 : index
    %109 = vector.load %arg13[%c0_122, %c2496] : memref<2x4096xf32, #tpu.memory_space<vmem>>, vector<1x64xf32>
    tpu.vector_store %arg13[%c0_122, %c2496], %108 {strides = array<i32>} : memref<2x4096xf32, #tpu.memory_space<vmem>>, vector<1x64xf32>,
    %c40 = arith.constant 40 : index
    %c0_123 = arith.constant 0 : index
    %110 = vector.load %arg12[%c40, %c0_123] : memref<64x128xf32, #tpu.memory_space<vmem>>, vector<1x64xf32>
    %c0_124 = arith.constant 0 : index
    %c2560 = arith.constant 2560 : index
    %111 = vector.load %arg13[%c0_124, %c2560] : memref<2x4096xf32, #tpu.memory_space<vmem>>, vector<1x64xf32>
    tpu.vector_store %arg13[%c0_124, %c2560], %110 {strides = array<i32>} : memref<2x4096xf32, #tpu.memory_space<vmem>>, vector<1x64xf32>,
    %c41 = arith.constant 41 : index
    %c0_125 = arith.constant 0 : index
    %112 = vector.load %arg12[%c41, %c0_125] : memref<64x128xf32, #tpu.memory_space<vmem>>, vector<1x64xf32>
    %c0_126 = arith.constant 0 : index
    %c2624 = arith.constant 2624 : index
    %113 = vector.load %arg13[%c0_126, %c2624] : memref<2x4096xf32, #tpu.memory_space<vmem>>, vector<1x64xf32>
    tpu.vector_store %arg13[%c0_126, %c2624], %112 {strides = array<i32>} : memref<2x4096xf32, #tpu.memory_space<vmem>>, vector<1x64xf32>,
    %c42 = arith.constant 42 : index
    %c0_127 = arith.constant 0 : index
    %114 = vector.load %arg12[%c42, %c0_127] : memref<64x128xf32, #tpu.memory_space<vmem>>, vector<1x64xf32>
    %c0_128 = arith.constant 0 : index
    %c2688 = arith.constant 2688 : index
    %115 = vector.load %arg13[%c0_128, %c2688] : memref<2x4096xf32, #tpu.memory_space<vmem>>, vector<1x64xf32>
    tpu.vector_store %arg13[%c0_128, %c2688], %114 {strides = array<i32>} : memref<2x4096xf32, #tpu.memory_space<vmem>>, vector<1x64xf32>,
    %c43 = arith.constant 43 : index
    %c0_129 = arith.constant 0 : index
    %116 = vector.load %arg12[%c43, %c0_129] : memref<64x128xf32, #tpu.memory_space<vmem>>, vector<1x64xf32>
    %c0_130 = arith.constant 0 : index
    %c2752 = arith.constant 2752 : index
    %117 = vector.load %arg13[%c0_130, %c2752] : memref<2x4096xf32, #tpu.memory_space<vmem>>, vector<1x64xf32>
    tpu.vector_store %arg13[%c0_130, %c2752], %116 {strides = array<i32>} : memref<2x4096xf32, #tpu.memory_space<vmem>>, vector<1x64xf32>,
    %c44 = arith.constant 44 : index
    %c0_131 = arith.constant 0 : index
    %118 = vector.load %arg12[%c44, %c0_131] : memref<64x128xf32, #tpu.memory_space<vmem>>, vector<1x64xf32>
    %c0_132 = arith.constant 0 : index
    %c2816 = arith.constant 2816 : index
    %119 = vector.load %arg13[%c0_132, %c2816] : memref<2x4096xf32, #tpu.memory_space<vmem>>, vector<1x64xf32>
    tpu.vector_store %arg13[%c0_132, %c2816], %118 {strides = array<i32>} : memref<2x4096xf32, #tpu.memory_space<vmem>>, vector<1x64xf32>,
    %c45 = arith.constant 45 : index
    %c0_133 = arith.constant 0 : index
    %120 = vector.load %arg12[%c45, %c0_133] : memref<64x128xf32, #tpu.memory_space<vmem>>, vector<1x64xf32>
    %c0_134 = arith.constant 0 : index
    %c2880 = arith.constant 2880 : index
    %121 = vector.load %arg13[%c0_134, %c2880] : memref<2x4096xf32, #tpu.memory_space<vmem>>, vector<1x64xf32>
    tpu.vector_store %arg13[%c0_134, %c2880], %120 {strides = array<i32>} : memref<2x4096xf32, #tpu.memory_space<vmem>>, vector<1x64xf32>,
    %c46 = arith.constant 46 : index
    %c0_135 = arith.constant 0 : index
    %122 = vector.load %arg12[%c46, %c0_135] : memref<64x128xf32, #tpu.memory_space<vmem>>, vector<1x64xf32>
    %c0_136 = arith.constant 0 : index
    %c2944 = arith.constant 2944 : index
    %123 = vector.load %arg13[%c0_136, %c2944] : memref<2x4096xf32, #tpu.memory_space<vmem>>, vector<1x64xf32>
    tpu.vector_store %arg13[%c0_136, %c2944], %122 {strides = array<i32>} : memref<2x4096xf32, #tpu.memory_space<vmem>>, vector<1x64xf32>,
    %c47 = arith.constant 47 : index
    %c0_137 = arith.constant 0 : index
    %124 = vector.load %arg12[%c47, %c0_137] : memref<64x128xf32, #tpu.memory_space<vmem>>, vector<1x64xf32>
    %c0_138 = arith.constant 0 : index
    %c3008 = arith.constant 3008 : index
    %125 = vector.load %arg13[%c0_138, %c3008] : memref<2x4096xf32, #tpu.memory_space<vmem>>, vector<1x64xf32>
    tpu.vector_store %arg13[%c0_138, %c3008], %124 {strides = array<i32>} : memref<2x4096xf32, #tpu.memory_space<vmem>>, vector<1x64xf32>,
    %c48 = arith.constant 48 : index
    %c0_139 = arith.constant 0 : index
    %126 = vector.load %arg12[%c48, %c0_139] : memref<64x128xf32, #tpu.memory_space<vmem>>, vector<1x64xf32>
    %c0_140 = arith.constant 0 : index
    %c3072 = arith.constant 3072 : index
    %127 = vector.load %arg13[%c0_140, %c3072] : memref<2x4096xf32, #tpu.memory_space<vmem>>, vector<1x64xf32>
    tpu.vector_store %arg13[%c0_140, %c3072], %126 {strides = array<i32>} : memref<2x4096xf32, #tpu.memory_space<vmem>>, vector<1x64xf32>,
    %c49 = arith.constant 49 : index
    %c0_141 = arith.constant 0 : index
    %128 = vector.load %arg12[%c49, %c0_141] : memref<64x128xf32, #tpu.memory_space<vmem>>, vector<1x64xf32>
    %c0_142 = arith.constant 0 : index
    %c3136 = arith.constant 3136 : index
    %129 = vector.load %arg13[%c0_142, %c3136] : memref<2x4096xf32, #tpu.memory_space<vmem>>, vector<1x64xf32>
    tpu.vector_store %arg13[%c0_142, %c3136], %128 {strides = array<i32>} : memref<2x4096xf32, #tpu.memory_space<vmem>>, vector<1x64xf32>,
    %c50 = arith.constant 50 : index
    %c0_143 = arith.constant 0 : index
    %130 = vector.load %arg12[%c50, %c0_143] : memref<64x128xf32, #tpu.memory_space<vmem>>, vector<1x64xf32>
    %c0_144 = arith.constant 0 : index
    %c3200 = arith.constant 3200 : index
    %131 = vector.load %arg13[%c0_144, %c3200] : memref<2x4096xf32, #tpu.memory_space<vmem>>, vector<1x64xf32>
    tpu.vector_store %arg13[%c0_144, %c3200], %130 {strides = array<i32>} : memref<2x4096xf32, #tpu.memory_space<vmem>>, vector<1x64xf32>,
    %c51 = arith.constant 51 : index
    %c0_145 = arith.constant 0 : index
    %132 = vector.load %arg12[%c51, %c0_145] : memref<64x128xf32, #tpu.memory_space<vmem>>, vector<1x64xf32>
    %c0_146 = arith.constant 0 : index
    %c3264 = arith.constant 3264 : index
    %133 = vector.load %arg13[%c0_146, %c3264] : memref<2x4096xf32, #tpu.memory_space<vmem>>, vector<1x64xf32>
    tpu.vector_store %arg13[%c0_146, %c3264], %132 {strides = array<i32>} : memref<2x4096xf32, #tpu.memory_space<vmem>>, vector<1x64xf32>,
    %c52 = arith.constant 52 : index
    %c0_147 = arith.constant 0 : index
    %134 = vector.load %arg12[%c52, %c0_147] : memref<64x128xf32, #tpu.memory_space<vmem>>, vector<1x64xf32>
    %c0_148 = arith.constant 0 : index
    %c3328 = arith.constant 3328 : index
    %135 = vector.load %arg13[%c0_148, %c3328] : memref<2x4096xf32, #tpu.memory_space<vmem>>, vector<1x64xf32>
    tpu.vector_store %arg13[%c0_148, %c3328], %134 {strides = array<i32>} : memref<2x4096xf32, #tpu.memory_space<vmem>>, vector<1x64xf32>,
    %c53 = arith.constant 53 : index
    %c0_149 = arith.constant 0 : index
    %136 = vector.load %arg12[%c53, %c0_149] : memref<64x128xf32, #tpu.memory_space<vmem>>, vector<1x64xf32>
    %c0_150 = arith.constant 0 : index
    %c3392 = arith.constant 3392 : index
    %137 = vector.load %arg13[%c0_150, %c3392] : memref<2x4096xf32, #tpu.memory_space<vmem>>, vector<1x64xf32>
    tpu.vector_store %arg13[%c0_150, %c3392], %136 {strides = array<i32>} : memref<2x4096xf32, #tpu.memory_space<vmem>>, vector<1x64xf32>,
    %c54 = arith.constant 54 : index
    %c0_151 = arith.constant 0 : index
    %138 = vector.load %arg12[%c54, %c0_151] : memref<64x128xf32, #tpu.memory_space<vmem>>, vector<1x64xf32>
    %c0_152 = arith.constant 0 : index
    %c3456 = arith.constant 3456 : index
    %139 = vector.load %arg13[%c0_152, %c3456] : memref<2x4096xf32, #tpu.memory_space<vmem>>, vector<1x64xf32>
    tpu.vector_store %arg13[%c0_152, %c3456], %138 {strides = array<i32>} : memref<2x4096xf32, #tpu.memory_space<vmem>>, vector<1x64xf32>,
    %c55 = arith.constant 55 : index
    %c0_153 = arith.constant 0 : index
    %140 = vector.load %arg12[%c55, %c0_153] : memref<64x128xf32, #tpu.memory_space<vmem>>, vector<1x64xf32>
    %c0_154 = arith.constant 0 : index
    %c3520 = arith.constant 3520 : index
    %141 = vector.load %arg13[%c0_154, %c3520] : memref<2x4096xf32, #tpu.memory_space<vmem>>, vector<1x64xf32>
    tpu.vector_store %arg13[%c0_154, %c3520], %140 {strides = array<i32>} : memref<2x4096xf32, #tpu.memory_space<vmem>>, vector<1x64xf32>,
    %c56 = arith.constant 56 : index
    %c0_155 = arith.constant 0 : index
    %142 = vector.load %arg12[%c56, %c0_155] : memref<64x128xf32, #tpu.memory_space<vmem>>, vector<1x64xf32>
    %c0_156 = arith.constant 0 : index
    %c3584 = arith.constant 3584 : index
    %143 = vector.load %arg13[%c0_156, %c3584] : memref<2x4096xf32, #tpu.memory_space<vmem>>, vector<1x64xf32>
    tpu.vector_store %arg13[%c0_156, %c3584], %142 {strides = array<i32>} : memref<2x4096xf32, #tpu.memory_space<vmem>>, vector<1x64xf32>,
    %c57 = arith.constant 57 : index
    %c0_157 = arith.constant 0 : index
    %144 = vector.load %arg12[%c57, %c0_157] : memref<64x128xf32, #tpu.memory_space<vmem>>, vector<1x64xf32>
    %c0_158 = arith.constant 0 : index
    %c3648 = arith.constant 3648 : index
    %145 = vector.load %arg13[%c0_158, %c3648] : memref<2x4096xf32, #tpu.memory_space<vmem>>, vector<1x64xf32>
    tpu.vector_store %arg13[%c0_158, %c3648], %144 {strides = array<i32>} : memref<2x4096xf32, #tpu.memory_space<vmem>>, vector<1x64xf32>,
    %c58 = arith.constant 58 : index
    %c0_159 = arith.constant 0 : index
    %146 = vector.load %arg12[%c58, %c0_159] : memref<64x128xf32, #tpu.memory_space<vmem>>, vector<1x64xf32>
    %c0_160 = arith.constant 0 : index
    %c3712 = arith.constant 3712 : index
    %147 = vector.load %arg13[%c0_160, %c3712] : memref<2x4096xf32, #tpu.memory_space<vmem>>, vector<1x64xf32>
    tpu.vector_store %arg13[%c0_160, %c3712], %146 {strides = array<i32>} : memref<2x4096xf32, #tpu.memory_space<vmem>>, vector<1x64xf32>,
    %c59 = arith.constant 59 : index
    %c0_161 = arith.constant 0 : index
    %148 = vector.load %arg12[%c59, %c0_161] : memref<64x128xf32, #tpu.memory_space<vmem>>, vector<1x64xf32>
    %c0_162 = arith.constant 0 : index
    %c3776 = arith.constant 3776 : index
    %149 = vector.load %arg13[%c0_162, %c3776] : memref<2x4096xf32, #tpu.memory_space<vmem>>, vector<1x64xf32>
    tpu.vector_store %arg13[%c0_162, %c3776], %148 {strides = array<i32>} : memref<2x4096xf32, #tpu.memory_space<vmem>>, vector<1x64xf32>,
    %c60 = arith.constant 60 : index
    %c0_163 = arith.constant 0 : index
    %150 = vector.load %arg12[%c60, %c0_163] : memref<64x128xf32, #tpu.memory_space<vmem>>, vector<1x64xf32>
    %c0_164 = arith.constant 0 : index
    %c3840 = arith.constant 3840 : index
    %151 = vector.load %arg13[%c0_164, %c3840] : memref<2x4096xf32, #tpu.memory_space<vmem>>, vector<1x64xf32>
    tpu.vector_store %arg13[%c0_164, %c3840], %150 {strides = array<i32>} : memref<2x4096xf32, #tpu.memory_space<vmem>>, vector<1x64xf32>,
    %c61 = arith.constant 61 : index
    %c0_165 = arith.constant 0 : index
    %152 = vector.load %arg12[%c61, %c0_165] : memref<64x128xf32, #tpu.memory_space<vmem>>, vector<1x64xf32>
    %c0_166 = arith.constant 0 : index
    %c3904 = arith.constant 3904 : index
    %153 = vector.load %arg13[%c0_166, %c3904] : memref<2x4096xf32, #tpu.memory_space<vmem>>, vector<1x64xf32>
    tpu.vector_store %arg13[%c0_166, %c3904], %152 {strides = array<i32>} : memref<2x4096xf32, #tpu.memory_space<vmem>>, vector<1x64xf32>,
    %c62 = arith.constant 62 : index
    %c0_167 = arith.constant 0 : index
    %154 = vector.load %arg12[%c62, %c0_167] : memref<64x128xf32, #tpu.memory_space<vmem>>, vector<1x64xf32>
    %c0_168 = arith.constant 0 : index
    %c3968 = arith.constant 3968 : index
    %155 = vector.load %arg13[%c0_168, %c3968] : memref<2x4096xf32, #tpu.memory_space<vmem>>, vector<1x64xf32>
    tpu.vector_store %arg13[%c0_168, %c3968], %154 {strides = array<i32>} : memref<2x4096xf32, #tpu.memory_space<vmem>>, vector<1x64xf32>,
    %c63 = arith.constant 63 : index
    %c0_169 = arith.constant 0 : index
    %156 = vector.load %arg12[%c63, %c0_169] : memref<64x128xf32, #tpu.memory_space<vmem>>, vector<1x64xf32>
    %c0_170 = arith.constant 0 : index
    %c4032 = arith.constant 4032 : index
    %157 = vector.load %arg13[%c0_170, %c4032] : memref<2x4096xf32, #tpu.memory_space<vmem>>, vector<1x64xf32>
    tpu.vector_store %arg13[%c0_170, %c4032], %156 {strides = array<i32>} : memref<2x4096xf32, #tpu.memory_space<vmem>>, vector<1x64xf32>,
    %c0_171 = arith.constant 0 : index
    %c64_172 = arith.constant 64 : index
    %158 = vector.load %arg12[%c0_171, %c64_172] : memref<64x128xf32, #tpu.memory_space<vmem>>, vector<1x64xf32>
    %c1_173 = arith.constant 1 : index
    %c0_174 = arith.constant 0 : index
    %159 = vector.load %arg13[%c1_173, %c0_174] : memref<2x4096xf32, #tpu.memory_space<vmem>>, vector<1x64xf32>
    tpu.vector_store %arg13[%c1_173, %c0_174], %158 {strides = array<i32>} : memref<2x4096xf32, #tpu.memory_space<vmem>>, vector<1x64xf32>,
    %c1_175 = arith.constant 1 : index
    %c64_176 = arith.constant 64 : index
    %160 = vector.load %arg12[%c1_175, %c64_176] : memref<64x128xf32, #tpu.memory_space<vmem>>, vector<1x64xf32>
    %c1_177 = arith.constant 1 : index
    %c64_178 = arith.constant 64 : index
    %161 = vector.load %arg13[%c1_177, %c64_178] : memref<2x4096xf32, #tpu.memory_space<vmem>>, vector<1x64xf32>
    tpu.vector_store %arg13[%c1_177, %c64_178], %160 {strides = array<i32>} : memref<2x4096xf32, #tpu.memory_space<vmem>>, vector<1x64xf32>,
    %c2_179 = arith.constant 2 : index
    %c64_180 = arith.constant 64 : index
    %162 = vector.load %arg12[%c2_179, %c64_180] : memref<64x128xf32, #tpu.memory_space<vmem>>, vector<1x64xf32>
    %c1_181 = arith.constant 1 : index
    %c128_182 = arith.constant 128 : index
    %163 = vector.load %arg13[%c1_181, %c128_182] : memref<2x4096xf32, #tpu.memory_space<vmem>>, vector<1x64xf32>
    tpu.vector_store %arg13[%c1_181, %c128_182], %162 {strides = array<i32>} : memref<2x4096xf32, #tpu.memory_space<vmem>>, vector<1x64xf32>,
    %c3_183 = arith.constant 3 : index
    %c64_184 = arith.constant 64 : index
    %164 = vector.load %arg12[%c3_183, %c64_184] : memref<64x128xf32, #tpu.memory_space<vmem>>, vector<1x64xf32>
    %c1_185 = arith.constant 1 : index
    %c192_186 = arith.constant 192 : index
    %165 = vector.load %arg13[%c1_185, %c192_186] : memref<2x4096xf32, #tpu.memory_space<vmem>>, vector<1x64xf32>
    tpu.vector_store %arg13[%c1_185, %c192_186], %164 {strides = array<i32>} : memref<2x4096xf32, #tpu.memory_space<vmem>>, vector<1x64xf32>,
    %c4_187 = arith.constant 4 : index
    %c64_188 = arith.constant 64 : index
    %166 = vector.load %arg12[%c4_187, %c64_188] : memref<64x128xf32, #tpu.memory_space<vmem>>, vector<1x64xf32>
    %c1_189 = arith.constant 1 : index
    %c256_190 = arith.constant 256 : index
    %167 = vector.load %arg13[%c1_189, %c256_190] : memref<2x4096xf32, #tpu.memory_space<vmem>>, vector<1x64xf32>
    tpu.vector_store %arg13[%c1_189, %c256_190], %166 {strides = array<i32>} : memref<2x4096xf32, #tpu.memory_space<vmem>>, vector<1x64xf32>,
    %c5_191 = arith.constant 5 : index
    %c64_192 = arith.constant 64 : index
    %168 = vector.load %arg12[%c5_191, %c64_192] : memref<64x128xf32, #tpu.memory_space<vmem>>, vector<1x64xf32>
    %c1_193 = arith.constant 1 : index
    %c320_194 = arith.constant 320 : index
    %169 = vector.load %arg13[%c1_193, %c320_194] : memref<2x4096xf32, #tpu.memory_space<vmem>>, vector<1x64xf32>
    tpu.vector_store %arg13[%c1_193, %c320_194], %168 {strides = array<i32>} : memref<2x4096xf32, #tpu.memory_space<vmem>>, vector<1x64xf32>,
    %c6_195 = arith.constant 6 : index
    %c64_196 = arith.constant 64 : index
    %170 = vector.load %arg12[%c6_195, %c64_196] : memref<64x128xf32, #tpu.memory_space<vmem>>, vector<1x64xf32>
    %c1_197 = arith.constant 1 : index
    %c384_198 = arith.constant 384 : index
    %171 = vector.load %arg13[%c1_197, %c384_198] : memref<2x4096xf32, #tpu.memory_space<vmem>>, vector<1x64xf32>
    tpu.vector_store %arg13[%c1_197, %c384_198], %170 {strides = array<i32>} : memref<2x4096xf32, #tpu.memory_space<vmem>>, vector<1x64xf32>,
    %c7_199 = arith.constant 7 : index
    %c64_200 = arith.constant 64 : index
    %172 = vector.load %arg12[%c7_199, %c64_200] : memref<64x128xf32, #tpu.memory_space<vmem>>, vector<1x64xf32>
    %c1_201 = arith.constant 1 : index
    %c448_202 = arith.constant 448 : index
    %173 = vector.load %arg13[%c1_201, %c448_202] : memref<2x4096xf32, #tpu.memory_space<vmem>>, vector<1x64xf32>
    tpu.vector_store %arg13[%c1_201, %c448_202], %172 {strides = array<i32>} : memref<2x4096xf32, #tpu.memory_space<vmem>>, vector<1x64xf32>,
    %c8_203 = arith.constant 8 : index
    %c64_204 = arith.constant 64 : index
    %174 = vector.load %arg12[%c8_203, %c64_204] : memref<64x128xf32, #tpu.memory_space<vmem>>, vector<1x64xf32>
    %c1_205 = arith.constant 1 : index
    %c512_206 = arith.constant 512 : index
    %175 = vector.load %arg13[%c1_205, %c512_206] : memref<2x4096xf32, #tpu.memory_space<vmem>>, vector<1x64xf32>
    tpu.vector_store %arg13[%c1_205, %c512_206], %174 {strides = array<i32>} : memref<2x4096xf32, #tpu.memory_space<vmem>>, vector<1x64xf32>,
    %c9_207 = arith.constant 9 : index
    %c64_208 = arith.constant 64 : index
    %176 = vector.load %arg12[%c9_207, %c64_208] : memref<64x128xf32, #tpu.memory_space<vmem>>, vector<1x64xf32>
    %c1_209 = arith.constant 1 : index
    %c576_210 = arith.constant 576 : index
    %177 = vector.load %arg13[%c1_209, %c576_210] : memref<2x4096xf32, #tpu.memory_space<vmem>>, vector<1x64xf32>
    tpu.vector_store %arg13[%c1_209, %c576_210], %176 {strides = array<i32>} : memref<2x4096xf32, #tpu.memory_space<vmem>>, vector<1x64xf32>,
    %c10_211 = arith.constant 10 : index
    %c64_212 = arith.constant 64 : index
    %178 = vector.load %arg12[%c10_211, %c64_212] : memref<64x128xf32, #tpu.memory_space<vmem>>, vector<1x64xf32>
    %c1_213 = arith.constant 1 : index
    %c640_214 = arith.constant 640 : index
    %179 = vector.load %arg13[%c1_213, %c640_214] : memref<2x4096xf32, #tpu.memory_space<vmem>>, vector<1x64xf32>
    tpu.vector_store %arg13[%c1_213, %c640_214], %178 {strides = array<i32>} : memref<2x4096xf32, #tpu.memory_space<vmem>>, vector<1x64xf32>,
    %c11_215 = arith.constant 11 : index
    %c64_216 = arith.constant 64 : index
    %180 = vector.load %arg12[%c11_215, %c64_216] : memref<64x128xf32, #tpu.memory_space<vmem>>, vector<1x64xf32>
    %c1_217 = arith.constant 1 : index
    %c704_218 = arith.constant 704 : index
    %181 = vector.load %arg13[%c1_217, %c704_218] : memref<2x4096xf32, #tpu.memory_space<vmem>>, vector<1x64xf32>
    tpu.vector_store %arg13[%c1_217, %c704_218], %180 {strides = array<i32>} : memref<2x4096xf32, #tpu.memory_space<vmem>>, vector<1x64xf32>,
    %c12_219 = arith.constant 12 : index
    %c64_220 = arith.constant 64 : index
    %182 = vector.load %arg12[%c12_219, %c64_220] : memref<64x128xf32, #tpu.memory_space<vmem>>, vector<1x64xf32>
    %c1_221 = arith.constant 1 : index
    %c768_222 = arith.constant 768 : index
    %183 = vector.load %arg13[%c1_221, %c768_222] : memref<2x4096xf32, #tpu.memory_space<vmem>>, vector<1x64xf32>
    tpu.vector_store %arg13[%c1_221, %c768_222], %182 {strides = array<i32>} : memref<2x4096xf32, #tpu.memory_space<vmem>>, vector<1x64xf32>,
    %c13_223 = arith.constant 13 : index
    %c64_224 = arith.constant 64 : index
    %184 = vector.load %arg12[%c13_223, %c64_224] : memref<64x128xf32, #tpu.memory_space<vmem>>, vector<1x64xf32>
    %c1_225 = arith.constant 1 : index
    %c832_226 = arith.constant 832 : index
    %185 = vector.load %arg13[%c1_225, %c832_226] : memref<2x4096xf32, #tpu.memory_space<vmem>>, vector<1x64xf32>
    tpu.vector_store %arg13[%c1_225, %c832_226], %184 {strides = array<i32>} : memref<2x4096xf32, #tpu.memory_space<vmem>>, vector<1x64xf32>,
    %c14_227 = arith.constant 14 : index
    %c64_228 = arith.constant 64 : index
    %186 = vector.load %arg12[%c14_227, %c64_228] : memref<64x128xf32, #tpu.memory_space<vmem>>, vector<1x64xf32>
    %c1_229 = arith.constant 1 : index
    %c896_230 = arith.constant 896 : index
    %187 = vector.load %arg13[%c1_229, %c896_230] : memref<2x4096xf32, #tpu.memory_space<vmem>>, vector<1x64xf32>
    tpu.vector_store %arg13[%c1_229, %c896_230], %186 {strides = array<i32>} : memref<2x4096xf32, #tpu.memory_space<vmem>>, vector<1x64xf32>,
    %c15_231 = arith.constant 15 : index
    %c64_232 = arith.constant 64 : index
    %188 = vector.load %arg12[%c15_231, %c64_232] : memref<64x128xf32, #tpu.memory_space<vmem>>, vector<1x64xf32>
    %c1_233 = arith.constant 1 : index
    %c960_234 = arith.constant 960 : index
    %189 = vector.load %arg13[%c1_233, %c960_234] : memref<2x4096xf32, #tpu.memory_space<vmem>>, vector<1x64xf32>
    tpu.vector_store %arg13[%c1_233, %c960_234], %188 {strides = array<i32>} : memref<2x4096xf32, #tpu.memory_space<vmem>>, vector<1x64xf32>,
    %c16_235 = arith.constant 16 : index
    %c64_236 = arith.constant 64 : index
    %190 = vector.load %arg12[%c16_235, %c64_236] : memref<64x128xf32, #tpu.memory_space<vmem>>, vector<1x64xf32>
    %c1_237 = arith.constant 1 : index
    %c1024_238 = arith.constant 1024 : index
    %191 = vector.load %arg13[%c1_237, %c1024_238] : memref<2x4096xf32, #tpu.memory_space<vmem>>, vector<1x64xf32>
    tpu.vector_store %arg13[%c1_237, %c1024_238], %190 {strides = array<i32>} : memref<2x4096xf32, #tpu.memory_space<vmem>>, vector<1x64xf32>,
    %c17_239 = arith.constant 17 : index
    %c64_240 = arith.constant 64 : index
    %192 = vector.load %arg12[%c17_239, %c64_240] : memref<64x128xf32, #tpu.memory_space<vmem>>, vector<1x64xf32>
    %c1_241 = arith.constant 1 : index
    %c1088_242 = arith.constant 1088 : index
    %193 = vector.load %arg13[%c1_241, %c1088_242] : memref<2x4096xf32, #tpu.memory_space<vmem>>, vector<1x64xf32>
    tpu.vector_store %arg13[%c1_241, %c1088_242], %192 {strides = array<i32>} : memref<2x4096xf32, #tpu.memory_space<vmem>>, vector<1x64xf32>,
    %c18_243 = arith.constant 18 : index
    %c64_244 = arith.constant 64 : index
    %194 = vector.load %arg12[%c18_243, %c64_244] : memref<64x128xf32, #tpu.memory_space<vmem>>, vector<1x64xf32>
    %c1_245 = arith.constant 1 : index
    %c1152_246 = arith.constant 1152 : index
    %195 = vector.load %arg13[%c1_245, %c1152_246] : memref<2x4096xf32, #tpu.memory_space<vmem>>, vector<1x64xf32>
    tpu.vector_store %arg13[%c1_245, %c1152_246], %194 {strides = array<i32>} : memref<2x4096xf32, #tpu.memory_space<vmem>>, vector<1x64xf32>,
    %c19_247 = arith.constant 19 : index
    %c64_248 = arith.constant 64 : index
    %196 = vector.load %arg12[%c19_247, %c64_248] : memref<64x128xf32, #tpu.memory_space<vmem>>, vector<1x64xf32>
    %c1_249 = arith.constant 1 : index
    %c1216_250 = arith.constant 1216 : index
    %197 = vector.load %arg13[%c1_249, %c1216_250] : memref<2x4096xf32, #tpu.memory_space<vmem>>, vector<1x64xf32>
    tpu.vector_store %arg13[%c1_249, %c1216_250], %196 {strides = array<i32>} : memref<2x4096xf32, #tpu.memory_space<vmem>>, vector<1x64xf32>,
    %c20_251 = arith.constant 20 : index
    %c64_252 = arith.constant 64 : index
    %198 = vector.load %arg12[%c20_251, %c64_252] : memref<64x128xf32, #tpu.memory_space<vmem>>, vector<1x64xf32>
    %c1_253 = arith.constant 1 : index
    %c1280_254 = arith.constant 1280 : index
    %199 = vector.load %arg13[%c1_253, %c1280_254] : memref<2x4096xf32, #tpu.memory_space<vmem>>, vector<1x64xf32>
    tpu.vector_store %arg13[%c1_253, %c1280_254], %198 {strides = array<i32>} : memref<2x4096xf32, #tpu.memory_space<vmem>>, vector<1x64xf32>,
    %c21_255 = arith.constant 21 : index
    %c64_256 = arith.constant 64 : index
    %200 = vector.load %arg12[%c21_255, %c64_256] : memref<64x128xf32, #tpu.memory_space<vmem>>, vector<1x64xf32>
    %c1_257 = arith.constant 1 : index
    %c1344_258 = arith.constant 1344 : index
    %201 = vector.load %arg13[%c1_257, %c1344_258] : memref<2x4096xf32, #tpu.memory_space<vmem>>, vector<1x64xf32>
    tpu.vector_store %arg13[%c1_257, %c1344_258], %200 {strides = array<i32>} : memref<2x4096xf32, #tpu.memory_space<vmem>>, vector<1x64xf32>,
    %c22_259 = arith.constant 22 : index
    %c64_260 = arith.constant 64 : index
    %202 = vector.load %arg12[%c22_259, %c64_260] : memref<64x128xf32, #tpu.memory_space<vmem>>, vector<1x64xf32>
    %c1_261 = arith.constant 1 : index
    %c1408_262 = arith.constant 1408 : index
    %203 = vector.load %arg13[%c1_261, %c1408_262] : memref<2x4096xf32, #tpu.memory_space<vmem>>, vector<1x64xf32>
    tpu.vector_store %arg13[%c1_261, %c1408_262], %202 {strides = array<i32>} : memref<2x4096xf32, #tpu.memory_space<vmem>>, vector<1x64xf32>,
    %c23_263 = arith.constant 23 : index
    %c64_264 = arith.constant 64 : index
    %204 = vector.load %arg12[%c23_263, %c64_264] : memref<64x128xf32, #tpu.memory_space<vmem>>, vector<1x64xf32>
    %c1_265 = arith.constant 1 : index
    %c1472_266 = arith.constant 1472 : index
    %205 = vector.load %arg13[%c1_265, %c1472_266] : memref<2x4096xf32, #tpu.memory_space<vmem>>, vector<1x64xf32>
    tpu.vector_store %arg13[%c1_265, %c1472_266], %204 {strides = array<i32>} : memref<2x4096xf32, #tpu.memory_space<vmem>>, vector<1x64xf32>,
    %c24_267 = arith.constant 24 : index
    %c64_268 = arith.constant 64 : index
    %206 = vector.load %arg12[%c24_267, %c64_268] : memref<64x128xf32, #tpu.memory_space<vmem>>, vector<1x64xf32>
    %c1_269 = arith.constant 1 : index
    %c1536_270 = arith.constant 1536 : index
    %207 = vector.load %arg13[%c1_269, %c1536_270] : memref<2x4096xf32, #tpu.memory_space<vmem>>, vector<1x64xf32>
    tpu.vector_store %arg13[%c1_269, %c1536_270], %206 {strides = array<i32>} : memref<2x4096xf32, #tpu.memory_space<vmem>>, vector<1x64xf32>,
    %c25_271 = arith.constant 25 : index
    %c64_272 = arith.constant 64 : index
    %208 = vector.load %arg12[%c25_271, %c64_272] : memref<64x128xf32, #tpu.memory_space<vmem>>, vector<1x64xf32>
    %c1_273 = arith.constant 1 : index
    %c1600_274 = arith.constant 1600 : index
    %209 = vector.load %arg13[%c1_273, %c1600_274] : memref<2x4096xf32, #tpu.memory_space<vmem>>, vector<1x64xf32>
    tpu.vector_store %arg13[%c1_273, %c1600_274], %208 {strides = array<i32>} : memref<2x4096xf32, #tpu.memory_space<vmem>>, vector<1x64xf32>,
    %c26_275 = arith.constant 26 : index
    %c64_276 = arith.constant 64 : index
    %210 = vector.load %arg12[%c26_275, %c64_276] : memref<64x128xf32, #tpu.memory_space<vmem>>, vector<1x64xf32>
    %c1_277 = arith.constant 1 : index
    %c1664_278 = arith.constant 1664 : index
    %211 = vector.load %arg13[%c1_277, %c1664_278] : memref<2x4096xf32, #tpu.memory_space<vmem>>, vector<1x64xf32>
    tpu.vector_store %arg13[%c1_277, %c1664_278], %210 {strides = array<i32>} : memref<2x4096xf32, #tpu.memory_space<vmem>>, vector<1x64xf32>,
    %c27_279 = arith.constant 27 : index
    %c64_280 = arith.constant 64 : index
    %212 = vector.load %arg12[%c27_279, %c64_280] : memref<64x128xf32, #tpu.memory_space<vmem>>, vector<1x64xf32>
    %c1_281 = arith.constant 1 : index
    %c1728_282 = arith.constant 1728 : index
    %213 = vector.load %arg13[%c1_281, %c1728_282] : memref<2x4096xf32, #tpu.memory_space<vmem>>, vector<1x64xf32>
    tpu.vector_store %arg13[%c1_281, %c1728_282], %212 {strides = array<i32>} : memref<2x4096xf32, #tpu.memory_space<vmem>>, vector<1x64xf32>,
    %c28_283 = arith.constant 28 : index
    %c64_284 = arith.constant 64 : index
    %214 = vector.load %arg12[%c28_283, %c64_284] : memref<64x128xf32, #tpu.memory_space<vmem>>, vector<1x64xf32>
    %c1_285 = arith.constant 1 : index
    %c1792_286 = arith.constant 1792 : index
    %215 = vector.load %arg13[%c1_285, %c1792_286] : memref<2x4096xf32, #tpu.memory_space<vmem>>, vector<1x64xf32>
    tpu.vector_store %arg13[%c1_285, %c1792_286], %214 {strides = array<i32>} : memref<2x4096xf32, #tpu.memory_space<vmem>>, vector<1x64xf32>,
    %c29_287 = arith.constant 29 : index
    %c64_288 = arith.constant 64 : index
    %216 = vector.load %arg12[%c29_287, %c64_288] : memref<64x128xf32, #tpu.memory_space<vmem>>, vector<1x64xf32>
    %c1_289 = arith.constant 1 : index
    %c1856_290 = arith.constant 1856 : index
    %217 = vector.load %arg13[%c1_289, %c1856_290] : memref<2x4096xf32, #tpu.memory_space<vmem>>, vector<1x64xf32>
    tpu.vector_store %arg13[%c1_289, %c1856_290], %216 {strides = array<i32>} : memref<2x4096xf32, #tpu.memory_space<vmem>>, vector<1x64xf32>,
    %c30_291 = arith.constant 30 : index
    %c64_292 = arith.constant 64 : index
    %218 = vector.load %arg12[%c30_291, %c64_292] : memref<64x128xf32, #tpu.memory_space<vmem>>, vector<1x64xf32>
    %c1_293 = arith.constant 1 : index
    %c1920_294 = arith.constant 1920 : index
    %219 = vector.load %arg13[%c1_293, %c1920_294] : memref<2x4096xf32, #tpu.memory_space<vmem>>, vector<1x64xf32>
    tpu.vector_store %arg13[%c1_293, %c1920_294], %218 {strides = array<i32>} : memref<2x4096xf32, #tpu.memory_space<vmem>>, vector<1x64xf32>,
    %c31_295 = arith.constant 31 : index
    %c64_296 = arith.constant 64 : index
    %220 = vector.load %arg12[%c31_295, %c64_296] : memref<64x128xf32, #tpu.memory_space<vmem>>, vector<1x64xf32>
    %c1_297 = arith.constant 1 : index
    %c1984_298 = arith.constant 1984 : index
    %221 = vector.load %arg13[%c1_297, %c1984_298] : memref<2x4096xf32, #tpu.memory_space<vmem>>, vector<1x64xf32>
    tpu.vector_store %arg13[%c1_297, %c1984_298], %220 {strides = array<i32>} : memref<2x4096xf32, #tpu.memory_space<vmem>>, vector<1x64xf32>,
    %c32_299 = arith.constant 32 : index
    %c64_300 = arith.constant 64 : index
    %222 = vector.load %arg12[%c32_299, %c64_300] : memref<64x128xf32, #tpu.memory_space<vmem>>, vector<1x64xf32>
    %c1_301 = arith.constant 1 : index
    %c2048_302 = arith.constant 2048 : index
    %223 = vector.load %arg13[%c1_301, %c2048_302] : memref<2x4096xf32, #tpu.memory_space<vmem>>, vector<1x64xf32>
    tpu.vector_store %arg13[%c1_301, %c2048_302], %222 {strides = array<i32>} : memref<2x4096xf32, #tpu.memory_space<vmem>>, vector<1x64xf32>,
    %c33_303 = arith.constant 33 : index
    %c64_304 = arith.constant 64 : index
    %224 = vector.load %arg12[%c33_303, %c64_304] : memref<64x128xf32, #tpu.memory_space<vmem>>, vector<1x64xf32>
    %c1_305 = arith.constant 1 : index
    %c2112_306 = arith.constant 2112 : index
    %225 = vector.load %arg13[%c1_305, %c2112_306] : memref<2x4096xf32, #tpu.memory_space<vmem>>, vector<1x64xf32>
    tpu.vector_store %arg13[%c1_305, %c2112_306], %224 {strides = array<i32>} : memref<2x4096xf32, #tpu.memory_space<vmem>>, vector<1x64xf32>,
    %c34_307 = arith.constant 34 : index
    %c64_308 = arith.constant 64 : index
    %226 = vector.load %arg12[%c34_307, %c64_308] : memref<64x128xf32, #tpu.memory_space<vmem>>, vector<1x64xf32>
    %c1_309 = arith.constant 1 : index
    %c2176_310 = arith.constant 2176 : index
    %227 = vector.load %arg13[%c1_309, %c2176_310] : memref<2x4096xf32, #tpu.memory_space<vmem>>, vector<1x64xf32>
    tpu.vector_store %arg13[%c1_309, %c2176_310], %226 {strides = array<i32>} : memref<2x4096xf32, #tpu.memory_space<vmem>>, vector<1x64xf32>,
    %c35_311 = arith.constant 35 : index
    %c64_312 = arith.constant 64 : index
    %228 = vector.load %arg12[%c35_311, %c64_312] : memref<64x128xf32, #tpu.memory_space<vmem>>, vector<1x64xf32>
    %c1_313 = arith.constant 1 : index
    %c2240_314 = arith.constant 2240 : index
    %229 = vector.load %arg13[%c1_313, %c2240_314] : memref<2x4096xf32, #tpu.memory_space<vmem>>, vector<1x64xf32>
    tpu.vector_store %arg13[%c1_313, %c2240_314], %228 {strides = array<i32>} : memref<2x4096xf32, #tpu.memory_space<vmem>>, vector<1x64xf32>,
    %c36_315 = arith.constant 36 : index
    %c64_316 = arith.constant 64 : index
    %230 = vector.load %arg12[%c36_315, %c64_316] : memref<64x128xf32, #tpu.memory_space<vmem>>, vector<1x64xf32>
    %c1_317 = arith.constant 1 : index
    %c2304_318 = arith.constant 2304 : index
    %231 = vector.load %arg13[%c1_317, %c2304_318] : memref<2x4096xf32, #tpu.memory_space<vmem>>, vector<1x64xf32>
    tpu.vector_store %arg13[%c1_317, %c2304_318], %230 {strides = array<i32>} : memref<2x4096xf32, #tpu.memory_space<vmem>>, vector<1x64xf32>,
    %c37_319 = arith.constant 37 : index
    %c64_320 = arith.constant 64 : index
    %232 = vector.load %arg12[%c37_319, %c64_320] : memref<64x128xf32, #tpu.memory_space<vmem>>, vector<1x64xf32>
    %c1_321 = arith.constant 1 : index
    %c2368_322 = arith.constant 2368 : index
    %233 = vector.load %arg13[%c1_321, %c2368_322] : memref<2x4096xf32, #tpu.memory_space<vmem>>, vector<1x64xf32>
    tpu.vector_store %arg13[%c1_321, %c2368_322], %232 {strides = array<i32>} : memref<2x4096xf32, #tpu.memory_space<vmem>>, vector<1x64xf32>,
    %c38_323 = arith.constant 38 : index
    %c64_324 = arith.constant 64 : index
    %234 = vector.load %arg12[%c38_323, %c64_324] : memref<64x128xf32, #tpu.memory_space<vmem>>, vector<1x64xf32>
    %c1_325 = arith.constant 1 : index
    %c2432_326 = arith.constant 2432 : index
    %235 = vector.load %arg13[%c1_325, %c2432_326] : memref<2x4096xf32, #tpu.memory_space<vmem>>, vector<1x64xf32>
    tpu.vector_store %arg13[%c1_325, %c2432_326], %234 {strides = array<i32>} : memref<2x4096xf32, #tpu.memory_space<vmem>>, vector<1x64xf32>,
    %c39_327 = arith.constant 39 : index
    %c64_328 = arith.constant 64 : index
    %236 = vector.load %arg12[%c39_327, %c64_328] : memref<64x128xf32, #tpu.memory_space<vmem>>, vector<1x64xf32>
    %c1_329 = arith.constant 1 : index
    %c2496_330 = arith.constant 2496 : index
    %237 = vector.load %arg13[%c1_329, %c2496_330] : memref<2x4096xf32, #tpu.memory_space<vmem>>, vector<1x64xf32>
    tpu.vector_store %arg13[%c1_329, %c2496_330], %236 {strides = array<i32>} : memref<2x4096xf32, #tpu.memory_space<vmem>>, vector<1x64xf32>,
    %c40_331 = arith.constant 40 : index
    %c64_332 = arith.constant 64 : index
    %238 = vector.load %arg12[%c40_331, %c64_332] : memref<64x128xf32, #tpu.memory_space<vmem>>, vector<1x64xf32>
    %c1_333 = arith.constant 1 : index
    %c2560_334 = arith.constant 2560 : index
    %239 = vector.load %arg13[%c1_333, %c2560_334] : memref<2x4096xf32, #tpu.memory_space<vmem>>, vector<1x64xf32>
    tpu.vector_store %arg13[%c1_333, %c2560_334], %238 {strides = array<i32>} : memref<2x4096xf32, #tpu.memory_space<vmem>>, vector<1x64xf32>,
    %c41_335 = arith.constant 41 : index
    %c64_336 = arith.constant 64 : index
    %240 = vector.load %arg12[%c41_335, %c64_336] : memref<64x128xf32, #tpu.memory_space<vmem>>, vector<1x64xf32>
    %c1_337 = arith.constant 1 : index
    %c2624_338 = arith.constant 2624 : index
    %241 = vector.load %arg13[%c1_337, %c2624_338] : memref<2x4096xf32, #tpu.memory_space<vmem>>, vector<1x64xf32>
    tpu.vector_store %arg13[%c1_337, %c2624_338], %240 {strides = array<i32>} : memref<2x4096xf32, #tpu.memory_space<vmem>>, vector<1x64xf32>,
    %c42_339 = arith.constant 42 : index
    %c64_340 = arith.constant 64 : index
    %242 = vector.load %arg12[%c42_339, %c64_340] : memref<64x128xf32, #tpu.memory_space<vmem>>, vector<1x64xf32>
    %c1_341 = arith.constant 1 : index
    %c2688_342 = arith.constant 2688 : index
    %243 = vector.load %arg13[%c1_341, %c2688_342] : memref<2x4096xf32, #tpu.memory_space<vmem>>, vector<1x64xf32>
    tpu.vector_store %arg13[%c1_341, %c2688_342], %242 {strides = array<i32>} : memref<2x4096xf32, #tpu.memory_space<vmem>>, vector<1x64xf32>,
    %c43_343 = arith.constant 43 : index
    %c64_344 = arith.constant 64 : index
    %244 = vector.load %arg12[%c43_343, %c64_344] : memref<64x128xf32, #tpu.memory_space<vmem>>, vector<1x64xf32>
    %c1_345 = arith.constant 1 : index
    %c2752_346 = arith.constant 2752 : index
    %245 = vector.load %arg13[%c1_345, %c2752_346] : memref<2x4096xf32, #tpu.memory_space<vmem>>, vector<1x64xf32>
    tpu.vector_store %arg13[%c1_345, %c2752_346], %244 {strides = array<i32>} : memref<2x4096xf32, #tpu.memory_space<vmem>>, vector<1x64xf32>,
    %c44_347 = arith.constant 44 : index
    %c64_348 = arith.constant 64 : index
    %246 = vector.load %arg12[%c44_347, %c64_348] : memref<64x128xf32, #tpu.memory_space<vmem>>, vector<1x64xf32>
    %c1_349 = arith.constant 1 : index
    %c2816_350 = arith.constant 2816 : index
    %247 = vector.load %arg13[%c1_349, %c2816_350] : memref<2x4096xf32, #tpu.memory_space<vmem>>, vector<1x64xf32>
    tpu.vector_store %arg13[%c1_349, %c2816_350], %246 {strides = array<i32>} : memref<2x4096xf32, #tpu.memory_space<vmem>>, vector<1x64xf32>,
    %c45_351 = arith.constant 45 : index
    %c64_352 = arith.constant 64 : index
    %248 = vector.load %arg12[%c45_351, %c64_352] : memref<64x128xf32, #tpu.memory_space<vmem>>, vector<1x64xf32>
    %c1_353 = arith.constant 1 : index
    %c2880_354 = arith.constant 2880 : index
    %249 = vector.load %arg13[%c1_353, %c2880_354] : memref<2x4096xf32, #tpu.memory_space<vmem>>, vector<1x64xf32>
    tpu.vector_store %arg13[%c1_353, %c2880_354], %248 {strides = array<i32>} : memref<2x4096xf32, #tpu.memory_space<vmem>>, vector<1x64xf32>,
    %c46_355 = arith.constant 46 : index
    %c64_356 = arith.constant 64 : index
    %250 = vector.load %arg12[%c46_355, %c64_356] : memref<64x128xf32, #tpu.memory_space<vmem>>, vector<1x64xf32>
    %c1_357 = arith.constant 1 : index
    %c2944_358 = arith.constant 2944 : index
    %251 = vector.load %arg13[%c1_357, %c2944_358] : memref<2x4096xf32, #tpu.memory_space<vmem>>, vector<1x64xf32>
    tpu.vector_store %arg13[%c1_357, %c2944_358], %250 {strides = array<i32>} : memref<2x4096xf32, #tpu.memory_space<vmem>>, vector<1x64xf32>,
    %c47_359 = arith.constant 47 : index
    %c64_360 = arith.constant 64 : index
    %252 = vector.load %arg12[%c47_359, %c64_360] : memref<64x128xf32, #tpu.memory_space<vmem>>, vector<1x64xf32>
    %c1_361 = arith.constant 1 : index
    %c3008_362 = arith.constant 3008 : index
    %253 = vector.load %arg13[%c1_361, %c3008_362] : memref<2x4096xf32, #tpu.memory_space<vmem>>, vector<1x64xf32>
    tpu.vector_store %arg13[%c1_361, %c3008_362], %252 {strides = array<i32>} : memref<2x4096xf32, #tpu.memory_space<vmem>>, vector<1x64xf32>,
    %c48_363 = arith.constant 48 : index
    %c64_364 = arith.constant 64 : index
    %254 = vector.load %arg12[%c48_363, %c64_364] : memref<64x128xf32, #tpu.memory_space<vmem>>, vector<1x64xf32>
    %c1_365 = arith.constant 1 : index
    %c3072_366 = arith.constant 3072 : index
    %255 = vector.load %arg13[%c1_365, %c3072_366] : memref<2x4096xf32, #tpu.memory_space<vmem>>, vector<1x64xf32>
    tpu.vector_store %arg13[%c1_365, %c3072_366], %254 {strides = array<i32>} : memref<2x4096xf32, #tpu.memory_space<vmem>>, vector<1x64xf32>,
    %c49_367 = arith.constant 49 : index
    %c64_368 = arith.constant 64 : index
    %256 = vector.load %arg12[%c49_367, %c64_368] : memref<64x128xf32, #tpu.memory_space<vmem>>, vector<1x64xf32>
    %c1_369 = arith.constant 1 : index
    %c3136_370 = arith.constant 3136 : index
    %257 = vector.load %arg13[%c1_369, %c3136_370] : memref<2x4096xf32, #tpu.memory_space<vmem>>, vector<1x64xf32>
    tpu.vector_store %arg13[%c1_369, %c3136_370], %256 {strides = array<i32>} : memref<2x4096xf32, #tpu.memory_space<vmem>>, vector<1x64xf32>,
    %c50_371 = arith.constant 50 : index
    %c64_372 = arith.constant 64 : index
    %258 = vector.load %arg12[%c50_371, %c64_372] : memref<64x128xf32, #tpu.memory_space<vmem>>, vector<1x64xf32>
    %c1_373 = arith.constant 1 : index
    %c3200_374 = arith.constant 3200 : index
    %259 = vector.load %arg13[%c1_373, %c3200_374] : memref<2x4096xf32, #tpu.memory_space<vmem>>, vector<1x64xf32>
    tpu.vector_store %arg13[%c1_373, %c3200_374], %258 {strides = array<i32>} : memref<2x4096xf32, #tpu.memory_space<vmem>>, vector<1x64xf32>,
    %c51_375 = arith.constant 51 : index
    %c64_376 = arith.constant 64 : index
    %260 = vector.load %arg12[%c51_375, %c64_376] : memref<64x128xf32, #tpu.memory_space<vmem>>, vector<1x64xf32>
    %c1_377 = arith.constant 1 : index
    %c3264_378 = arith.constant 3264 : index
    %261 = vector.load %arg13[%c1_377, %c3264_378] : memref<2x4096xf32, #tpu.memory_space<vmem>>, vector<1x64xf32>
    tpu.vector_store %arg13[%c1_377, %c3264_378], %260 {strides = array<i32>} : memref<2x4096xf32, #tpu.memory_space<vmem>>, vector<1x64xf32>,
    %c52_379 = arith.constant 52 : index
    %c64_380 = arith.constant 64 : index
    %262 = vector.load %arg12[%c52_379, %c64_380] : memref<64x128xf32, #tpu.memory_space<vmem>>, vector<1x64xf32>
    %c1_381 = arith.constant 1 : index
    %c3328_382 = arith.constant 3328 : index
    %263 = vector.load %arg13[%c1_381, %c3328_382] : memref<2x4096xf32, #tpu.memory_space<vmem>>, vector<1x64xf32>
    tpu.vector_store %arg13[%c1_381, %c3328_382], %262 {strides = array<i32>} : memref<2x4096xf32, #tpu.memory_space<vmem>>, vector<1x64xf32>,
    %c53_383 = arith.constant 53 : index
    %c64_384 = arith.constant 64 : index
    %264 = vector.load %arg12[%c53_383, %c64_384] : memref<64x128xf32, #tpu.memory_space<vmem>>, vector<1x64xf32>
    %c1_385 = arith.constant 1 : index
    %c3392_386 = arith.constant 3392 : index
    %265 = vector.load %arg13[%c1_385, %c3392_386] : memref<2x4096xf32, #tpu.memory_space<vmem>>, vector<1x64xf32>
    tpu.vector_store %arg13[%c1_385, %c3392_386], %264 {strides = array<i32>} : memref<2x4096xf32, #tpu.memory_space<vmem>>, vector<1x64xf32>,
    %c54_387 = arith.constant 54 : index
    %c64_388 = arith.constant 64 : index
    %266 = vector.load %arg12[%c54_387, %c64_388] : memref<64x128xf32, #tpu.memory_space<vmem>>, vector<1x64xf32>
    %c1_389 = arith.constant 1 : index
    %c3456_390 = arith.constant 3456 : index
    %267 = vector.load %arg13[%c1_389, %c3456_390] : memref<2x4096xf32, #tpu.memory_space<vmem>>, vector<1x64xf32>
    tpu.vector_store %arg13[%c1_389, %c3456_390], %266 {strides = array<i32>} : memref<2x4096xf32, #tpu.memory_space<vmem>>, vector<1x64xf32>,
    %c55_391 = arith.constant 55 : index
    %c64_392 = arith.constant 64 : index
    %268 = vector.load %arg12[%c55_391, %c64_392] : memref<64x128xf32, #tpu.memory_space<vmem>>, vector<1x64xf32>
    %c1_393 = arith.constant 1 : index
    %c3520_394 = arith.constant 3520 : index
    %269 = vector.load %arg13[%c1_393, %c3520_394] : memref<2x4096xf32, #tpu.memory_space<vmem>>, vector<1x64xf32>
    tpu.vector_store %arg13[%c1_393, %c3520_394], %268 {strides = array<i32>} : memref<2x4096xf32, #tpu.memory_space<vmem>>, vector<1x64xf32>,
    %c56_395 = arith.constant 56 : index
    %c64_396 = arith.constant 64 : index
    %270 = vector.load %arg12[%c56_395, %c64_396] : memref<64x128xf32, #tpu.memory_space<vmem>>, vector<1x64xf32>
    %c1_397 = arith.constant 1 : index
    %c3584_398 = arith.constant 3584 : index
    %271 = vector.load %arg13[%c1_397, %c3584_398] : memref<2x4096xf32, #tpu.memory_space<vmem>>, vector<1x64xf32>
    tpu.vector_store %arg13[%c1_397, %c3584_398], %270 {strides = array<i32>} : memref<2x4096xf32, #tpu.memory_space<vmem>>, vector<1x64xf32>,
    %c57_399 = arith.constant 57 : index
    %c64_400 = arith.constant 64 : index
    %272 = vector.load %arg12[%c57_399, %c64_400] : memref<64x128xf32, #tpu.memory_space<vmem>>, vector<1x64xf32>
    %c1_401 = arith.constant 1 : index
    %c3648_402 = arith.constant 3648 : index
    %273 = vector.load %arg13[%c1_401, %c3648_402] : memref<2x4096xf32, #tpu.memory_space<vmem>>, vector<1x64xf32>
    tpu.vector_store %arg13[%c1_401, %c3648_402], %272 {strides = array<i32>} : memref<2x4096xf32, #tpu.memory_space<vmem>>, vector<1x64xf32>,
    %c58_403 = arith.constant 58 : index
    %c64_404 = arith.constant 64 : index
    %274 = vector.load %arg12[%c58_403, %c64_404] : memref<64x128xf32, #tpu.memory_space<vmem>>, vector<1x64xf32>
    %c1_405 = arith.constant 1 : index
    %c3712_406 = arith.constant 3712 : index
    %275 = vector.load %arg13[%c1_405, %c3712_406] : memref<2x4096xf32, #tpu.memory_space<vmem>>, vector<1x64xf32>
    tpu.vector_store %arg13[%c1_405, %c3712_406], %274 {strides = array<i32>} : memref<2x4096xf32, #tpu.memory_space<vmem>>, vector<1x64xf32>,
    %c59_407 = arith.constant 59 : index
    %c64_408 = arith.constant 64 : index
    %276 = vector.load %arg12[%c59_407, %c64_408] : memref<64x128xf32, #tpu.memory_space<vmem>>, vector<1x64xf32>
    %c1_409 = arith.constant 1 : index
    %c3776_410 = arith.constant 3776 : index
    %277 = vector.load %arg13[%c1_409, %c3776_410] : memref<2x4096xf32, #tpu.memory_space<vmem>>, vector<1x64xf32>
    tpu.vector_store %arg13[%c1_409, %c3776_410], %276 {strides = array<i32>} : memref<2x4096xf32, #tpu.memory_space<vmem>>, vector<1x64xf32>,
    %c60_411 = arith.constant 60 : index
    %c64_412 = arith.constant 64 : index
    %278 = vector.load %arg12[%c60_411, %c64_412] : memref<64x128xf32, #tpu.memory_space<vmem>>, vector<1x64xf32>
    %c1_413 = arith.constant 1 : index
    %c3840_414 = arith.constant 3840 : index
    %279 = vector.load %arg13[%c1_413, %c3840_414] : memref<2x4096xf32, #tpu.memory_space<vmem>>, vector<1x64xf32>
    tpu.vector_store %arg13[%c1_413, %c3840_414], %278 {strides = array<i32>} : memref<2x4096xf32, #tpu.memory_space<vmem>>, vector<1x64xf32>,
    %c61_415 = arith.constant 61 : index
    %c64_416 = arith.constant 64 : index
    %280 = vector.load %arg12[%c61_415, %c64_416] : memref<64x128xf32, #tpu.memory_space<vmem>>, vector<1x64xf32>
    %c1_417 = arith.constant 1 : index
    %c3904_418 = arith.constant 3904 : index
    %281 = vector.load %arg13[%c1_417, %c3904_418] : memref<2x4096xf32, #tpu.memory_space<vmem>>, vector<1x64xf32>
    tpu.vector_store %arg13[%c1_417, %c3904_418], %280 {strides = array<i32>} : memref<2x4096xf32, #tpu.memory_space<vmem>>, vector<1x64xf32>,
    %c62_419 = arith.constant 62 : index
    %c64_420 = arith.constant 64 : index
    %282 = vector.load %arg12[%c62_419, %c64_420] : memref<64x128xf32, #tpu.memory_space<vmem>>, vector<1x64xf32>
    %c1_421 = arith.constant 1 : index
    %c3968_422 = arith.constant 3968 : index
    %283 = vector.load %arg13[%c1_421, %c3968_422] : memref<2x4096xf32, #tpu.memory_space<vmem>>, vector<1x64xf32>
    tpu.vector_store %arg13[%c1_421, %c3968_422], %282 {strides = array<i32>} : memref<2x4096xf32, #tpu.memory_space<vmem>>, vector<1x64xf32>,
    %c63_423 = arith.constant 63 : index
    %c64_424 = arith.constant 64 : index
    %284 = vector.load %arg12[%c63_423, %c64_424] : memref<64x128xf32, #tpu.memory_space<vmem>>, vector<1x64xf32>
    %c1_425 = arith.constant 1 : index
    %c4032_426 = arith.constant 4032 : index
    %285 = vector.load %arg13[%c1_425, %c4032_426] : memref<2x4096xf32, #tpu.memory_space<vmem>>, vector<1x64xf32>
    tpu.vector_store %arg13[%c1_425, %c4032_426], %284 {strides = array<i32>} : memref<2x4096xf32, #tpu.memory_space<vmem>>, vector<1x64xf32>,
    %c0_427 = arith.constant 0 : index
    %c0_428 = arith.constant 0 : index
    %286 = vector.load %arg13[%c0_427, %c0_428] : memref<2x4096xf32, #tpu.memory_space<vmem>>, vector<2x4096xf32>
    %287 = arith.truncf %286 : vector<2x4096xf32> to vector<2x4096xbf16>
    %c0_429 = arith.constant 0 : index
    %c0_430 = arith.constant 0 : index
    %288 = vector.load %arg6[%c0_429, %c0_430] : memref<4096x128xbf16, #tpu.memory_space<vmem>>, vector<4096x128xbf16>
    %cst_431 = arith.constant dense<0.000000e+00> : vector<2x128xf32>
    %289 = tpu.matmul %287, %288, %cst_431 {dimension_numbers = #tpu.dot_dimension_numbers<[1], [0], [0], [1], [0, 0, 1, 1], [], []>} : vector<2x4096xbf16>, vector<4096x128xbf16>, vector<2x128xf32> -> vector<2x128xf32>
    %c0_432 = arith.constant 0 : index
    %c0_433 = arith.constant 0 : index
    %290 = vector.load %arg7[%c0_432, %c0_433] : memref<1x128xf32, #tpu.memory_space<vmem>>, vector<1x128xf32>
    %291 = vector.broadcast %290 : vector<1x128xf32> to vector<2x128xf32>
    %292 = arith.addf %289, %291 : vector<2x128xf32>
    %cst_434 = arith.constant 0.000000e+00 : f32
    %293 = vector.broadcast %cst_434 : f32 to vector<2x128xf32>
    %294 = arith.maximumf %292, %293 : vector<2x128xf32>
    %295 = arith.truncf %294 : vector<2x128xf32> to vector<2x128xbf16>
    %c0_435 = arith.constant 0 : index
    %c0_436 = arith.constant 0 : index
    %296 = vector.load %arg8[%c0_435, %c0_436] : memref<128x128xbf16, #tpu.memory_space<vmem>>, vector<128x128xbf16>
    %cst_437 = arith.constant dense<0.000000e+00> : vector<2x128xf32>
    %297 = tpu.matmul %295, %296, %cst_437 {dimension_numbers = #tpu.dot_dimension_numbers<[1], [0], [0], [1], [0, 0, 1, 1], [], []>} : vector<2x128xbf16>, vector<128x128xbf16>, vector<2x128xf32> -> vector<2x128xf32>
    %c0_438 = arith.constant 0 : index
    %c0_439 = arith.constant 0 : index
    %298 = vector.load %arg9[%c0_438, %c0_439] : memref<1x128xf32, #tpu.memory_space<vmem>>, vector<1x128xf32>
    %299 = vector.broadcast %298 : vector<1x128xf32> to vector<2x128xf32>
    %300 = arith.addf %297, %299 : vector<2x128xf32>
    %cst_440 = arith.constant 0.000000e+00 : f32
    %301 = vector.broadcast %cst_440 : f32 to vector<2x128xf32>
    %302 = arith.maximumf %300, %301 : vector<2x128xf32>
    %c0_441 = arith.constant 0 : index
    %c0_442 = arith.constant 0 : index
    %303 = vector.load %arg10[%c0_441, %c0_442] : memref<2x128xf32, #tpu.memory_space<vmem>>, vector<2x128xf32>
    tpu.vector_store %arg10[%c0_441, %c0_442], %302 {strides = array<i32>} : memref<2x128xf32, #tpu.memory_space<vmem>>, vector<2x128xf32>,
    return
  }
  func.func @transform_0(%arg0: i32) -> (i32, i32, i32) {
    %c0_i32 = arith.constant 0 : i32
    %c0_i32_0 = arith.constant 0 : i32
    %c0_i32_1 = arith.constant 0 : i32
    %c0_i32_2 = arith.constant 0 : i32
    return %c0_i32, %c0_i32_0, %c0_i32_1 : i32, i32, i32
  }
  func.func @transform_1(%arg0: i32) -> (i32, i32, i32) {
    %c0_i32 = arith.constant 0 : i32
    %c0_i32_0 = arith.constant 0 : i32
    %c0_i32_1 = arith.constant 0 : i32
    %c0_i32_2 = arith.constant 0 : i32
    return %c0_i32, %c0_i32_0, %c0_i32_1 : i32, i32, i32
  }
  func.func @transform_2(%arg0: i32) -> (i32, i32, i32) {
    %c0_i32 = arith.constant 0 : i32
    %c0_i32_0 = arith.constant 0 : i32
    %c0_i32_1 = arith.constant 0 : i32
    %c0_i32_2 = arith.constant 0 : i32
    return %c0_i32, %c0_i32_0, %c0_i32_1 : i32, i32, i32
  }
  func.func @transform_3(%arg0: i32) -> (i32, i32) {
    %c0_i32 = arith.constant 0 : i32
    %c0_i32_0 = arith.constant 0 : i32
    %c0_i32_1 = arith.constant 0 : i32
    return %c0_i32, %c0_i32_0 : i32, i32
  }
  func.func @transform_4(%arg0: i32) -> (i32, i32) {
    %c0_i32 = arith.constant 0 : i32
    %c0_i32_0 = arith.constant 0 : i32
    %c0_i32_1 = arith.constant 0 : i32
    return %c0_i32, %c0_i32_0 : i32, i32
  }
  func.func @transform_5(%arg0: i32) -> (i32, i32) {
    %c0_i32 = arith.constant 0 : i32
    %c0_i32_0 = arith.constant 0 : i32
    %c0_i32_1 = arith.constant 0 : i32
    return %c0_i32, %c0_i32_0 : i32, i32
  }
  func.func @transform_6(%arg0: i32) -> (i32, i32) {
    %c0_i32 = arith.constant 0 : i32
    %c0_i32_0 = arith.constant 0 : i32
    %c0_i32_1 = arith.constant 0 : i32
    return %c0_i32, %c0_i32_0 : i32, i32
  }
  func.func @transform_7(%arg0: i32) -> (i32, i32) {
    %c0_i32 = arith.constant 0 : i32
    %c0_i32_0 = arith.constant 0 : i32
    %c0_i32_1 = arith.constant 0 : i32
    return %c0_i32, %c0_i32_0 : i32, i32
  }
  func.func @transform_8(%arg0: i32) -> (i32, i32) {
    %c0_i32 = arith.constant 0 : i32
    %c0_i32_0 = arith.constant 0 : i32
    %c0_i32_1 = arith.constant 0 : i32
    return %c0_i32, %c0_i32_0 : i32, i32
  }
  func.func @transform_9(%arg0: i32) -> (i32, i32) {
    %c0_i32 = arith.constant 0 : i32
    %c0_i32_0 = arith.constant 0 : i32
    %c0_i32_1 = arith.constant 0 : i32
    return %c0_i32, %c0_i32_0 : i32, i32
  }
}

</mosaic_0001>

<llo_original>
// kernel: _forward.1
$region0: #{_forward.1}
  #allocation0 [shape = 'u32[]', space=smem, size = 0x4, offset = 0x4, fixed_abs, tag = 'smem constant byte address 0x4 - core index']
  #allocation1 [shape = 'u32[144,128]{1,0:T(1,128)}', space=vmem, size = 0x12000, scoped, tag = 'internal scratch']
  #allocation2 [shape = 'f32[8,128]{1,0:T(8,128)}', space=vmem, size = 0x1000, scoped, tag = 'scratch operand']
  #allocation3 [shape = 'f32[64,128]{1,0:T(8,128)}', space=vmem, size = 0x8000, scoped, tag = 'scratch operand']
  #allocation4 [shape = 'f32[2,4096]{1,0:T(2,128)}', space=vmem, size = 0x8000, scoped, tag = 'scratch operand']
  %s0 = inlined_call_operand.vmem [shape: f32[2,4,64], index: 0, kind: input, shape index: {}]
  %s1 = inlined_call_operand.vmem [shape: f32[2,2,64], index: 1, kind: input, shape index: {}]
  %s2 = inlined_call_operand.vmem [shape: f32[2,1,64], index: 2, kind: input, shape index: {}]
  %s3 = inlined_call_operand.hbm [shape: bf16[64,8], index: 3, kind: input, shape index: {}]
  %s4 = inlined_call_operand.hbm [shape: f32[64,1], index: 4, kind: input, shape index: {}]
  %s5 = inlined_call_operand.hbm [shape: bf16[4096,128], index: 5, kind: input, shape index: {}]
  %s6 = inlined_call_operand.vmem [shape: f32[1,128], index: 6, kind: input, shape index: {}]
  %s7 = inlined_call_operand.vmem [shape: bf16[128,128], index: 7, kind: input, shape index: {}]
  %s8 = inlined_call_operand.vmem [shape: f32[1,128], index: 8, kind: input, shape index: {}]
  %s9 = inlined_call_operand.hbm [shape: f32[2,128], index: 9, kind: output, shape index: {}]
  %s10 = sld [smem:[#allocation0]]
  $region58: #{_forward.1} parent=0
    _
  %s12 = ssub.s32 1, %s10
  %s13 = scalar_select 0, %s12, %s10
  $region1: #{_forward.1} parent=0
    #allocation5 [shape = 'u8[16384]{0}', space=vmem, size = 0x4000, scoped, tag = 'input window, operand 3, single buffered']
    #allocation6 [shape = 's32[1]{0}', space=sflag, size = 0x4, scoped, tag = 'scoped memory for _forward.1']
    #allocation7 [shape = 's32[1]{0}', space=sflag, size = 0x4, scoped, tag = 'scoped memory for _forward.1']
    #allocation8 [shape = 'u8[32768]{0}', space=vmem, size = 0x8000, scoped, tag = 'input window, operand 4, single buffered']
    #allocation9 [shape = 's32[1]{0}', space=sflag, size = 0x4, scoped, tag = 'scoped memory for _forward.1']
    #allocation10 [shape = 'u8[1048576]{0}', space=vmem, size = 0x100000, scoped, tag = 'input window, operand 5, single buffered']
    #allocation11 [shape = 'u8[1024]{0}', space=vmem, size = 0x400, scoped, tag = 'output window, operand 0, single buffered']
    %14 = vsyncpa [#allocation6], 0
    %15 = vsyncpa [#allocation9], 0
    %16 = vsyncpa [#allocation7], 0
    // Predicated region
    $region2: #{_forward.1} parent=1 // pred_check
      _
    $region3: #{_forward.1} parent=1 // pred_check_branch
      %18 = sbr.rel (0) target = $region5
    $region4: #{_forward.1} parent=1 // pred_region
      _
    $region5: #{_forward.1} parent=1 // pred_fallthru
      _
    // Predicated region
    $region6: #{_forward.1} parent=1 // pred_check
      _
    $region7: #{_forward.1} parent=1 // pred_check_branch
      %20 = sbr.rel (0) target = $region9
    $region8: #{_forward.1} parent=1 // pred_region
      _
    $region9: #{_forward.1} parent=1 // pred_fallthru
      _
    // Predicated region
    $region10: #{_forward.1} parent=1 // pred_check
      _
    $region11: #{_forward.1} parent=1 // pred_check_branch
      %22 = sbr.rel (0) target = $region13
    $region12: #{_forward.1} parent=1 // pred_region
      _
    $region13: #{_forward.1} parent=1 // pred_fallthru
      _
    // Predicated region
    $region14: #{_forward.1} parent=1 // pred_check
      _
    $region15: #{_forward.1} parent=1 // pred_check_branch
      %24 = sbr.rel (0) target = $region17
    $region16: #{_forward.1} parent=1 // pred_region
      %s26 = ssub.s32 512, 512
      %27 = vsyncadd [#allocation6], %s26
      %s28 = sshll.u32 [#allocation5], 4
      %s29 = int_to_ptr.vmem [resolvable:$true] %s28
      %34 = dma.hbm_to_vmem [thread:$0]  %s3, 512, %s29, [#allocation6], 64, 64, 4
    $region17: #{_forward.1} parent=1 // pred_fallthru
      _
    // Predicated region
    $region18: #{_forward.1} parent=1 // pred_check
      _
    $region19: #{_forward.1} parent=1 // pred_check_branch
      %36 = sbr.rel (0) target = $region21
    $region20: #{_forward.1} parent=1 // pred_region
      %s38 = ssub.s32 1024, 1024
      %39 = vsyncadd [#allocation9], %s38
      %s40 = sshll.u32 [#allocation8], 4
      %s41 = int_to_ptr.vmem [resolvable:$true] %s40
      %46 = dma.hbm_to_vmem [thread:$0]  %s4, 1024, %s41, [#allocation9], 128, 128, 8
    $region21: #{_forward.1} parent=1 // pred_fallthru
      _
    // Predicated region
    $region22: #{_forward.1} parent=1 // pred_check
      _
    $region23: #{_forward.1} parent=1 // pred_check_branch
      %48 = sbr.rel (0) target = $region25
    $region24: #{_forward.1} parent=1 // pred_region
      %s50 = ssub.s32 32768, 32768
      %51 = vsyncadd [#allocation9], %s50
      %s52 = sshll.u32 [#allocation10], 4
      %s53 = int_to_ptr.vmem [resolvable:$true] %s52
      %58 = dma.hbm_to_vmem [thread:$0]  %s5, 32768, %s53, [#allocation9], 64, 64, 4
    $region25: #{_forward.1} parent=1 // pred_fallthru
      _
    // Predicated region
    $region26: #{_forward.1} parent=1 // pred_check
      _
    $region27: #{_forward.1} parent=1 // pred_check_branch
      %60 = sbr.rel (0) target = $region29
    $region28: #{_forward.1} parent=1 // pred_region
      _
    $region29: #{_forward.1} parent=1 // pred_fallthru
      _
    // Predicated region
    $region30: #{_forward.1} parent=1 // pred_check
      _
    $region31: #{_forward.1} parent=1 // pred_check_branch
      %62 = sbr.rel (0) target = $region33
    $region32: #{_forward.1} parent=1 // pred_region
      _
    $region33: #{_forward.1} parent=1 // pred_fallthru
      _
    // Predicated region
    $region34: #{_forward.1} parent=1 // pred_check
      _
    $region35: #{_forward.1} parent=1 // pred_check_branch
      %64 = sbr.rel (0) target = $region37
    $region36: #{_forward.1} parent=1 // pred_region
      _
    $region37: #{_forward.1} parent=1 // pred_fallthru
      _
    // Predicated region
    $region38: #{_forward.1} parent=1 // pred_check
      _
    $region39: #{_forward.1} parent=1 // pred_check_branch
      %66 = sbr.rel (0) target = $region41
    $region40: #{_forward.1} parent=1 // pred_region
      %67 = dma.done [#allocation6], 512
    $region41: #{_forward.1} parent=1 // pred_fallthru
      _
    // Predicated region
    $region42: #{_forward.1} parent=1 // pred_check
      _
    $region43: #{_forward.1} parent=1 // pred_check_branch
      %69 = sbr.rel (0) target = $region45
    $region44: #{_forward.1} parent=1 // pred_region
      %70 = dma.done [#allocation9], 1024
    $region45: #{_forward.1} parent=1 // pred_fallthru
      _
    // Predicated region
    $region46: #{_forward.1} parent=1 // pred_check
      _
    $region47: #{_forward.1} parent=1 // pred_check_branch
      %72 = sbr.rel (0) target = $region49
    $region48: #{_forward.1} parent=1 // pred_region
      %73 = dma.done [#allocation9], 32768
    $region49: #{_forward.1} parent=1 // pred_fallthru
      _
    %75 = vst [vmem:[#allocation2] sm:$0xff] 0.0
    %v76 = vld [vmem:[%s0] sm:$0xf]
    %vm77 = vcmask 519168
    %78 = vst.msk [vmem:[#allocation2] sm:$0xf] %vm77, %v76
    %v79 = vld [vmem:[%s1] sm:$0x3]
    %vm80 = vcmask 517120
    %81 = vst.msk [vmem:[#allocation2 + $0x4] sm:$0x3] %vm80, %v79
    %v82 = vld [vmem:[%s2] sm:$0x1]
    %vm83 = vcmask 516096
    %84 = vst.msk [vmem:[#allocation2 + $0x6] sm:$0x1] %vm83, %v82
    %s85 = scalar_lea.vmem %s0, 4
    %v86 = vld [vmem:[%s85] sm:$0xf]
    %88 = vrot.lane.b32.xlu0 %v86, 64
    %v89 = vpop.permute.xlu0 %88
    %vm91 = vcmask 1043968
    %92 = vst.msk [vmem:[#allocation2] sm:$0xf] %vm91, %v89
    %s93 = scalar_lea.vmem %s1, 2
    %v94 = vld [vmem:[%s93] sm:$0x3]
    %96 = vrot.lane.b32.xlu0 %v94, 64
    %v97 = vpop.permute.xlu0 %96
    %vm99 = vcmask 1041920
    %100 = vst.msk [vmem:[#allocation2 + $0x4] sm:$0x3] %vm99, %v97
    %s101 = scalar_lea.vmem %s2, 1
    %v102 = vld [vmem:[%s101] sm:$0x1]
    %v104 = vlaneseq
    %v105 = vshrl.u32 %v104, 7
    %v106 = vsub.s32 0, %v105
    %v107 = vrot.slane %v102, %v106
    %108 = vrot.lane.b32.xlu0 %v107, 64
    %v109 = vpop.permute.xlu0 %108
    %vm111 = vcmask 1040896
    %112 = vst.msk [vmem:[#allocation2 + $0x6] sm:$0x1] %vm111, %v109
    %v113 = vld [vmem:[#allocation5] sm:$0xf]
    %v114 = vld [vmem:[#allocation5 + $0x4] sm:$0xf]
    %v115 = vld [vmem:[#allocation5 + $0x8] sm:$0xf]
    %v116 = vld [vmem:[#allocation5 + $0xc] sm:$0xf]
    %v117 = vld [vmem:[#allocation5 + $0x10] sm:$0xf]
    %v118 = vld [vmem:[#allocation5 + $0x14] sm:$0xf]
    %v119 = vld [vmem:[#allocation5 + $0x18] sm:$0xf]
    %v120 = vld [vmem:[#allocation5 + $0x1c] sm:$0xf]
    %v121 = vld [vmem:[#allocation2] sm:$0xff]
    %v122 = vpack.c.bf16 %v121, %v121
    %v123 = vld [vmem:[#allocation8] sm:$0xff]
    %v124 = vld [vmem:[#allocation8 + $0x8] sm:$0xff]
    %v125 = vld [vmem:[#allocation8 + $0x10] sm:$0xff]
    %v126 = vld [vmem:[#allocation8 + $0x18] sm:$0xff]
    %v127 = vld [vmem:[#allocation8 + $0x20] sm:$0xff]
    %v128 = vld [vmem:[#allocation8 + $0x28] sm:$0xff]
    %v129 = vld [vmem:[#allocation8 + $0x30] sm:$0xff]
    %v130 = vld [vmem:[#allocation8 + $0x38] sm:$0xff]
    %132 = vset.pattern.permute.xlu0 0
    %133 = vperm.xlu0 %132, %v123
    %v134 = vpop.permute.xlu0 %133
    %137 = vset.pattern.permute.xlu0 0
    %138 = vperm.xlu0 %137, %v124
    %v139 = vpop.permute.xlu0 %138
    %142 = vset.pattern.permute.xlu0 0
    %143 = vperm.xlu0 %142, %v125
    %v144 = vpop.permute.xlu0 %143
    %147 = vset.pattern.permute.xlu0 0
    %148 = vperm.xlu0 %147, %v126
    %v149 = vpop.permute.xlu0 %148
    %152 = vset.pattern.permute.xlu0 0
    %153 = vperm.xlu0 %152, %v127
    %v154 = vpop.permute.xlu0 %153
    %157 = vset.pattern.permute.xlu0 0
    %158 = vperm.xlu0 %157, %v128
    %v159 = vpop.permute.xlu0 %158
    %162 = vset.pattern.permute.xlu0 0
    %163 = vperm.xlu0 %162, %v129
    %v164 = vpop.permute.xlu0 %163
    %167 = vset.pattern.permute.xlu0 0
    %168 = vperm.xlu0 %167, %v130
    %v169 = vpop.permute.xlu0 %168
    %v179 = vunpack.c.l.b16 %v113
    %v180 = vunpack.c.l.b16 %v114
    %v181 = vunpack.c.l.b16 %v115
    %v182 = vunpack.c.l.b16 %v116
    %v183 = vunpack.c.l.b16 %v117
    %v184 = vunpack.c.l.b16 %v118
    %v185 = vunpack.c.l.b16 %v119
    %v186 = vunpack.c.l.b16 %v120
    %v187 = vpack.c.b16 %v180, %v179
    %v188 = vpack.c.b16 %v182, %v181
    %v189 = vpack.c.b16 %v184, %v183
    %v190 = vpack.c.b16 %v186, %v185
    %vm191 = vcmask 64512
    %v193 = vsel %vm191, %v187, 0
    %v196 = vsel %vm191, %v188, 0
    %v199 = vsel %vm191, %v189, 0
    %v202 = vsel %vm191, %v190, 0
    %vm204 = vcmask 1043456
    %v206 = vsel %vm204, %v122, 0
    %208 = vmatprep.subr.bf16.mxu0 0
    %209 = vmatpush1.bf16.msra.mxu0 %v206
    %210 = vmatprep.subr.bf16.mxu0 0
    %211 = vmatpush1.bf16.msra.mxu0 0
    %212 = vmatprep.subr.bf16.mxu0 0
    %213 = vmatpush1.bf16.msra.mxu0 0
    %214 = vmatprep.subr.bf16.mxu0 0
    %215 = vmatpush1.bf16.msra.mxu0 0
    %216 = vmatprep.subr.bf16.mxu0 0
    %217 = vmatpush1.bf16.msra.mxu0 0
    %218 = vmatprep.subr.bf16.mxu0 0
    %219 = vmatpush1.bf16.msra.mxu0 0
    %220 = vmatprep.subr.bf16.mxu0 0
    %221 = vmatpush1.bf16.msra.mxu0 0
    %222 = vmatprep.subr.bf16.mxu0 0
    %223 = vmatpush1.bf16.msra.mxu0 0
    %224 = vmatprep.subr.bf16.mxu0 0
    %225 = vmatpush1.bf16.msra.mxu0 0
    %226 = vmatprep.subr.bf16.mxu0 0
    %227 = vmatpush1.bf16.msra.mxu0 0
    %228 = vmatprep.subr.bf16.mxu0 0
    %229 = vmatpush1.bf16.msra.mxu0 0
    %230 = vmatprep.subr.bf16.mxu0 0
    %231 = vmatpush1.bf16.msra.mxu0 0
    %232 = vmatprep.subr.bf16.mxu0 0
    %233 = vmatpush1.bf16.msra.mxu0 0
    %234 = vmatprep.subr.bf16.mxu0 0
    %235 = vmatpush1.bf16.msra.mxu0 0
    %236 = vmatprep.subr.bf16.mxu0 0
    %237 = vmatpush1.bf16.msra.mxu0 0
    %238 = vmatprep.subr.bf16.mxu0 0
    %239 = vmatpush1.bf16.msra.mxu0 0
    %240 = vmatprep.mubr.bf16.mxu0 0
    %241 = vmatmul.mubr.bf16.gmra.mrb[0].mxu0 %v193
    %v242 = vpop.f32.mrb[0].mxu0
    %v243 = vadd.f32 %v134, %v242
    %v244 = vpop.f32.mrb[0].mxu0
    %v245 = vpop.f32.mrb[0].mxu0
    %v246 = vadd.f32 %v139, %v245
    %v247 = vpop.f32.mrb[0].mxu0
    %248 = vmatprep.mubr.bf16.mxu0 0
    %249 = vmatmul.mubr.bf16.gmra.mrb[0].mxu0 %v196
    %v250 = vpop.f32.mrb[0].mxu0
    %v251 = vadd.f32 %v144, %v250
    %v252 = vpop.f32.mrb[0].mxu0
    %v253 = vpop.f32.mrb[0].mxu0
    %v254 = vadd.f32 %v149, %v253
    %v255 = vpop.f32.mrb[0].mxu0
    %256 = vmatprep.mubr.bf16.mxu0 0
    %257 = vmatmul.mubr.bf16.gmra.mrb[0].mxu0 %v199
    %v258 = vpop.f32.mrb[0].mxu0
    %v259 = vadd.f32 %v154, %v258
    %v260 = vpop.f32.mrb[0].mxu0
    %v261 = vpop.f32.mrb[0].mxu0
    %v262 = vadd.f32 %v159, %v261
    %v263 = vpop.f32.mrb[0].mxu0
    %264 = vmatprep.mubr.bf16.mxu0 0
    %265 = vmatmul.mubr.bf16.gmra.mrb[0].mxu0 %v202
    %v266 = vpop.f32.mrb[0].mxu0
    %v267 = vadd.f32 %v164, %v266
    %v268 = vpop.f32.mrb[0].mxu0
    %v269 = vpop.f32.mrb[0].mxu0
    %v270 = vadd.f32 %v169, %v269
    %v271 = vpop.f32.mrb[0].mxu0
    %272 = vdwg.mxu0
    %v273 = vmax.f32 %v243, 0.0
    %v274 = vmax.f32 %v246, 0.0
    %v275 = vmax.f32 %v251, 0.0
    %v276 = vmax.f32 %v254, 0.0
    %v277 = vmax.f32 %v259, 0.0
    %v278 = vmax.f32 %v262, 0.0
    %v279 = vmax.f32 %v267, 0.0
    %v280 = vmax.f32 %v270, 0.0
    %281 = vst [vmem:[#allocation3] sm:$0xff] %v273
    %282 = vst [vmem:[#allocation3 + $0x8] sm:$0xff] %v274
    %283 = vst [vmem:[#allocation3 + $0x10] sm:$0xff] %v275
    %284 = vst [vmem:[#allocation3 + $0x18] sm:$0xff] %v276
    %285 = vst [vmem:[#allocation3 + $0x20] sm:$0xff] %v277
    %286 = vst [vmem:[#allocation3 + $0x28] sm:$0xff] %v278
    %287 = vst [vmem:[#allocation3 + $0x30] sm:$0xff] %v279
    %288 = vst [vmem:[#allocation3 + $0x38] sm:$0xff] %v280
    %v289 = vld [vmem:[#allocation3] sm:$0x1]
    %290 = vst.msk [vmem:[#allocation4] sm:$0x1] %vm83, %v289
    %v291 = vld [vmem:[#allocation3 + $0x1] sm:$0x1]
    %v294 = vunpack.c.l.s4 1983009808
    %v295 = vunpack.c.0.s8 %v294
    %v296 = vlaneseq
    %v297 = vshrl.u32 %v296, 7
    %v298 = vsub.s32 %v295, %v297
    %v299 = vrot.slane %v291, %v298
    %300 = vrot.lane.b32.xlu0 %v299, 64
    %v301 = vpop.permute.xlu0 %300
    %303 = vst.msk [vmem:[#allocation4] sm:$0x1] %vm111, %v301
    %v304 = vld [vmem:[#allocation3 + $0x2] sm:$0x1]
    %305 = vst.msk [vmem:[#allocation4 + $0x2] sm:$0x1] %vm83, %v304
    %v306 = vld [vmem:[#allocation3 + $0x3] sm:$0x1]
    %v309 = vunpack.c.l.s4 1983009808
    %v310 = vunpack.c.0.s8 %v309
    %v311 = vlaneseq
    %v312 = vshrl.u32 %v311, 7
    %v313 = vsub.s32 %v310, %v312
    %v314 = vrot.slane %v306, %v313
    %315 = vrot.lane.b32.xlu0 %v314, 64
    %v316 = vpop.permute.xlu0 %315
    %318 = vst.msk [vmem:[#allocation4 + $0x2] sm:$0x1] %vm111, %v316
    %v319 = vld [vmem:[#allocation3 + $0x4] sm:$0x1]
    %320 = vst.msk [vmem:[#allocation4 + $0x4] sm:$0x1] %vm83, %v319
    %v321 = vld [vmem:[#allocation3 + $0x5] sm:$0x1]
    %v324 = vunpack.c.l.s4 1983009808
    %v325 = vunpack.c.0.s8 %v324
    %v326 = vlaneseq
    %v327 = vshrl.u32 %v326, 7
    %v328 = vsub.s32 %v325, %v327
    %v329 = vrot.slane %v321, %v328
    %330 = vrot.lane.b32.xlu0 %v329, 64
    %v331 = vpop.permute.xlu0 %330
    %333 = vst.msk [vmem:[#allocation4 + $0x4] sm:$0x1] %vm111, %v331
    %v334 = vld [vmem:[#allocation3 + $0x6] sm:$0x1]
    %335 = vst.msk [vmem:[#allocation4 + $0x6] sm:$0x1] %vm83, %v334
    %v336 = vld [vmem:[#allocation3 + $0x7] sm:$0x1]
    %v339 = vunpack.c.l.s4 1983009808
    %v340 = vunpack.c.0.s8 %v339
    %v341 = vlaneseq
    %v342 = vshrl.u32 %v341, 7
    %v343 = vsub.s32 %v340, %v342
    %v344 = vrot.slane %v336, %v343
    %345 = vrot.lane.b32.xlu0 %v344, 64
    %v346 = vpop.permute.xlu0 %345
    %348 = vst.msk [vmem:[#allocation4 + $0x6] sm:$0x1] %vm111, %v346
    %v349 = vld [vmem:[#allocation3 + $0x8] sm:$0x1]
    %350 = vst.msk [vmem:[#allocation4 + $0x8] sm:$0x1] %vm83, %v349
    %v351 = vld [vmem:[#allocation3 + $0x9] sm:$0x1]
    %v354 = vunpack.c.l.s4 1983009808
    %v355 = vunpack.c.0.s8 %v354
    %v356 = vlaneseq
    %v357 = vshrl.u32 %v356, 7
    %v358 = vsub.s32 %v355, %v357
    %v359 = vrot.slane %v351, %v358
    %360 = vrot.lane.b32.xlu0 %v359, 64
    %v361 = vpop.permute.xlu0 %360
    %363 = vst.msk [vmem:[#allocation4 + $0x8] sm:$0x1] %vm111, %v361
    %v364 = vld [vmem:[#allocation3 + $0xa] sm:$0x1]
    %365 = vst.msk [vmem:[#allocation4 + $0xa] sm:$0x1] %vm83, %v364
    %v366 = vld [vmem:[#allocation3 + $0xb] sm:$0x1]
    %v369 = vunpack.c.l.s4 1983009808
    %v370 = vunpack.c.0.s8 %v369
    %v371 = vlaneseq
    %v372 = vshrl.u32 %v371, 7
    %v373 = vsub.s32 %v370, %v372
    %v374 = vrot.slane %v366, %v373
    %375 = vrot.lane.b32.xlu0 %v374, 64
    %v376 = vpop.permute.xlu0 %375
    %378 = vst.msk [vmem:[#allocation4 + $0xa] sm:$0x1] %vm111, %v376
    %v379 = vld [vmem:[#allocation3 + $0xc] sm:$0x1]
    %380 = vst.msk [vmem:[#allocation4 + $0xc] sm:$0x1] %vm83, %v379
    %v381 = vld [vmem:[#allocation3 + $0xd] sm:$0x1]
    %v384 = vunpack.c.l.s4 1983009808
    %v385 = vunpack.c.0.s8 %v384
    %v386 = vlaneseq
    %v387 = vshrl.u32 %v386, 7
    %v388 = vsub.s32 %v385, %v387
    %v389 = vrot.slane %v381, %v388
    %390 = vrot.lane.b32.xlu0 %v389, 64
    %v391 = vpop.permute.xlu0 %390
    %393 = vst.msk [vmem:[#allocation4 + $0xc] sm:$0x1] %vm111, %v391
    %v394 = vld [vmem:[#allocation3 + $0xe] sm:$0x1]
    %395 = vst.msk [vmem:[#allocation4 + $0xe] sm:$0x1] %vm83, %v394
    %v396 = vld [vmem:[#allocation3 + $0xf] sm:$0x1]
    %v399 = vunpack.c.l.s4 1983009808
    %v400 = vunpack.c.0.s8 %v399
    %v401 = vlaneseq
    %v402 = vshrl.u32 %v401, 7
    %v403 = vsub.s32 %v400, %v402
    %v404 = vrot.slane %v396, %v403
    %405 = vrot.lane.b32.xlu0 %v404, 64
    %v406 = vpop.permute.xlu0 %405
    %408 = vst.msk [vmem:[#allocation4 + $0xe] sm:$0x1] %vm111, %v406
    %v409 = vld [vmem:[#allocation3 + $0x10] sm:$0x1]
    %410 = vst.msk [vmem:[#allocation4 + $0x10] sm:$0x1] %vm83, %v409
    %v411 = vld [vmem:[#allocation3 + $0x11] sm:$0x1]
    %v414 = vunpack.c.l.s4 1983009808
    %v415 = vunpack.c.0.s8 %v414
    %v416 = vlaneseq
    %v417 = vshrl.u32 %v416, 7
    %v418 = vsub.s32 %v415, %v417
    %v419 = vrot.slane %v411, %v418
    %420 = vrot.lane.b32.xlu0 %v419, 64
    %v421 = vpop.permute.xlu0 %420
    %423 = vst.msk [vmem:[#allocation4 + $0x10] sm:$0x1] %vm111, %v421
    %v424 = vld [vmem:[#allocation3 + $0x12] sm:$0x1]
    %425 = vst.msk [vmem:[#allocation4 + $0x12] sm:$0x1] %vm83, %v424
    %v426 = vld [vmem:[#allocation3 + $0x13] sm:$0x1]
    %v429 = vunpack.c.l.s4 1983009808
    %v430 = vunpack.c.0.s8 %v429
    %v431 = vlaneseq
    %v432 = vshrl.u32 %v431, 7
    %v433 = vsub.s32 %v430, %v432
    %v434 = vrot.slane %v426, %v433
    %435 = vrot.lane.b32.xlu0 %v434, 64
    %v436 = vpop.permute.xlu0 %435
    %438 = vst.msk [vmem:[#allocation4 + $0x12] sm:$0x1] %vm111, %v436
    %v439 = vld [vmem:[#allocation3 + $0x14] sm:$0x1]
    %440 = vst.msk [vmem:[#allocation4 + $0x14] sm:$0x1] %vm83, %v439
    %v441 = vld [vmem:[#allocation3 + $0x15] sm:$0x1]
    %v444 = vunpack.c.l.s4 1983009808
    %v445 = vunpack.c.0.s8 %v444
    %v446 = vlaneseq
    %v447 = vshrl.u32 %v446, 7
    %v448 = vsub.s32 %v445, %v447
    %v449 = vrot.slane %v441, %v448
    %450 = vrot.lane.b32.xlu0 %v449, 64
    %v451 = vpop.permute.xlu0 %450
    %453 = vst.msk [vmem:[#allocation4 + $0x14] sm:$0x1] %vm111, %v451
    %v454 = vld [vmem:[#allocation3 + $0x16] sm:$0x1]
    %455 = vst.msk [vmem:[#allocation4 + $0x16] sm:$0x1] %vm83, %v454
    %v456 = vld [vmem:[#allocation3 + $0x17] sm:$0x1]
    %v459 = vunpack.c.l.s4 1983009808
    %v460 = vunpack.c.0.s8 %v459
    %v461 = vlaneseq
    %v462 = vshrl.u32 %v461, 7
    %v463 = vsub.s32 %v460, %v462
    %v464 = vrot.slane %v456, %v463
    %465 = vrot.lane.b32.xlu0 %v464, 64
    %v466 = vpop.permute.xlu0 %465
    %468 = vst.msk [vmem:[#allocation4 + $0x16] sm:$0x1] %vm111, %v466
    %v469 = vld [vmem:[#allocation3 + $0x18] sm:$0x1]
    %470 = vst.msk [vmem:[#allocation4 + $0x18] sm:$0x1] %vm83, %v469
    %v471 = vld [vmem:[#allocation3 + $0x19] sm:$0x1]
    %v474 = vunpack.c.l.s4 1983009808
    %v475 = vunpack.c.0.s8 %v474
    %v476 = vlaneseq
    %v477 = vshrl.u32 %v476, 7
    %v478 = vsub.s32 %v475, %v477
    %v479 = vrot.slane %v471, %v478
    %480 = vrot.lane.b32.xlu0 %v479, 64
    %v481 = vpop.permute.xlu0 %480
    %483 = vst.msk [vmem:[#allocation4 + $0x18] sm:$0x1] %vm111, %v481
    %v484 = vld [vmem:[#allocation3 + $0x1a] sm:$0x1]
    %485 = vst.msk [vmem:[#allocation4 + $0x1a] sm:$0x1] %vm83, %v484
    %v486 = vld [vmem:[#allocation3 + $0x1b] sm:$0x1]
    %v489 = vunpack.c.l.s4 1983009808
    %v490 = vunpack.c.0.s8 %v489
    %v491 = vlaneseq
    %v492 = vshrl.u32 %v491, 7
    %v493 = vsub.s32 %v490, %v492
    %v494 = vrot.slane %v486, %v493
    %495 = vrot.lane.b32.xlu0 %v494, 64
    %v496 = vpop.permute.xlu0 %495
    %498 = vst.msk [vmem:[#allocation4 + $0x1a] sm:$0x1] %vm111, %v496
    %v499 = vld [vmem:[#allocation3 + $0x1c] sm:$0x1]
    %500 = vst.msk [vmem:[#allocation4 + $0x1c] sm:$0x1] %vm83, %v499
    %v501 = vld [vmem:[#allocation3 + $0x1d] sm:$0x1]
    %v504 = vunpack.c.l.s4 1983009808
    %v505 = vunpack.c.0.s8 %v504
    %v506 = vlaneseq
    %v507 = vshrl.u32 %v506, 7
    %v508 = vsub.s32 %v505, %v507
    %v509 = vrot.slane %v501, %v508
    %510 = vrot.lane.b32.xlu0 %v509, 64
    %v511 = vpop.permute.xlu0 %510
    %513 = vst.msk [vmem:[#allocation4 + $0x1c] sm:$0x1] %vm111, %v511
    %v514 = vld [vmem:[#allocation3 + $0x1e] sm:$0x1]
    %515 = vst.msk [vmem:[#allocation4 + $0x1e] sm:$0x1] %vm83, %v514
    %v516 = vld [vmem:[#allocation3 + $0x1f] sm:$0x1]
    %v519 = vunpack.c.l.s4 1983009808
    %v520 = vunpack.c.0.s8 %v519
    %v521 = vlaneseq
    %v522 = vshrl.u32 %v521, 7
    %v523 = vsub.s32 %v520, %v522
    %v524 = vrot.slane %v516, %v523
    %525 = vrot.lane.b32.xlu0 %v524, 64
    %v526 = vpop.permute.xlu0 %525
    %528 = vst.msk [vmem:[#allocation4 + $0x1e] sm:$0x1] %vm111, %v526
    %v529 = vld [vmem:[#allocation3 + $0x20] sm:$0x1]
    %530 = vst.msk [vmem:[#allocation4 + $0x20] sm:$0x1] %vm83, %v529
    %v531 = vld [vmem:[#allocation3 + $0x21] sm:$0x1]
    %v534 = vunpack.c.l.s4 1983009808
    %v535 = vunpack.c.0.s8 %v534
    %v536 = vlaneseq
    %v537 = vshrl.u32 %v536, 7
    %v538 = vsub.s32 %v535, %v537
    %v539 = vrot.slane %v531, %v538
    %540 = vrot.lane.b32.xlu0 %v539, 64
    %v541 = vpop.permute.xlu0 %540
    %543 = vst.msk [vmem:[#allocation4 + $0x20] sm:$0x1] %vm111, %v541
    %v544 = vld [vmem:[#allocation3 + $0x22] sm:$0x1]
    %545 = vst.msk [vmem:[#allocation4 + $0x22] sm:$0x1] %vm83, %v544
    %v546 = vld [vmem:[#allocation3 + $0x23] sm:$0x1]
    %v549 = vunpack.c.l.s4 1983009808
    %v550 = vunpack.c.0.s8 %v549
    %v551 = vlaneseq
    %v552 = vshrl.u32 %v551, 7
    %v553 = vsub.s32 %v550, %v552
    %v554 = vrot.slane %v546, %v553
    %555 = vrot.lane.b32.xlu0 %v554, 64
    %v556 = vpop.permute.xlu0 %555
    %558 = vst.msk [vmem:[#allocation4 + $0x22] sm:$0x1] %vm111, %v556
    %v559 = vld [vmem:[#allocation3 + $0x24] sm:$0x1]
    %560 = vst.msk [vmem:[#allocation4 + $0x24] sm:$0x1] %vm83, %v559
    %v561 = vld [vmem:[#allocation3 + $0x25] sm:$0x1]
    %v564 = vunpack.c.l.s4 1983009808
    %v565 = vunpack.c.0.s8 %v564
    %v566 = vlaneseq
    %v567 = vshrl.u32 %v566, 7
    %v568 = vsub.s32 %v565, %v567
    %v569 = vrot.slane %v561, %v568
    %570 = vrot.lane.b32.xlu0 %v569, 64
    %v571 = vpop.permute.xlu0 %570
    %573 = vst.msk [vmem:[#allocation4 + $0x24] sm:$0x1] %vm111, %v571
    %v574 = vld [vmem:[#allocation3 + $0x26] sm:$0x1]
    %575 = vst.msk [vmem:[#allocation4 + $0x26] sm:$0x1] %vm83, %v574
    %v576 = vld [vmem:[#allocation3 + $0x27] sm:$0x1]
    %v579 = vunpack.c.l.s4 1983009808
    %v580 = vunpack.c.0.s8 %v579
    %v581 = vlaneseq
    %v582 = vshrl.u32 %v581, 7
    %v583 = vsub.s32 %v580, %v582
    %v584 = vrot.slane %v576, %v583
    %585 = vrot.lane.b32.xlu0 %v584, 64
    %v586 = vpop.permute.xlu0 %585
    %588 = vst.msk [vmem:[#allocation4 + $0x26] sm:$0x1] %vm111, %v586
    %v589 = vld [vmem:[#allocation3 + $0x28] sm:$0x1]
    %590 = vst.msk [vmem:[#allocation4 + $0x28] sm:$0x1] %vm83, %v589
    %v591 = vld [vmem:[#allocation3 + $0x29] sm:$0x1]
    %v594 = vunpack.c.l.s4 1983009808
    %v595 = vunpack.c.0.s8 %v594
    %v596 = vlaneseq
    %v597 = vshrl.u32 %v596, 7
    %v598 = vsub.s32 %v595, %v597
    %v599 = vrot.slane %v591, %v598
    %600 = vrot.lane.b32.xlu0 %v599, 64
    %v601 = vpop.permute.xlu0 %600
    %603 = vst.msk [vmem:[#allocation4 + $0x28] sm:$0x1] %vm111, %v601
    %v604 = vld [vmem:[#allocation3 + $0x2a] sm:$0x1]
    %605 = vst.msk [vmem:[#allocation4 + $0x2a] sm:$0x1] %vm83, %v604
    %v606 = vld [vmem:[#allocation3 + $0x2b] sm:$0x1]
    %v609 = vunpack.c.l.s4 1983009808
    %v610 = vunpack.c.0.s8 %v609
    %v611 = vlaneseq
    %v612 = vshrl.u32 %v611, 7
    %v613 = vsub.s32 %v610, %v612
    %v614 = vrot.slane %v606, %v613
    %615 = vrot.lane.b32.xlu0 %v614, 64
    %v616 = vpop.permute.xlu0 %615
    %618 = vst.msk [vmem:[#allocation4 + $0x2a] sm:$0x1] %vm111, %v616
    %v619 = vld [vmem:[#allocation3 + $0x2c] sm:$0x1]
    %620 = vst.msk [vmem:[#allocation4 + $0x2c] sm:$0x1] %vm83, %v619
    %v621 = vld [vmem:[#allocation3 + $0x2d] sm:$0x1]
    %v624 = vunpack.c.l.s4 1983009808
    %v625 = vunpack.c.0.s8 %v624
    %v626 = vlaneseq
    %v627 = vshrl.u32 %v626, 7
    %v628 = vsub.s32 %v625, %v627
    %v629 = vrot.slane %v621, %v628
    %630 = vrot.lane.b32.xlu0 %v629, 64
    %v631 = vpop.permute.xlu0 %630
    %633 = vst.msk [vmem:[#allocation4 + $0x2c] sm:$0x1] %vm111, %v631
    %v634 = vld [vmem:[#allocation3 + $0x2e] sm:$0x1]
    %635 = vst.msk [vmem:[#allocation4 + $0x2e] sm:$0x1] %vm83, %v634
    %v636 = vld [vmem:[#allocation3 + $0x2f] sm:$0x1]
    %v639 = vunpack.c.l.s4 1983009808
    %v640 = vunpack.c.0.s8 %v639
    %v641 = vlaneseq
    %v642 = vshrl.u32 %v641, 7
    %v643 = vsub.s32 %v640, %v642
    %v644 = vrot.slane %v636, %v643
    %645 = vrot.lane.b32.xlu0 %v644, 64
    %v646 = vpop.permute.xlu0 %645
    %648 = vst.msk [vmem:[#allocation4 + $0x2e] sm:$0x1] %vm111, %v646
    %v649 = vld [vmem:[#allocation3 + $0x30] sm:$0x1]
    %650 = vst.msk [vmem:[#allocation4 + $0x30] sm:$0x1] %vm83, %v649
    %v651 = vld [vmem:[#allocation3 + $0x31] sm:$0x1]
    %v654 = vunpack.c.l.s4 1983009808
    %v655 = vunpack.c.0.s8 %v654
    %v656 = vlaneseq
    %v657 = vshrl.u32 %v656, 7
    %v658 = vsub.s32 %v655, %v657
    %v659 = vrot.slane %v651, %v658
    %660 = vrot.lane.b32.xlu0 %v659, 64
    %v661 = vpop.permute.xlu0 %660
    %663 = vst.msk [vmem:[#allocation4 + $0x30] sm:$0x1] %vm111, %v661
    %v664 = vld [vmem:[#allocation3 + $0x32] sm:$0x1]
    %665 = vst.msk [vmem:[#allocation4 + $0x32] sm:$0x1] %vm83, %v664
    %v666 = vld [vmem:[#allocation3 + $0x33] sm:$0x1]
    %v669 = vunpack.c.l.s4 1983009808
    %v670 = vunpack.c.0.s8 %v669
    %v671 = vlaneseq
    %v672 = vshrl.u32 %v671, 7
    %v673 = vsub.s32 %v670, %v672
    %v674 = vrot.slane %v666, %v673
    %675 = vrot.lane.b32.xlu0 %v674, 64
    %v676 = vpop.permute.xlu0 %675
    %678 = vst.msk [vmem:[#allocation4 + $0x32] sm:$0x1] %vm111, %v676
    %v679 = vld [vmem:[#allocation3 + $0x34] sm:$0x1]
    %680 = vst.msk [vmem:[#allocation4 + $0x34] sm:$0x1] %vm83, %v679
    %v681 = vld [vmem:[#allocation3 + $0x35] sm:$0x1]
    %v684 = vunpack.c.l.s4 1983009808
    %v685 = vunpack.c.0.s8 %v684
    %v686 = vlaneseq
    %v687 = vshrl.u32 %v686, 7
    %v688 = vsub.s32 %v685, %v687
    %v689 = vrot.slane %v681, %v688
    %690 = vrot.lane.b32.xlu0 %v689, 64
    %v691 = vpop.permute.xlu0 %690
    %693 = vst.msk [vmem:[#allocation4 + $0x34] sm:$0x1] %vm111, %v691
    %v694 = vld [vmem:[#allocation3 + $0x36] sm:$0x1]
    %695 = vst.msk [vmem:[#allocation4 + $0x36] sm:$0x1] %vm83, %v694
    %v696 = vld [vmem:[#allocation3 + $0x37] sm:$0x1]
    %v699 = vunpack.c.l.s4 1983009808
    %v700 = vunpack.c.0.s8 %v699
    %v701 = vlaneseq
    %v702 = vshrl.u32 %v701, 7
    %v703 = vsub.s32 %v700, %v702
    %v704 = vrot.slane %v696, %v703
    %705 = vrot.lane.b32.xlu0 %v704, 64
    %v706 = vpop.permute.xlu0 %705
    %708 = vst.msk [vmem:[#allocation4 + $0x36] sm:$0x1] %vm111, %v706
    %v709 = vld [vmem:[#allocation3 + $0x38] sm:$0x1]
    %710 = vst.msk [vmem:[#allocation4 + $0x38] sm:$0x1] %vm83, %v709
    %v711 = vld [vmem:[#allocation3 + $0x39] sm:$0x1]
    %v714 = vunpack.c.l.s4 1983009808
    %v715 = vunpack.c.0.s8 %v714
    %v716 = vlaneseq
    %v717 = vshrl.u32 %v716, 7
    %v718 = vsub.s32 %v715, %v717
    %v719 = vrot.slane %v711, %v718
    %720 = vrot.lane.b32.xlu0 %v719, 64
    %v721 = vpop.permute.xlu0 %720
    %723 = vst.msk [vmem:[#allocation4 + $0x38] sm:$0x1] %vm111, %v721
    %v724 = vld [vmem:[#allocation3 + $0x3a] sm:$0x1]
    %725 = vst.msk [vmem:[#allocation4 + $0x3a] sm:$0x1] %vm83, %v724
    %v726 = vld [vmem:[#allocation3 + $0x3b] sm:$0x1]
    %v729 = vunpack.c.l.s4 1983009808
    %v730 = vunpack.c.0.s8 %v729
    %v731 = vlaneseq
    %v732 = vshrl.u32 %v731, 7
    %v733 = vsub.s32 %v730, %v732
    %v734 = vrot.slane %v726, %v733
    %735 = vrot.lane.b32.xlu0 %v734, 64
    %v736 = vpop.permute.xlu0 %735
    %738 = vst.msk [vmem:[#allocation4 + $0x3a] sm:$0x1] %vm111, %v736
    %v739 = vld [vmem:[#allocation3 + $0x3c] sm:$0x1]
    %740 = vst.msk [vmem:[#allocation4 + $0x3c] sm:$0x1] %vm83, %v739
    %v741 = vld [vmem:[#allocation3 + $0x3d] sm:$0x1]
    %v744 = vunpack.c.l.s4 1983009808
    %v745 = vunpack.c.0.s8 %v744
    %v746 = vlaneseq
    %v747 = vshrl.u32 %v746, 7
    %v748 = vsub.s32 %v745, %v747
    %v749 = vrot.slane %v741, %v748
    %750 = vrot.lane.b32.xlu0 %v749, 64
    %v751 = vpop.permute.xlu0 %750
    %753 = vst.msk [vmem:[#allocation4 + $0x3c] sm:$0x1] %vm111, %v751
    %v754 = vld [vmem:[#allocation3 + $0x3e] sm:$0x1]
    %755 = vst.msk [vmem:[#allocation4 + $0x3e] sm:$0x1] %vm83, %v754
    %v756 = vld [vmem:[#allocation3 + $0x3f] sm:$0x1]
    %v759 = vunpack.c.l.s4 1983009808
    %v760 = vunpack.c.0.s8 %v759
    %v761 = vlaneseq
    %v762 = vshrl.u32 %v761, 7
    %v763 = vsub.s32 %v760, %v762
    %v764 = vrot.slane %v756, %v763
    %765 = vrot.lane.b32.xlu0 %v764, 64
    %v766 = vpop.permute.xlu0 %765
    %768 = vst.msk [vmem:[#allocation4 + $0x3e] sm:$0x1] %vm111, %v766
    %v769 = vld [vmem:[#allocation3] sm:$0x1]
    %v772 = vunpack.c.l.s4 1983009808
    %v773 = vunpack.c.0.s8 %v772
    %v774 = vlaneseq
    %v775 = vshrl.u32 %v774, 7
    %v776 = vsub.s32 %v773, %v775
    %v777 = vrot.slane %v769, %v776
    %778 = vrot.lane.b32.xlu0 %v777, 64
    %v779 = vpop.permute.xlu0 %778
    %781 = vst.msk [vmem:[#allocation4 + $0x1] sm:$0x1] %vm83, %v779
    %v782 = vld [vmem:[#allocation3 + $0x1] sm:$0x1]
    %783 = vst.msk [vmem:[#allocation4 + $0x1] sm:$0x1] %vm111, %v782
    %v784 = vld [vmem:[#allocation3 + $0x2] sm:$0x1]
    %v787 = vunpack.c.l.s4 1983009808
    %v788 = vunpack.c.0.s8 %v787
    %v789 = vlaneseq
    %v790 = vshrl.u32 %v789, 7
    %v791 = vsub.s32 %v788, %v790
    %v792 = vrot.slane %v784, %v791
    %793 = vrot.lane.b32.xlu0 %v792, 64
    %v794 = vpop.permute.xlu0 %793
    %796 = vst.msk [vmem:[#allocation4 + $0x3] sm:$0x1] %vm83, %v794
    %v797 = vld [vmem:[#allocation3 + $0x3] sm:$0x1]
    %798 = vst.msk [vmem:[#allocation4 + $0x3] sm:$0x1] %vm111, %v797
    %v799 = vld [vmem:[#allocation3 + $0x4] sm:$0x1]
    %v802 = vunpack.c.l.s4 1983009808
    %v803 = vunpack.c.0.s8 %v802
    %v804 = vlaneseq
    %v805 = vshrl.u32 %v804, 7
    %v806 = vsub.s32 %v803, %v805
    %v807 = vrot.slane %v799, %v806
    %808 = vrot.lane.b32.xlu0 %v807, 64
    %v809 = vpop.permute.xlu0 %808
    %811 = vst.msk [vmem:[#allocation4 + $0x5] sm:$0x1] %vm83, %v809
    %v812 = vld [vmem:[#allocation3 + $0x5] sm:$0x1]
    %813 = vst.msk [vmem:[#allocation4 + $0x5] sm:$0x1] %vm111, %v812
    %v814 = vld [vmem:[#allocation3 + $0x6] sm:$0x1]
    %v817 = vunpack.c.l.s4 1983009808
    %v818 = vunpack.c.0.s8 %v817
    %v819 = vlaneseq
    %v820 = vshrl.u32 %v819, 7
    %v821 = vsub.s32 %v818, %v820
    %v822 = vrot.slane %v814, %v821
    %823 = vrot.lane.b32.xlu0 %v822, 64
    %v824 = vpop.permute.xlu0 %823
    %826 = vst.msk [vmem:[#allocation4 + $0x7] sm:$0x1] %vm83, %v824
    %v827 = vld [vmem:[#allocation3 + $0x7] sm:$0x1]
    %828 = vst.msk [vmem:[#allocation4 + $0x7] sm:$0x1] %vm111, %v827
    %v829 = vld [vmem:[#allocation3 + $0x8] sm:$0x1]
    %v832 = vunpack.c.l.s4 1983009808
    %v833 = vunpack.c.0.s8 %v832
    %v834 = vlaneseq
    %v835 = vshrl.u32 %v834, 7
    %v836 = vsub.s32 %v833, %v835
    %v837 = vrot.slane %v829, %v836
    %838 = vrot.lane.b32.xlu0 %v837, 64
    %v839 = vpop.permute.xlu0 %838
    %841 = vst.msk [vmem:[#allocation4 + $0x9] sm:$0x1] %vm83, %v839
    %v842 = vld [vmem:[#allocation3 + $0x9] sm:$0x1]
    %843 = vst.msk [vmem:[#allocation4 + $0x9] sm:$0x1] %vm111, %v842
    %v844 = vld [vmem:[#allocation3 + $0xa] sm:$0x1]
    %v847 = vunpack.c.l.s4 1983009808
    %v848 = vunpack.c.0.s8 %v847
    %v849 = vlaneseq
    %v850 = vshrl.u32 %v849, 7
    %v851 = vsub.s32 %v848, %v850
    %v852 = vrot.slane %v844, %v851
    %853 = vrot.lane.b32.xlu0 %v852, 64
    %v854 = vpop.permute.xlu0 %853
    %856 = vst.msk [vmem:[#allocation4 + $0xb] sm:$0x1] %vm83, %v854
    %v857 = vld [vmem:[#allocation3 + $0xb] sm:$0x1]
    %858 = vst.msk [vmem:[#allocation4 + $0xb] sm:$0x1] %vm111, %v857
    %v859 = vld [vmem:[#allocation3 + $0xc] sm:$0x1]
    %v862 = vunpack.c.l.s4 1983009808
    %v863 = vunpack.c.0.s8 %v862
    %v864 = vlaneseq
    %v865 = vshrl.u32 %v864, 7
    %v866 = vsub.s32 %v863, %v865
    %v867 = vrot.slane %v859, %v866
    %868 = vrot.lane.b32.xlu0 %v867, 64
    %v869 = vpop.permute.xlu0 %868
    %871 = vst.msk [vmem:[#allocation4 + $0xd] sm:$0x1] %vm83, %v869
    %v872 = vld [vmem:[#allocation3 + $0xd] sm:$0x1]
    %873 = vst.msk [vmem:[#allocation4 + $0xd] sm:$0x1] %vm111, %v872
    %v874 = vld [vmem:[#allocation3 + $0xe] sm:$0x1]
    %v877 = vunpack.c.l.s4 1983009808
    %v878 = vunpack.c.0.s8 %v877
    %v879 = vlaneseq
    %v880 = vshrl.u32 %v879, 7
    %v881 = vsub.s32 %v878, %v880
    %v882 = vrot.slane %v874, %v881
    %883 = vrot.lane.b32.xlu0 %v882, 64
    %v884 = vpop.permute.xlu0 %883
    %886 = vst.msk [vmem:[#allocation4 + $0xf] sm:$0x1] %vm83, %v884
    %v887 = vld [vmem:[#allocation3 + $0xf] sm:$0x1]
    %888 = vst.msk [vmem:[#allocation4 + $0xf] sm:$0x1] %vm111, %v887
    %v889 = vld [vmem:[#allocation3 + $0x10] sm:$0x1]
    %v892 = vunpack.c.l.s4 1983009808
    %v893 = vunpack.c.0.s8 %v892
    %v894 = vlaneseq
    %v895 = vshrl.u32 %v894, 7
    %v896 = vsub.s32 %v893, %v895
    %v897 = vrot.slane %v889, %v896
    %898 = vrot.lane.b32.xlu0 %v897, 64
    %v899 = vpop.permute.xlu0 %898
    %901 = vst.msk [vmem:[#allocation4 + $0x11] sm:$0x1] %vm83, %v899
    %v902 = vld [vmem:[#allocation3 + $0x11] sm:$0x1]
    %903 = vst.msk [vmem:[#allocation4 + $0x11] sm:$0x1] %vm111, %v902
    %v904 = vld [vmem:[#allocation3 + $0x12] sm:$0x1]
    %v907 = vunpack.c.l.s4 1983009808
    %v908 = vunpack.c.0.s8 %v907
    %v909 = vlaneseq
    %v910 = vshrl.u32 %v909, 7
    %v911 = vsub.s32 %v908, %v910
    %v912 = vrot.slane %v904, %v911
    %913 = vrot.lane.b32.xlu0 %v912, 64
    %v914 = vpop.permute.xlu0 %913
    %916 = vst.msk [vmem:[#allocation4 + $0x13] sm:$0x1] %vm83, %v914
    %v917 = vld [vmem:[#allocation3 + $0x13] sm:$0x1]
    %918 = vst.msk [vmem:[#allocation4 + $0x13] sm:$0x1] %vm111, %v917
    %v919 = vld [vmem:[#allocation3 + $0x14] sm:$0x1]
    %v922 = vunpack.c.l.s4 1983009808
    %v923 = vunpack.c.0.s8 %v922
    %v924 = vlaneseq
    %v925 = vshrl.u32 %v924, 7
    %v926 = vsub.s32 %v923, %v925
    %v927 = vrot.slane %v919, %v926
    %928 = vrot.lane.b32.xlu0 %v927, 64
    %v929 = vpop.permute.xlu0 %928
    %931 = vst.msk [vmem:[#allocation4 + $0x15] sm:$0x1] %vm83, %v929
    %v932 = vld [vmem:[#allocation3 + $0x15] sm:$0x1]
    %933 = vst.msk [vmem:[#allocation4 + $0x15] sm:$0x1] %vm111, %v932
    %v934 = vld [vmem:[#allocation3 + $0x16] sm:$0x1]
    %v937 = vunpack.c.l.s4 1983009808
    %v938 = vunpack.c.0.s8 %v937
    %v939 = vlaneseq
    %v940 = vshrl.u32 %v939, 7
    %v941 = vsub.s32 %v938, %v940
    %v942 = vrot.slane %v934, %v941
    %943 = vrot.lane.b32.xlu0 %v942, 64
    %v944 = vpop.permute.xlu0 %943
    %946 = vst.msk [vmem:[#allocation4 + $0x17] sm:$0x1] %vm83, %v944
    %v947 = vld [vmem:[#allocation3 + $0x17] sm:$0x1]
    %948 = vst.msk [vmem:[#allocation4 + $0x17] sm:$0x1] %vm111, %v947
    %v949 = vld [vmem:[#allocation3 + $0x18] sm:$0x1]
    %v952 = vunpack.c.l.s4 1983009808
    %v953 = vunpack.c.0.s8 %v952
    %v954 = vlaneseq
    %v955 = vshrl.u32 %v954, 7
    %v956 = vsub.s32 %v953, %v955
    %v957 = vrot.slane %v949, %v956
    %958 = vrot.lane.b32.xlu0 %v957, 64
    %v959 = vpop.permute.xlu0 %958
    %961 = vst.msk [vmem:[#allocation4 + $0x19] sm:$0x1] %vm83, %v959
    %v962 = vld [vmem:[#allocation3 + $0x19] sm:$0x1]
    %963 = vst.msk [vmem:[#allocation4 + $0x19] sm:$0x1] %vm111, %v962
    %v964 = vld [vmem:[#allocation3 + $0x1a] sm:$0x1]
    %v967 = vunpack.c.l.s4 1983009808
    %v968 = vunpack.c.0.s8 %v967
    %v969 = vlaneseq
    %v970 = vshrl.u32 %v969, 7
    %v971 = vsub.s32 %v968, %v970
    %v972 = vrot.slane %v964, %v971
    %973 = vrot.lane.b32.xlu0 %v972, 64
    %v974 = vpop.permute.xlu0 %973
    %976 = vst.msk [vmem:[#allocation4 + $0x1b] sm:$0x1] %vm83, %v974
    %v977 = vld [vmem:[#allocation3 + $0x1b] sm:$0x1]
    %978 = vst.msk [vmem:[#allocation4 + $0x1b] sm:$0x1] %vm111, %v977
    %v979 = vld [vmem:[#allocation3 + $0x1c] sm:$0x1]
    %v982 = vunpack.c.l.s4 1983009808
    %v983 = vunpack.c.0.s8 %v982
    %v984 = vlaneseq
    %v985 = vshrl.u32 %v984, 7
    %v986 = vsub.s32 %v983, %v985
    %v987 = vrot.slane %v979, %v986
    %988 = vrot.lane.b32.xlu0 %v987, 64
    %v989 = vpop.permute.xlu0 %988
    %991 = vst.msk [vmem:[#allocation4 + $0x1d] sm:$0x1] %vm83, %v989
    %v992 = vld [vmem:[#allocation3 + $0x1d] sm:$0x1]
    %993 = vst.msk [vmem:[#allocation4 + $0x1d] sm:$0x1] %vm111, %v992
    %v994 = vld [vmem:[#allocation3 + $0x1e] sm:$0x1]
    %v997 = vunpack.c.l.s4 1983009808
    %v998 = vunpack.c.0.s8 %v997
    %v999 = vlaneseq
    %v1000 = vshrl.u32 %v999, 7
    %v1001 = vsub.s32 %v998, %v1000
    %v1002 = vrot.slane %v994, %v1001
    %1003 = vrot.lane.b32.xlu0 %v1002, 64
    %v1004 = vpop.permute.xlu0 %1003
    %1006 = vst.msk [vmem:[#allocation4 + $0x1f] sm:$0x1] %vm83, %v1004
    %v1007 = vld [vmem:[#allocation3 + $0x1f] sm:$0x1]
    %1008 = vst.msk [vmem:[#allocation4 + $0x1f] sm:$0x1] %vm111, %v1007
    %v1009 = vld [vmem:[#allocation3 + $0x20] sm:$0x1]
    %v1012 = vunpack.c.l.s4 1983009808
    %v1013 = vunpack.c.0.s8 %v1012
    %v1014 = vlaneseq
    %v1015 = vshrl.u32 %v1014, 7
    %v1016 = vsub.s32 %v1013, %v1015
    %v1017 = vrot.slane %v1009, %v1016
    %1018 = vrot.lane.b32.xlu0 %v1017, 64
    %v1019 = vpop.permute.xlu0 %1018
    %1021 = vst.msk [vmem:[#allocation4 + $0x21] sm:$0x1] %vm83, %v1019
    %v1022 = vld [vmem:[#allocation3 + $0x21] sm:$0x1]
    %1023 = vst.msk [vmem:[#allocation4 + $0x21] sm:$0x1] %vm111, %v1022
    %v1024 = vld [vmem:[#allocation3 + $0x22] sm:$0x1]
    %v1027 = vunpack.c.l.s4 1983009808
    %v1028 = vunpack.c.0.s8 %v1027
    %v1029 = vlaneseq
    %v1030 = vshrl.u32 %v1029, 7
    %v1031 = vsub.s32 %v1028, %v1030
    %v1032 = vrot.slane %v1024, %v1031
    %1033 = vrot.lane.b32.xlu0 %v1032, 64
    %v1034 = vpop.permute.xlu0 %1033
    %1036 = vst.msk [vmem:[#allocation4 + $0x23] sm:$0x1] %vm83, %v1034
    %v1037 = vld [vmem:[#allocation3 + $0x23] sm:$0x1]
    %1038 = vst.msk [vmem:[#allocation4 + $0x23] sm:$0x1] %vm111, %v1037
    %v1039 = vld [vmem:[#allocation3 + $0x24] sm:$0x1]
    %v1042 = vunpack.c.l.s4 1983009808
    %v1043 = vunpack.c.0.s8 %v1042
    %v1044 = vlaneseq
    %v1045 = vshrl.u32 %v1044, 7
    %v1046 = vsub.s32 %v1043, %v1045
    %v1047 = vrot.slane %v1039, %v1046
    %1048 = vrot.lane.b32.xlu0 %v1047, 64
    %v1049 = vpop.permute.xlu0 %1048
    %1051 = vst.msk [vmem:[#allocation4 + $0x25] sm:$0x1] %vm83, %v1049
    %v1052 = vld [vmem:[#allocation3 + $0x25] sm:$0x1]
    %1053 = vst.msk [vmem:[#allocation4 + $0x25] sm:$0x1] %vm111, %v1052
    %v1054 = vld [vmem:[#allocation3 + $0x26] sm:$0x1]
    %v1057 = vunpack.c.l.s4 1983009808
    %v1058 = vunpack.c.0.s8 %v1057
    %v1059 = vlaneseq
    %v1060 = vshrl.u32 %v1059, 7
    %v1061 = vsub.s32 %v1058, %v1060
    %v1062 = vrot.slane %v1054, %v1061
    %1063 = vrot.lane.b32.xlu0 %v1062, 64
    %v1064 = vpop.permute.xlu0 %1063
    %1066 = vst.msk [vmem:[#allocation4 + $0x27] sm:$0x1] %vm83, %v1064
    %v1067 = vld [vmem:[#allocation3 + $0x27] sm:$0x1]
    %1068 = vst.msk [vmem:[#allocation4 + $0x27] sm:$0x1] %vm111, %v1067
    %v1069 = vld [vmem:[#allocation3 + $0x28] sm:$0x1]
    %v1072 = vunpack.c.l.s4 1983009808
    %v1073 = vunpack.c.0.s8 %v1072
    %v1074 = vlaneseq
    %v1075 = vshrl.u32 %v1074, 7
    %v1076 = vsub.s32 %v1073, %v1075
    %v1077 = vrot.slane %v1069, %v1076
    %1078 = vrot.lane.b32.xlu0 %v1077, 64
    %v1079 = vpop.permute.xlu0 %1078
    %1081 = vst.msk [vmem:[#allocation4 + $0x29] sm:$0x1] %vm83, %v1079
    %v1082 = vld [vmem:[#allocation3 + $0x29] sm:$0x1]
    %1083 = vst.msk [vmem:[#allocation4 + $0x29] sm:$0x1] %vm111, %v1082
    %v1084 = vld [vmem:[#allocation3 + $0x2a] sm:$0x1]
    %v1087 = vunpack.c.l.s4 1983009808
    %v1088 = vunpack.c.0.s8 %v1087
    %v1089 = vlaneseq
    %v1090 = vshrl.u32 %v1089, 7
    %v1091 = vsub.s32 %v1088, %v1090
    %v1092 = vrot.slane %v1084, %v1091
    %1093 = vrot.lane.b32.xlu0 %v1092, 64
    %v1094 = vpop.permute.xlu0 %1093
    %1096 = vst.msk [vmem:[#allocation4 + $0x2b] sm:$0x1] %vm83, %v1094
    %v1097 = vld [vmem:[#allocation3 + $0x2b] sm:$0x1]
    %1098 = vst.msk [vmem:[#allocation4 + $0x2b] sm:$0x1] %vm111, %v1097
    %v1099 = vld [vmem:[#allocation3 + $0x2c] sm:$0x1]
    %v1102 = vunpack.c.l.s4 1983009808
    %v1103 = vunpack.c.0.s8 %v1102
    %v1104 = vlaneseq
    %v1105 = vshrl.u32 %v1104, 7
    %v1106 = vsub.s32 %v1103, %v1105
    %v1107 = vrot.slane %v1099, %v1106
    %1108 = vrot.lane.b32.xlu0 %v1107, 64
    %v1109 = vpop.permute.xlu0 %1108
    %1111 = vst.msk [vmem:[#allocation4 + $0x2d] sm:$0x1] %vm83, %v1109
    %v1112 = vld [vmem:[#allocation3 + $0x2d] sm:$0x1]
    %1113 = vst.msk [vmem:[#allocation4 + $0x2d] sm:$0x1] %vm111, %v1112
    %v1114 = vld [vmem:[#allocation3 + $0x2e] sm:$0x1]
    %v1117 = vunpack.c.l.s4 1983009808
    %v1118 = vunpack.c.0.s8 %v1117
    %v1119 = vlaneseq
    %v1120 = vshrl.u32 %v1119, 7
    %v1121 = vsub.s32 %v1118, %v1120
    %v1122 = vrot.slane %v1114, %v1121
    %1123 = vrot.lane.b32.xlu0 %v1122, 64
    %v1124 = vpop.permute.xlu0 %1123
    %1126 = vst.msk [vmem:[#allocation4 + $0x2f] sm:$0x1] %vm83, %v1124
    %v1127 = vld [vmem:[#allocation3 + $0x2f] sm:$0x1]
    %1128 = vst.msk [vmem:[#allocation4 + $0x2f] sm:$0x1] %vm111, %v1127
    %v1129 = vld [vmem:[#allocation3 + $0x30] sm:$0x1]
    %v1132 = vunpack.c.l.s4 1983009808
    %v1133 = vunpack.c.0.s8 %v1132
    %v1134 = vlaneseq
    %v1135 = vshrl.u32 %v1134, 7
    %v1136 = vsub.s32 %v1133, %v1135
    %v1137 = vrot.slane %v1129, %v1136
    %1138 = vrot.lane.b32.xlu0 %v1137, 64
    %v1139 = vpop.permute.xlu0 %1138
    %1141 = vst.msk [vmem:[#allocation4 + $0x31] sm:$0x1] %vm83, %v1139
    %v1142 = vld [vmem:[#allocation3 + $0x31] sm:$0x1]
    %1143 = vst.msk [vmem:[#allocation4 + $0x31] sm:$0x1] %vm111, %v1142
    %v1144 = vld [vmem:[#allocation3 + $0x32] sm:$0x1]
    %v1147 = vunpack.c.l.s4 1983009808
    %v1148 = vunpack.c.0.s8 %v1147
    %v1149 = vlaneseq
    %v1150 = vshrl.u32 %v1149, 7
    %v1151 = vsub.s32 %v1148, %v1150
    %v1152 = vrot.slane %v1144, %v1151
    %1153 = vrot.lane.b32.xlu0 %v1152, 64
    %v1154 = vpop.permute.xlu0 %1153
    %1156 = vst.msk [vmem:[#allocation4 + $0x33] sm:$0x1] %vm83, %v1154
    %v1157 = vld [vmem:[#allocation3 + $0x33] sm:$0x1]
    %1158 = vst.msk [vmem:[#allocation4 + $0x33] sm:$0x1] %vm111, %v1157
    %v1159 = vld [vmem:[#allocation3 + $0x34] sm:$0x1]
    %v1162 = vunpack.c.l.s4 1983009808
    %v1163 = vunpack.c.0.s8 %v1162
    %v1164 = vlaneseq
    %v1165 = vshrl.u32 %v1164, 7
    %v1166 = vsub.s32 %v1163, %v1165
    %v1167 = vrot.slane %v1159, %v1166
    %1168 = vrot.lane.b32.xlu0 %v1167, 64
    %v1169 = vpop.permute.xlu0 %1168
    %1171 = vst.msk [vmem:[#allocation4 + $0x35] sm:$0x1] %vm83, %v1169
    %v1172 = vld [vmem:[#allocation3 + $0x35] sm:$0x1]
    %1173 = vst.msk [vmem:[#allocation4 + $0x35] sm:$0x1] %vm111, %v1172
    %v1174 = vld [vmem:[#allocation3 + $0x36] sm:$0x1]
    %v1177 = vunpack.c.l.s4 1983009808
    %v1178 = vunpack.c.0.s8 %v1177
    %v1179 = vlaneseq
    %v1180 = vshrl.u32 %v1179, 7
    %v1181 = vsub.s32 %v1178, %v1180
    %v1182 = vrot.slane %v1174, %v1181
    %1183 = vrot.lane.b32.xlu0 %v1182, 64
    %v1184 = vpop.permute.xlu0 %1183
    %1186 = vst.msk [vmem:[#allocation4 + $0x37] sm:$0x1] %vm83, %v1184
    %v1187 = vld [vmem:[#allocation3 + $0x37] sm:$0x1]
    %1188 = vst.msk [vmem:[#allocation4 + $0x37] sm:$0x1] %vm111, %v1187
    %v1189 = vld [vmem:[#allocation3 + $0x38] sm:$0x1]
    %v1192 = vunpack.c.l.s4 1983009808
    %v1193 = vunpack.c.0.s8 %v1192
    %v1194 = vlaneseq
    %v1195 = vshrl.u32 %v1194, 7
    %v1196 = vsub.s32 %v1193, %v1195
    %v1197 = vrot.slane %v1189, %v1196
    %1198 = vrot.lane.b32.xlu0 %v1197, 64
    %v1199 = vpop.permute.xlu0 %1198
    %1201 = vst.msk [vmem:[#allocation4 + $0x39] sm:$0x1] %vm83, %v1199
    %v1202 = vld [vmem:[#allocation3 + $0x39] sm:$0x1]
    %1203 = vst.msk [vmem:[#allocation4 + $0x39] sm:$0x1] %vm111, %v1202
    %v1204 = vld [vmem:[#allocation3 + $0x3a] sm:$0x1]
    %v1207 = vunpack.c.l.s4 1983009808
    %v1208 = vunpack.c.0.s8 %v1207
    %v1209 = vlaneseq
    %v1210 = vshrl.u32 %v1209, 7
    %v1211 = vsub.s32 %v1208, %v1210
    %v1212 = vrot.slane %v1204, %v1211
    %1213 = vrot.lane.b32.xlu0 %v1212, 64
    %v1214 = vpop.permute.xlu0 %1213
    %1216 = vst.msk [vmem:[#allocation4 + $0x3b] sm:$0x1] %vm83, %v1214
    %v1217 = vld [vmem:[#allocation3 + $0x3b] sm:$0x1]
    %1218 = vst.msk [vmem:[#allocation4 + $0x3b] sm:$0x1] %vm111, %v1217
    %v1219 = vld [vmem:[#allocation3 + $0x3c] sm:$0x1]
    %v1222 = vunpack.c.l.s4 1983009808
    %v1223 = vunpack.c.0.s8 %v1222
    %v1224 = vlaneseq
    %v1225 = vshrl.u32 %v1224, 7
    %v1226 = vsub.s32 %v1223, %v1225
    %v1227 = vrot.slane %v1219, %v1226
    %1228 = vrot.lane.b32.xlu0 %v1227, 64
    %v1229 = vpop.permute.xlu0 %1228
    %1231 = vst.msk [vmem:[#allocation4 + $0x3d] sm:$0x1] %vm83, %v1229
    %v1232 = vld [vmem:[#allocation3 + $0x3d] sm:$0x1]
    %1233 = vst.msk [vmem:[#allocation4 + $0x3d] sm:$0x1] %vm111, %v1232
    %v1234 = vld [vmem:[#allocation3 + $0x3e] sm:$0x1]
    %v1237 = vunpack.c.l.s4 1983009808
    %v1238 = vunpack.c.0.s8 %v1237
    %v1239 = vlaneseq
    %v1240 = vshrl.u32 %v1239, 7
    %v1241 = vsub.s32 %v1238, %v1240
    %v1242 = vrot.slane %v1234, %v1241
    %1243 = vrot.lane.b32.xlu0 %v1242, 64
    %v1244 = vpop.permute.xlu0 %1243
    %1246 = vst.msk [vmem:[#allocation4 + $0x3f] sm:$0x1] %vm83, %v1244
    %v1247 = vld [vmem:[#allocation3 + $0x3f] sm:$0x1]
    %1248 = vst.msk [vmem:[#allocation4 + $0x3f] sm:$0x1] %vm111, %v1247
    %v1249 = vld [vmem:[#allocation4] sm:$0xff]
    %v1250 = vld [vmem:[#allocation4 + $0x8] sm:$0xff]
    %v1251 = vld [vmem:[#allocation4 + $0x10] sm:$0xff]
    %v1252 = vld [vmem:[#allocation4 + $0x18] sm:$0xff]
    %v1253 = vld [vmem:[#allocation4 + $0x20] sm:$0xff]
    %v1254 = vld [vmem:[#allocation4 + $0x28] sm:$0xff]
    %v1255 = vld [vmem:[#allocation4 + $0x30] sm:$0xff]
    %v1256 = vld [vmem:[#allocation4 + $0x38] sm:$0xff]
    %v1265 = vcombine.high %v1249, %v1249
    %v1267 = vunpack.c.l.s4 1983009808
    %v1268 = vunpack.c.0.s8 %v1267
    %v1269 = vlaneseq
    %v1270 = vshrl.u32 %v1269, 7
    %v1271 = vsub.s32 %v1268, %v1270
    %v1272 = vrot.slane %v1249, %v1271
    %v1274 = vunpack.c.l.s4 1983009808
    %v1275 = vunpack.c.0.s8 %v1274
    %v1276 = vlaneseq
    %v1277 = vshrl.u32 %v1276, 7
    %v1278 = vsub.s32 %v1275, %v1277
    %v1279 = vrot.slane %v1265, %v1278
    %v1280 = vcombine.high %v1272, %v1272
    %v1281 = vcombine.high %v1279, %v1279
    %v1282 = vcombine.high %v1250, %v1250
    %v1284 = vunpack.c.l.s4 1983009808
    %v1285 = vunpack.c.0.s8 %v1284
    %v1286 = vlaneseq
    %v1287 = vshrl.u32 %v1286, 7
    %v1288 = vsub.s32 %v1285, %v1287
    %v1289 = vrot.slane %v1250, %v1288
    %v1291 = vunpack.c.l.s4 1983009808
    %v1292 = vunpack.c.0.s8 %v1291
    %v1293 = vlaneseq
    %v1294 = vshrl.u32 %v1293, 7
    %v1295 = vsub.s32 %v1292, %v1294
    %v1296 = vrot.slane %v1282, %v1295
    %v1297 = vcombine.high %v1289, %v1289
    %v1298 = vcombine.high %v1296, %v1296
    %v1299 = vcombine.high %v1251, %v1251
    %v1301 = vunpack.c.l.s4 1983009808
    %v1302 = vunpack.c.0.s8 %v1301
    %v1303 = vlaneseq
    %v1304 = vshrl.u32 %v1303, 7
    %v1305 = vsub.s32 %v1302, %v1304
    %v1306 = vrot.slane %v1251, %v1305
    %v1308 = vunpack.c.l.s4 1983009808
    %v1309 = vunpack.c.0.s8 %v1308
    %v1310 = vlaneseq
    %v1311 = vshrl.u32 %v1310, 7
    %v1312 = vsub.s32 %v1309, %v1311
    %v1313 = vrot.slane %v1299, %v1312
    %v1314 = vcombine.high %v1306, %v1306
    %v1315 = vcombine.high %v1313, %v1313
    %v1316 = vcombine.high %v1252, %v1252
    %v1318 = vunpack.c.l.s4 1983009808
    %v1319 = vunpack.c.0.s8 %v1318
    %v1320 = vlaneseq
    %v1321 = vshrl.u32 %v1320, 7
    %v1322 = vsub.s32 %v1319, %v1321
    %v1323 = vrot.slane %v1252, %v1322
    %v1325 = vunpack.c.l.s4 1983009808
    %v1326 = vunpack.c.0.s8 %v1325
    %v1327 = vlaneseq
    %v1328 = vshrl.u32 %v1327, 7
    %v1329 = vsub.s32 %v1326, %v1328
    %v1330 = vrot.slane %v1316, %v1329
    %v1331 = vcombine.high %v1323, %v1323
    %v1332 = vcombine.high %v1330, %v1330
    %v1333 = vcombine.high %v1253, %v1253
    %v1335 = vunpack.c.l.s4 1983009808
    %v1336 = vunpack.c.0.s8 %v1335
    %v1337 = vlaneseq
    %v1338 = vshrl.u32 %v1337, 7
    %v1339 = vsub.s32 %v1336, %v1338
    %v1340 = vrot.slane %v1253, %v1339
    %v1342 = vunpack.c.l.s4 1983009808
    %v1343 = vunpack.c.0.s8 %v1342
    %v1344 = vlaneseq
    %v1345 = vshrl.u32 %v1344, 7
    %v1346 = vsub.s32 %v1343, %v1345
    %v1347 = vrot.slane %v1333, %v1346
    %v1348 = vcombine.high %v1340, %v1340
    %v1349 = vcombine.high %v1347, %v1347
    %v1350 = vcombine.high %v1254, %v1254
    %v1352 = vunpack.c.l.s4 1983009808
    %v1353 = vunpack.c.0.s8 %v1352
    %v1354 = vlaneseq
    %v1355 = vshrl.u32 %v1354, 7
    %v1356 = vsub.s32 %v1353, %v1355
    %v1357 = vrot.slane %v1254, %v1356
    %v1359 = vunpack.c.l.s4 1983009808
    %v1360 = vunpack.c.0.s8 %v1359
    %v1361 = vlaneseq
    %v1362 = vshrl.u32 %v1361, 7
    %v1363 = vsub.s32 %v1360, %v1362
    %v1364 = vrot.slane %v1350, %v1363
    %v1365 = vcombine.high %v1357, %v1357
    %v1366 = vcombine.high %v1364, %v1364
    %v1367 = vcombine.high %v1255, %v1255
    %v1369 = vunpack.c.l.s4 1983009808
    %v1370 = vunpack.c.0.s8 %v1369
    %v1371 = vlaneseq
    %v1372 = vshrl.u32 %v1371, 7
    %v1373 = vsub.s32 %v1370, %v1372
    %v1374 = vrot.slane %v1255, %v1373
    %v1376 = vunpack.c.l.s4 1983009808
    %v1377 = vunpack.c.0.s8 %v1376
    %v1378 = vlaneseq
    %v1379 = vshrl.u32 %v1378, 7
    %v1380 = vsub.s32 %v1377, %v1379
    %v1381 = vrot.slane %v1367, %v1380
    %v1382 = vcombine.high %v1374, %v1374
    %v1383 = vcombine.high %v1381, %v1381
    %v1384 = vcombine.high %v1256, %v1256
    %v1386 = vunpack.c.l.s4 1983009808
    %v1387 = vunpack.c.0.s8 %v1386
    %v1388 = vlaneseq
    %v1389 = vshrl.u32 %v1388, 7
    %v1390 = vsub.s32 %v1387, %v1389
    %v1391 = vrot.slane %v1256, %v1390
    %v1393 = vunpack.c.l.s4 1983009808
    %v1394 = vunpack.c.0.s8 %v1393
    %v1395 = vlaneseq
    %v1396 = vshrl.u32 %v1395, 7
    %v1397 = vsub.s32 %v1394, %v1396
    %v1398 = vrot.slane %v1384, %v1397
    %v1399 = vcombine.high %v1391, %v1391
    %v1400 = vcombine.high %v1398, %v1398
    %v1433 = vpack.c.bf16 %v1272, %v1272
    %v1434 = vpack.c.bf16 %v1280, %v1280
    %v1435 = vpack.c.bf16 %v1279, %v1279
    %v1436 = vpack.c.bf16 %v1281, %v1281
    %v1437 = vpack.c.bf16 %v1289, %v1289
    %v1438 = vpack.c.bf16 %v1297, %v1297
    %v1439 = vpack.c.bf16 %v1296, %v1296
    %v1440 = vpack.c.bf16 %v1298, %v1298
    %v1441 = vpack.c.bf16 %v1306, %v1306
    %v1442 = vpack.c.bf16 %v1314, %v1314
    %v1443 = vpack.c.bf16 %v1313, %v1313
    %v1444 = vpack.c.bf16 %v1315, %v1315
    %v1445 = vpack.c.bf16 %v1323, %v1323
    %v1446 = vpack.c.bf16 %v1331, %v1331
    %v1447 = vpack.c.bf16 %v1330, %v1330
    %v1448 = vpack.c.bf16 %v1332, %v1332
    %v1449 = vpack.c.bf16 %v1340, %v1340
    %v1450 = vpack.c.bf16 %v1348, %v1348
    %v1451 = vpack.c.bf16 %v1347, %v1347
    %v1452 = vpack.c.bf16 %v1349, %v1349
    %v1453 = vpack.c.bf16 %v1357, %v1357
    %v1454 = vpack.c.bf16 %v1365, %v1365
    %v1455 = vpack.c.bf16 %v1364, %v1364
    %v1456 = vpack.c.bf16 %v1366, %v1366
    %v1457 = vpack.c.bf16 %v1374, %v1374
    %v1458 = vpack.c.bf16 %v1382, %v1382
    %v1459 = vpack.c.bf16 %v1381, %v1381
    %v1460 = vpack.c.bf16 %v1383, %v1383
    %v1461 = vpack.c.bf16 %v1391, %v1391
    %v1462 = vpack.c.bf16 %v1399, %v1399
    %v1463 = vpack.c.bf16 %v1398, %v1398
    %v1464 = vpack.c.bf16 %v1400, %v1400
    %v1465 = vld [vmem:[#allocation10] sm:$0xf]
    %v1466 = vld [vmem:[#allocation10 + $0x4] sm:$0xf]
    %v1467 = vld [vmem:[#allocation10 + $0x8] sm:$0xf]
    %v1468 = vld [vmem:[#allocation10 + $0xc] sm:$0xf]
    %v1469 = vld [vmem:[#allocation10 + $0x10] sm:$0xf]
    %v1470 = vld [vmem:[#allocation10 + $0x14] sm:$0xf]
    %v1471 = vld [vmem:[#allocation10 + $0x18] sm:$0xf]
    %v1472 = vld [vmem:[#allocation10 + $0x1c] sm:$0xf]
    %v1473 = vld [vmem:[#allocation10 + $0x20] sm:$0xf]
    %v1474 = vld [vmem:[#allocation10 + $0x24] sm:$0xf]
    %v1475 = vld [vmem:[#allocation10 + $0x28] sm:$0xf]
    %v1476 = vld [vmem:[#allocation10 + $0x2c] sm:$0xf]
    %v1477 = vld [vmem:[#allocation10 + $0x30] sm:$0xf]
    %v1478 = vld [vmem:[#allocation10 + $0x34] sm:$0xf]
    %v1479 = vld [vmem:[#allocation10 + $0x38] sm:$0xf]
    %v1480 = vld [vmem:[#allocation10 + $0x3c] sm:$0xf]
    %v1481 = vld [vmem:[#allocation10 + $0x40] sm:$0xf]
    %v1482 = vld [vmem:[#allocation10 + $0x44] sm:$0xf]
    %v1483 = vld [vmem:[#allocation10 + $0x48] sm:$0xf]
    %v1484 = vld [vmem:[#allocation10 + $0x4c] sm:$0xf]
    %v1485 = vld [vmem:[#allocation10 + $0x50] sm:$0xf]
    %v1486 = vld [vmem:[#allocation10 + $0x54] sm:$0xf]
    %v1487 = vld [vmem:[#allocation10 + $0x58] sm:$0xf]
    %v1488 = vld [vmem:[#allocation10 + $0x5c] sm:$0xf]
    %v1489 = vld [vmem:[#allocation10 + $0x60] sm:$0xf]
    %v1490 = vld [vmem:[#allocation10 + $0x64] sm:$0xf]
    %v1491 = vld [vmem:[#allocation10 + $0x68] sm:$0xf]
    %v1492 = vld [vmem:[#allocation10 + $0x6c] sm:$0xf]
    %v1493 = vld [vmem:[#allocation10 + $0x70] sm:$0xf]
    %v1494 = vld [vmem:[#allocation10 + $0x74] sm:$0xf]
    %v1495 = vld [vmem:[#allocation10 + $0x78] sm:$0xf]
    %v1496 = vld [vmem:[#allocation10 + $0x7c] sm:$0xf]
    %v1497 = vld [vmem:[#allocation10 + $0x80] sm:$0xf]
    %v1498 = vld [vmem:[#allocation10 + $0x84] sm:$0xf]
    %v1499 = vld [vmem:[#allocation10 + $0x88] sm:$0xf]
    %v1500 = vld [vmem:[#allocation10 + $0x8c] sm:$0xf]
    %v1501 = vld [vmem:[#allocation10 + $0x90] sm:$0xf]
    %v1502 = vld [vmem:[#allocation10 + $0x94] sm:$0xf]
    %v1503 = vld [vmem:[#allocation10 + $0x98] sm:$0xf]
    %v1504 = vld [vmem:[#allocation10 + $0x9c] sm:$0xf]
    %v1505 = vld [vmem:[#allocation10 + $0xa0] sm:$0xf]
    %v1506 = vld [vmem:[#allocation10 + $0xa4] sm:$0xf]
    %v1507 = vld [vmem:[#allocation10 + $0xa8] sm:$0xf]
    %v1508 = vld [vmem:[#allocation10 + $0xac] sm:$0xf]
    %v1509 = vld [vmem:[#allocation10 + $0xb0] sm:$0xf]
    %v1510 = vld [vmem:[#allocation10 + $0xb4] sm:$0xf]
    %v1511 = vld [vmem:[#allocation10 + $0xb8] sm:$0xf]
    %v1512 = vld [vmem:[#allocation10 + $0xbc] sm:$0xf]
    %v1513 = vld [vmem:[#allocation10 + $0xc0] sm:$0xf]
    %v1514 = vld [vmem:[#allocation10 + $0xc4] sm:$0xf]
    %v1515 = vld [vmem:[#allocation10 + $0xc8] sm:$0xf]
    %v1516 = vld [vmem:[#allocation10 + $0xcc] sm:$0xf]
    %v1517 = vld [vmem:[#allocation10 + $0xd0] sm:$0xf]
    %v1518 = vld [vmem:[#allocation10 + $0xd4] sm:$0xf]
    %v1519 = vld [vmem:[#allocation10 + $0xd8] sm:$0xf]
    %v1520 = vld [vmem:[#allocation10 + $0xdc] sm:$0xf]
    %v1521 = vld [vmem:[#allocation10 + $0xe0] sm:$0xf]
    %v1522 = vld [vmem:[#allocation10 + $0xe4] sm:$0xf]
    %v1523 = vld [vmem:[#allocation10 + $0xe8] sm:$0xf]
    %v1524 = vld [vmem:[#allocation10 + $0xec] sm:$0xf]
    %v1525 = vld [vmem:[#allocation10 + $0xf0] sm:$0xf]
    %v1526 = vld [vmem:[#allocation10 + $0xf4] sm:$0xf]
    %v1527 = vld [vmem:[#allocation10 + $0xf8] sm:$0xf]
    %v1528 = vld [vmem:[#allocation10 + $0xfc] sm:$0xf]
    %v1529 = vld [vmem:[#allocation10 + $0x100] sm:$0xf]
    %v1530 = vld [vmem:[#allocation10 + $0x104] sm:$0xf]
    %v1531 = vld [vmem:[#allocation10 + $0x108] sm:$0xf]
    %v1532 = vld [vmem:[#allocation10 + $0x10c] sm:$0xf]
    %v1533 = vld [vmem:[#allocation10 + $0x110] sm:$0xf]
    %v1534 = vld [vmem:[#allocation10 + $0x114] sm:$0xf]
    %v1535 = vld [vmem:[#allocation10 + $0x118] sm:$0xf]
    %v1536 = vld [vmem:[#allocation10 + $0x11c] sm:$0xf]
    %v1537 = vld [vmem:[#allocation10 + $0x120] sm:$0xf]
    %v1538 = vld [vmem:[#allocation10 + $0x124] sm:$0xf]
    %v1539 = vld [vmem:[#allocation10 + $0x128] sm:$0xf]
    %v1540 = vld [vmem:[#allocation10 + $0x12c] sm:$0xf]
    %v1541 = vld [vmem:[#allocation10 + $0x130] sm:$0xf]
    %v1542 = vld [vmem:[#allocation10 + $0x134] sm:$0xf]
    %v1543 = vld [vmem:[#allocation10 + $0x138] sm:$0xf]
    %v1544 = vld [vmem:[#allocation10 + $0x13c] sm:$0xf]
    %v1545 = vld [vmem:[#allocation10 + $0x140] sm:$0xf]
    %v1546 = vld [vmem:[#allocation10 + $0x144] sm:$0xf]
    %v1547 = vld [vmem:[#allocation10 + $0x148] sm:$0xf]
    %v1548 = vld [vmem:[#allocation10 + $0x14c] sm:$0xf]
    %v1549 = vld [vmem:[#allocation10 + $0x150] sm:$0xf]
    %v1550 = vld [vmem:[#allocation10 + $0x154] sm:$0xf]
    %v1551 = vld [vmem:[#allocation10 + $0x158] sm:$0xf]
    %v1552 = vld [vmem:[#allocation10 + $0x15c] sm:$0xf]
    %v1553 = vld [vmem:[#allocation10 + $0x160] sm:$0xf]
    %v1554 = vld [vmem:[#allocation10 + $0x164] sm:$0xf]
    %v1555 = vld [vmem:[#allocation10 + $0x168] sm:$0xf]
    %v1556 = vld [vmem:[#allocation10 + $0x16c] sm:$0xf]
    %v1557 = vld [vmem:[#allocation10 + $0x170] sm:$0xf]
    %v1558 = vld [vmem:[#allocation10 + $0x174] sm:$0xf]
    %v1559 = vld [vmem:[#allocation10 + $0x178] sm:$0xf]
    %v1560 = vld [vmem:[#allocation10 + $0x17c] sm:$0xf]
    %v1561 = vld [vmem:[#allocation10 + $0x180] sm:$0xf]
    %v1562 = vld [vmem:[#allocation10 + $0x184] sm:$0xf]
    %v1563 = vld [vmem:[#allocation10 + $0x188] sm:$0xf]
    %v1564 = vld [vmem:[#allocation10 + $0x18c] sm:$0xf]
    %v1565 = vld [vmem:[#allocation10 + $0x190] sm:$0xf]
    %v1566 = vld [vmem:[#allocation10 + $0x194] sm:$0xf]
    %v1567 = vld [vmem:[#allocation10 + $0x198] sm:$0xf]
    %v1568 = vld [vmem:[#allocation10 + $0x19c] sm:$0xf]
    %v1569 = vld [vmem:[#allocation10 + $0x1a0] sm:$0xf]
    %v1570 = vld [vmem:[#allocation10 + $0x1a4] sm:$0xf]
    %v1571 = vld [vmem:[#allocation10 + $0x1a8] sm:$0xf]
    %v1572 = vld [vmem:[#allocation10 + $0x1ac] sm:$0xf]
    %v1573 = vld [vmem:[#allocation10 + $0x1b0] sm:$0xf]
    %v1574 = vld [vmem:[#allocation10 + $0x1b4] sm:$0xf]
    %v1575 = vld [vmem:[#allocation10 + $0x1b8] sm:$0xf]
    %v1576 = vld [vmem:[#allocation10 + $0x1bc] sm:$0xf]
    %v1577 = vld [vmem:[#allocation10 + $0x1c0] sm:$0xf]
    %v1578 = vld [vmem:[#allocation10 + $0x1c4] sm:$0xf]
    %v1579 = vld [vmem:[#allocation10 + $0x1c8] sm:$0xf]
    %v1580 = vld [vmem:[#allocation10 + $0x1cc] sm:$0xf]
    %v1581 = vld [vmem:[#allocation10 + $0x1d0] sm:$0xf]
    %v1582 = vld [vmem:[#allocation10 + $0x1d4] sm:$0xf]
    %v1583 = vld [vmem:[#allocation10 + $0x1d8] sm:$0xf]
    %v1584 = vld [vmem:[#allocation10 + $0x1dc] sm:$0xf]
    %v1585 = vld [vmem:[#allocation10 + $0x1e0] sm:$0xf]
    %v1586 = vld [vmem:[#allocation10 + $0x1e4] sm:$0xf]
    %v1587 = vld [vmem:[#allocation10 + $0x1e8] sm:$0xf]
    %v1588 = vld [vmem:[#allocation10 + $0x1ec] sm:$0xf]
    %v1589 = vld [vmem:[#allocation10 + $0x1f0] sm:$0xf]
    %v1590 = vld [vmem:[#allocation10 + $0x1f4] sm:$0xf]
    %v1591 = vld [vmem:[#allocation10 + $0x1f8] sm:$0xf]
    %v1592 = vld [vmem:[#allocation10 + $0x1fc] sm:$0xf]
    %v1593 = vld [vmem:[#allocation10 + $0x200] sm:$0xf]
    %v1594 = vld [vmem:[#allocation10 + $0x204] sm:$0xf]
    %v1595 = vld [vmem:[#allocation10 + $0x208] sm:$0xf]
    %v1596 = vld [vmem:[#allocation10 + $0x20c] sm:$0xf]
    %v1597 = vld [vmem:[#allocation10 + $0x210] sm:$0xf]
    %v1598 = vld [vmem:[#allocation10 + $0x214] sm:$0xf]
    %v1599 = vld [vmem:[#allocation10 + $0x218] sm:$0xf]
    %v1600 = vld [vmem:[#allocation10 + $0x21c] sm:$0xf]
    %v1601 = vld [vmem:[#allocation10 + $0x220] sm:$0xf]
    %v1602 = vld [vmem:[#allocation10 + $0x224] sm:$0xf]
    %v1603 = vld [vmem:[#allocation10 + $0x228] sm:$0xf]
    %v1604 = vld [vmem:[#allocation10 + $0x22c] sm:$0xf]
    %v1605 = vld [vmem:[#allocation10 + $0x230] sm:$0xf]
    %v1606 = vld [vmem:[#allocation10 + $0x234] sm:$0xf]
    %v1607 = vld [vmem:[#allocation10 + $0x238] sm:$0xf]
    %v1608 = vld [vmem:[#allocation10 + $0x23c] sm:$0xf]
    %v1609 = vld [vmem:[#allocation10 + $0x240] sm:$0xf]
    %v1610 = vld [vmem:[#allocation10 + $0x244] sm:$0xf]
    %v1611 = vld [vmem:[#allocation10 + $0x248] sm:$0xf]
    %v1612 = vld [vmem:[#allocation10 + $0x24c] sm:$0xf]
    %v1613 = vld [vmem:[#allocation10 + $0x250] sm:$0xf]
    %v1614 = vld [vmem:[#allocation10 + $0x254] sm:$0xf]
    %v1615 = vld [vmem:[#allocation10 + $0x258] sm:$0xf]
    %v1616 = vld [vmem:[#allocation10 + $0x25c] sm:$0xf]
    %v1617 = vld [vmem:[#allocation10 + $0x260] sm:$0xf]
    %v1618 = vld [vmem:[#allocation10 + $0x264] sm:$0xf]
    %v1619 = vld [vmem:[#allocation10 + $0x268] sm:$0xf]
    %v1620 = vld [vmem:[#allocation10 + $0x26c] sm:$0xf]
    %v1621 = vld [vmem:[#allocation10 + $0x270] sm:$0xf]
    %v1622 = vld [vmem:[#allocation10 + $0x274] sm:$0xf]
    %v1623 = vld [vmem:[#allocation10 + $0x278] sm:$0xf]
    %v1624 = vld [vmem:[#allocation10 + $0x27c] sm:$0xf]
    %v1625 = vld [vmem:[#allocation10 + $0x280] sm:$0xf]
    %v1626 = vld [vmem:[#allocation10 + $0x284] sm:$0xf]
    %v1627 = vld [vmem:[#allocation10 + $0x288] sm:$0xf]
    %v1628 = vld [vmem:[#allocation10 + $0x28c] sm:$0xf]
    %v1629 = vld [vmem:[#allocation10 + $0x290] sm:$0xf]
    %v1630 = vld [vmem:[#allocation10 + $0x294] sm:$0xf]
    %v1631 = vld [vmem:[#allocation10 + $0x298] sm:$0xf]
    %v1632 = vld [vmem:[#allocation10 + $0x29c] sm:$0xf]
    %v1633 = vld [vmem:[#allocation10 + $0x2a0] sm:$0xf]
    %v1634 = vld [vmem:[#allocation10 + $0x2a4] sm:$0xf]
    %v1635 = vld [vmem:[#allocation10 + $0x2a8] sm:$0xf]
    %v1636 = vld [vmem:[#allocation10 + $0x2ac] sm:$0xf]
    %v1637 = vld [vmem:[#allocation10 + $0x2b0] sm:$0xf]
    %v1638 = vld [vmem:[#allocation10 + $0x2b4] sm:$0xf]
    %v1639 = vld [vmem:[#allocation10 + $0x2b8] sm:$0xf]
    %v1640 = vld [vmem:[#allocation10 + $0x2bc] sm:$0xf]
    %v1641 = vld [vmem:[#allocation10 + $0x2c0] sm:$0xf]
    %v1642 = vld [vmem:[#allocation10 + $0x2c4] sm:$0xf]
    %v1643 = vld [vmem:[#allocation10 + $0x2c8] sm:$0xf]
    %v1644 = vld [vmem:[#allocation10 + $0x2cc] sm:$0xf]
    %v1645 = vld [vmem:[#allocation10 + $0x2d0] sm:$0xf]
    %v1646 = vld [vmem:[#allocation10 + $0x2d4] sm:$0xf]
    %v1647 = vld [vmem:[#allocation10 + $0x2d8] sm:$0xf]
    %v1648 = vld [vmem:[#allocation10 + $0x2dc] sm:$0xf]
    %v1649 = vld [vmem:[#allocation10 + $0x2e0] sm:$0xf]
    %v1650 = vld [vmem:[#allocation10 + $0x2e4] sm:$0xf]
    %v1651 = vld [vmem:[#allocation10 + $0x2e8] sm:$0xf]
    %v1652 = vld [vmem:[#allocation10 + $0x2ec] sm:$0xf]
    %v1653 = vld [vmem:[#allocation10 + $0x2f0] sm:$0xf]
    %v1654 = vld [vmem:[#allocation10 + $0x2f4] sm:$0xf]
    %v1655 = vld [vmem:[#allocation10 + $0x2f8] sm:$0xf]
    %v1656 = vld [vmem:[#allocation10 + $0x2fc] sm:$0xf]
    %v1657 = vld [vmem:[#allocation10 + $0x300] sm:$0xf]
    %v1658 = vld [vmem:[#allocation10 + $0x304] sm:$0xf]
    %v1659 = vld [vmem:[#allocation10 + $0x308] sm:$0xf]
    %v1660 = vld [vmem:[#allocation10 + $0x30c] sm:$0xf]
    %v1661 = vld [vmem:[#allocation10 + $0x310] sm:$0xf]
    %v1662 = vld [vmem:[#allocation10 + $0x314] sm:$0xf]
    %v1663 = vld [vmem:[#allocation10 + $0x318] sm:$0xf]
    %v1664 = vld [vmem:[#allocation10 + $0x31c] sm:$0xf]
    %v1665 = vld [vmem:[#allocation10 + $0x320] sm:$0xf]
    %v1666 = vld [vmem:[#allocation10 + $0x324] sm:$0xf]
    %v1667 = vld [vmem:[#allocation10 + $0x328] sm:$0xf]
    %v1668 = vld [vmem:[#allocation10 + $0x32c] sm:$0xf]
    %v1669 = vld [vmem:[#allocation10 + $0x330] sm:$0xf]
    %v1670 = vld [vmem:[#allocation10 + $0x334] sm:$0xf]
    %v1671 = vld [vmem:[#allocation10 + $0x338] sm:$0xf]
    %v1672 = vld [vmem:[#allocation10 + $0x33c] sm:$0xf]
    %v1673 = vld [vmem:[#allocation10 + $0x340] sm:$0xf]
    %v1674 = vld [vmem:[#allocation10 + $0x344] sm:$0xf]
    %v1675 = vld [vmem:[#allocation10 + $0x348] sm:$0xf]
    %v1676 = vld [vmem:[#allocation10 + $0x34c] sm:$0xf]
    %v1677 = vld [vmem:[#allocation10 + $0x350] sm:$0xf]
    %v1678 = vld [vmem:[#allocation10 + $0x354] sm:$0xf]
    %v1679 = vld [vmem:[#allocation10 + $0x358] sm:$0xf]
    %v1680 = vld [vmem:[#allocation10 + $0x35c] sm:$0xf]
    %v1681 = vld [vmem:[#allocation10 + $0x360] sm:$0xf]
    %v1682 = vld [vmem:[#allocation10 + $0x364] sm:$0xf]
    %v1683 = vld [vmem:[#allocation10 + $0x368] sm:$0xf]
    %v1684 = vld [vmem:[#allocation10 + $0x36c] sm:$0xf]
    %v1685 = vld [vmem:[#allocation10 + $0x370] sm:$0xf]
    %v1686 = vld [vmem:[#allocation10 + $0x374] sm:$0xf]
    %v1687 = vld [vmem:[#allocation10 + $0x378] sm:$0xf]
    %v1688 = vld [vmem:[#allocation10 + $0x37c] sm:$0xf]
    %v1689 = vld [vmem:[#allocation10 + $0x380] sm:$0xf]
    %v1690 = vld [vmem:[#allocation10 + $0x384] sm:$0xf]
    %v1691 = vld [vmem:[#allocation10 + $0x388] sm:$0xf]
    %v1692 = vld [vmem:[#allocation10 + $0x38c] sm:$0xf]
    %v1693 = vld [vmem:[#allocation10 + $0x390] sm:$0xf]
    %v1694 = vld [vmem:[#allocation10 + $0x394] sm:$0xf]
    %v1695 = vld [vmem:[#allocation10 + $0x398] sm:$0xf]
    %v1696 = vld [vmem:[#allocation10 + $0x39c] sm:$0xf]
    %v1697 = vld [vmem:[#allocation10 + $0x3a0] sm:$0xf]
    %v1698 = vld [vmem:[#allocation10 + $0x3a4] sm:$0xf]
    %v1699 = vld [vmem:[#allocation10 + $0x3a8] sm:$0xf]
    %v1700 = vld [vmem:[#allocation10 + $0x3ac] sm:$0xf]
    %v1701 = vld [vmem:[#allocation10 + $0x3b0] sm:$0xf]
    %v1702 = vld [vmem:[#allocation10 + $0x3b4] sm:$0xf]
    %v1703 = vld [vmem:[#allocation10 + $0x3b8] sm:$0xf]
    %v1704 = vld [vmem:[#allocation10 + $0x3bc] sm:$0xf]
    %v1705 = vld [vmem:[#allocation10 + $0x3c0] sm:$0xf]
    %v1706 = vld [vmem:[#allocation10 + $0x3c4] sm:$0xf]
    %v1707 = vld [vmem:[#allocation10 + $0x3c8] sm:$0xf]
    %v1708 = vld [vmem:[#allocation10 + $0x3cc] sm:$0xf]
    %v1709 = vld [vmem:[#allocation10 + $0x3d0] sm:$0xf]
    %v1710 = vld [vmem:[#allocation10 + $0x3d4] sm:$0xf]
    %v1711 = vld [vmem:[#allocation10 + $0x3d8] sm:$0xf]
    %v1712 = vld [vmem:[#allocation10 + $0x3dc] sm:$0xf]
    %v1713 = vld [vmem:[#allocation10 + $0x3e0] sm:$0xf]
    %v1714 = vld [vmem:[#allocation10 + $0x3e4] sm:$0xf]
    %v1715 = vld [vmem:[#allocation10 + $0x3e8] sm:$0xf]
    %v1716 = vld [vmem:[#allocation10 + $0x3ec] sm:$0xf]
    %v1717 = vld [vmem:[#allocation10 + $0x3f0] sm:$0xf]
    %v1718 = vld [vmem:[#allocation10 + $0x3f4] sm:$0xf]
    %v1719 = vld [vmem:[#allocation10 + $0x3f8] sm:$0xf]
    %v1720 = vld [vmem:[#allocation10 + $0x3fc] sm:$0xf]
    %v1721 = vld [vmem:[#allocation10 + $0x400] sm:$0xf]
    %v1722 = vld [vmem:[#allocation10 + $0x404] sm:$0xf]
    %v1723 = vld [vmem:[#allocation10 + $0x408] sm:$0xf]
    %v1724 = vld [vmem:[#allocation10 + $0x40c] sm:$0xf]
    %v1725 = vld [vmem:[#allocation10 + $0x410] sm:$0xf]
    %v1726 = vld [vmem:[#allocation10 + $0x414] sm:$0xf]
    %v1727 = vld [vmem:[#allocation10 + $0x418] sm:$0xf]
    %v1728 = vld [vmem:[#allocation10 + $0x41c] sm:$0xf]
    %v1729 = vld [vmem:[#allocation10 + $0x420] sm:$0xf]
    %v1730 = vld [vmem:[#allocation10 + $0x424] sm:$0xf]
    %v1731 = vld [vmem:[#allocation10 + $0x428] sm:$0xf]
    %v1732 = vld [vmem:[#allocation10 + $0x42c] sm:$0xf]
    %v1733 = vld [vmem:[#allocation10 + $0x430] sm:$0xf]
    %v1734 = vld [vmem:[#allocation10 + $0x434] sm:$0xf]
    %v1735 = vld [vmem:[#allocation10 + $0x438] sm:$0xf]
    %v1736 = vld [vmem:[#allocation10 + $0x43c] sm:$0xf]
    %v1737 = vld [vmem:[#allocation10 + $0x440] sm:$0xf]
    %v1738 = vld [vmem:[#allocation10 + $0x444] sm:$0xf]
    %v1739 = vld [vmem:[#allocation10 + $0x448] sm:$0xf]
    %v1740 = vld [vmem:[#allocation10 + $0x44c] sm:$0xf]
    %v1741 = vld [vmem:[#allocation10 + $0x450] sm:$0xf]
    %v1742 = vld [vmem:[#allocation10 + $0x454] sm:$0xf]
    %v1743 = vld [vmem:[#allocation10 + $0x458] sm:$0xf]
    %v1744 = vld [vmem:[#allocation10 + $0x45c] sm:$0xf]
    %v1745 = vld [vmem:[#allocation10 + $0x460] sm:$0xf]
    %v1746 = vld [vmem:[#allocation10 + $0x464] sm:$0xf]
    %v1747 = vld [vmem:[#allocation10 + $0x468] sm:$0xf]
    %v1748 = vld [vmem:[#allocation10 + $0x46c] sm:$0xf]
    %v1749 = vld [vmem:[#allocation10 + $0x470] sm:$0xf]
    %v1750 = vld [vmem:[#allocation10 + $0x474] sm:$0xf]
    %v1751 = vld [vmem:[#allocation10 + $0x478] sm:$0xf]
    %v1752 = vld [vmem:[#allocation10 + $0x47c] sm:$0xf]
    %v1753 = vld [vmem:[#allocation10 + $0x480] sm:$0xf]
    %v1754 = vld [vmem:[#allocation10 + $0x484] sm:$0xf]
    %v1755 = vld [vmem:[#allocation10 + $0x488] sm:$0xf]
    %v1756 = vld [vmem:[#allocation10 + $0x48c] sm:$0xf]
    %v1757 = vld [vmem:[#allocation10 + $0x490] sm:$0xf]
    %v1758 = vld [vmem:[#allocation10 + $0x494] sm:$0xf]
    %v1759 = vld [vmem:[#allocation10 + $0x498] sm:$0xf]
    %v1760 = vld [vmem:[#allocation10 + $0x49c] sm:$0xf]
    %v1761 = vld [vmem:[#allocation10 + $0x4a0] sm:$0xf]
    %v1762 = vld [vmem:[#allocation10 + $0x4a4] sm:$0xf]
    %v1763 = vld [vmem:[#allocation10 + $0x4a8] sm:$0xf]
    %v1764 = vld [vmem:[#allocation10 + $0x4ac] sm:$0xf]
    %v1765 = vld [vmem:[#allocation10 + $0x4b0] sm:$0xf]
    %v1766 = vld [vmem:[#allocation10 + $0x4b4] sm:$0xf]
    %v1767 = vld [vmem:[#allocation10 + $0x4b8] sm:$0xf]
    %v1768 = vld [vmem:[#allocation10 + $0x4bc] sm:$0xf]
    %v1769 = vld [vmem:[#allocation10 + $0x4c0] sm:$0xf]
    %v1770 = vld [vmem:[#allocation10 + $0x4c4] sm:$0xf]
    %v1771 = vld [vmem:[#allocation10 + $0x4c8] sm:$0xf]
    %v1772 = vld [vmem:[#allocation10 + $0x4cc] sm:$0xf]
    %v1773 = vld [vmem:[#allocation10 + $0x4d0] sm:$0xf]
    %v1774 = vld [vmem:[#allocation10 + $0x4d4] sm:$0xf]
    %v1775 = vld [vmem:[#allocation10 + $0x4d8] sm:$0xf]
    %v1776 = vld [vmem:[#allocation10 + $0x4dc] sm:$0xf]
    %v1777 = vld [vmem:[#allocation10 + $0x4e0] sm:$0xf]
    %v1778 = vld [vmem:[#allocation10 + $0x4e4] sm:$0xf]
    %v1779 = vld [vmem:[#allocation10 + $0x4e8] sm:$0xf]
    %v1780 = vld [vmem:[#allocation10 + $0x4ec] sm:$0xf]
    %v1781 = vld [vmem:[#allocation10 + $0x4f0] sm:$0xf]
    %v1782 = vld [vmem:[#allocation10 + $0x4f4] sm:$0xf]
    %v1783 = vld [vmem:[#allocation10 + $0x4f8] sm:$0xf]
    %v1784 = vld [vmem:[#allocation10 + $0x4fc] sm:$0xf]
    %v1785 = vld [vmem:[#allocation10 + $0x500] sm:$0xf]
    %v1786 = vld [vmem:[#allocation10 + $0x504] sm:$0xf]
    %v1787 = vld [vmem:[#allocation10 + $0x508] sm:$0xf]
    %v1788 = vld [vmem:[#allocation10 + $0x50c] sm:$0xf]
    %v1789 = vld [vmem:[#allocation10 + $0x510] sm:$0xf]
    %v1790 = vld [vmem:[#allocation10 + $0x514] sm:$0xf]
    %v1791 = vld [vmem:[#allocation10 + $0x518] sm:$0xf]
    %v1792 = vld [vmem:[#allocation10 + $0x51c] sm:$0xf]
    %v1793 = vld [vmem:[#allocation10 + $0x520] sm:$0xf]
    %v1794 = vld [vmem:[#allocation10 + $0x524] sm:$0xf]
    %v1795 = vld [vmem:[#allocation10 + $0x528] sm:$0xf]
    %v1796 = vld [vmem:[#allocation10 + $0x52c] sm:$0xf]
    %v1797 = vld [vmem:[#allocation10 + $0x530] sm:$0xf]
    %v1798 = vld [vmem:[#allocation10 + $0x534] sm:$0xf]
    %v1799 = vld [vmem:[#allocation10 + $0x538] sm:$0xf]
    %v1800 = vld [vmem:[#allocation10 + $0x53c] sm:$0xf]
    %v1801 = vld [vmem:[#allocation10 + $0x540] sm:$0xf]
    %v1802 = vld [vmem:[#allocation10 + $0x544] sm:$0xf]
    %v1803 = vld [vmem:[#allocation10 + $0x548] sm:$0xf]
    %v1804 = vld [vmem:[#allocation10 + $0x54c] sm:$0xf]
    %v1805 = vld [vmem:[#allocation10 + $0x550] sm:$0xf]
    %v1806 = vld [vmem:[#allocation10 + $0x554] sm:$0xf]
    %v1807 = vld [vmem:[#allocation10 + $0x558] sm:$0xf]
    %v1808 = vld [vmem:[#allocation10 + $0x55c] sm:$0xf]
    %v1809 = vld [vmem:[#allocation10 + $0x560] sm:$0xf]
    %v1810 = vld [vmem:[#allocation10 + $0x564] sm:$0xf]
    %v1811 = vld [vmem:[#allocation10 + $0x568] sm:$0xf]
    %v1812 = vld [vmem:[#allocation10 + $0x56c] sm:$0xf]
    %v1813 = vld [vmem:[#allocation10 + $0x570] sm:$0xf]
    %v1814 = vld [vmem:[#allocation10 + $0x574] sm:$0xf]
    %v1815 = vld [vmem:[#allocation10 + $0x578] sm:$0xf]
    %v1816 = vld [vmem:[#allocation10 + $0x57c] sm:$0xf]
    %v1817 = vld [vmem:[#allocation10 + $0x580] sm:$0xf]
    %v1818 = vld [vmem:[#allocation10 + $0x584] sm:$0xf]
    %v1819 = vld [vmem:[#allocation10 + $0x588] sm:$0xf]
    %v1820 = vld [vmem:[#allocation10 + $0x58c] sm:$0xf]
    %v1821 = vld [vmem:[#allocation10 + $0x590] sm:$0xf]
    %v1822 = vld [vmem:[#allocation10 + $0x594] sm:$0xf]
    %v1823 = vld [vmem:[#allocation10 + $0x598] sm:$0xf]
    %v1824 = vld [vmem:[#allocation10 + $0x59c] sm:$0xf]
    %v1825 = vld [vmem:[#allocation10 + $0x5a0] sm:$0xf]
    %v1826 = vld [vmem:[#allocation10 + $0x5a4] sm:$0xf]
    %v1827 = vld [vmem:[#allocation10 + $0x5a8] sm:$0xf]
    %v1828 = vld [vmem:[#allocation10 + $0x5ac] sm:$0xf]
    %v1829 = vld [vmem:[#allocation10 + $0x5b0] sm:$0xf]
    %v1830 = vld [vmem:[#allocation10 + $0x5b4] sm:$0xf]
    %v1831 = vld [vmem:[#allocation10 + $0x5b8] sm:$0xf]
    %v1832 = vld [vmem:[#allocation10 + $0x5bc] sm:$0xf]
    %v1833 = vld [vmem:[#allocation10 + $0x5c0] sm:$0xf]
    %v1834 = vld [vmem:[#allocation10 + $0x5c4] sm:$0xf]
    %v1835 = vld [vmem:[#allocation10 + $0x5c8] sm:$0xf]
    %v1836 = vld [vmem:[#allocation10 + $0x5cc] sm:$0xf]
    %v1837 = vld [vmem:[#allocation10 + $0x5d0] sm:$0xf]
    %v1838 = vld [vmem:[#allocation10 + $0x5d4] sm:$0xf]
    %v1839 = vld [vmem:[#allocation10 + $0x5d8] sm:$0xf]
    %v1840 = vld [vmem:[#allocation10 + $0x5dc] sm:$0xf]
    %v1841 = vld [vmem:[#allocation10 + $0x5e0] sm:$0xf]
    %v1842 = vld [vmem:[#allocation10 + $0x5e4] sm:$0xf]
    %v1843 = vld [vmem:[#allocation10 + $0x5e8] sm:$0xf]
    %v1844 = vld [vmem:[#allocation10 + $0x5ec] sm:$0xf]
    %v1845 = vld [vmem:[#allocation10 + $0x5f0] sm:$0xf]
    %v1846 = vld [vmem:[#allocation10 + $0x5f4] sm:$0xf]
    %v1847 = vld [vmem:[#allocation10 + $0x5f8] sm:$0xf]
    %v1848 = vld [vmem:[#allocation10 + $0x5fc] sm:$0xf]
    %v1849 = vld [vmem:[#allocation10 + $0x600] sm:$0xf]
    %v1850 = vld [vmem:[#allocation10 + $0x604] sm:$0xf]
    %v1851 = vld [vmem:[#allocation10 + $0x608] sm:$0xf]
    %v1852 = vld [vmem:[#allocation10 + $0x60c] sm:$0xf]
    %v1853 = vld [vmem:[#allocation10 + $0x610] sm:$0xf]
    %v1854 = vld [vmem:[#allocation10 + $0x614] sm:$0xf]
    %v1855 = vld [vmem:[#allocation10 + $0x618] sm:$0xf]
    %v1856 = vld [vmem:[#allocation10 + $0x61c] sm:$0xf]
    %v1857 = vld [vmem:[#allocation10 + $0x620] sm:$0xf]
    %v1858 = vld [vmem:[#allocation10 + $0x624] sm:$0xf]
    %v1859 = vld [vmem:[#allocation10 + $0x628] sm:$0xf]
    %v1860 = vld [vmem:[#allocation10 + $0x62c] sm:$0xf]
    %v1861 = vld [vmem:[#allocation10 + $0x630] sm:$0xf]
    %v1862 = vld [vmem:[#allocation10 + $0x634] sm:$0xf]
    %v1863 = vld [vmem:[#allocation10 + $0x638] sm:$0xf]
    %v1864 = vld [vmem:[#allocation10 + $0x63c] sm:$0xf]
    %v1865 = vld [vmem:[#allocation10 + $0x640] sm:$0xf]
    %v1866 = vld [vmem:[#allocation10 + $0x644] sm:$0xf]
    %v1867 = vld [vmem:[#allocation10 + $0x648] sm:$0xf]
    %v1868 = vld [vmem:[#allocation10 + $0x64c] sm:$0xf]
    %v1869 = vld [vmem:[#allocation10 + $0x650] sm:$0xf]
    %v1870 = vld [vmem:[#allocation10 + $0x654] sm:$0xf]
    %v1871 = vld [vmem:[#allocation10 + $0x658] sm:$0xf]
    %v1872 = vld [vmem:[#allocation10 + $0x65c] sm:$0xf]
    %v1873 = vld [vmem:[#allocation10 + $0x660] sm:$0xf]
    %v1874 = vld [vmem:[#allocation10 + $0x664] sm:$0xf]
    %v1875 = vld [vmem:[#allocation10 + $0x668] sm:$0xf]
    %v1876 = vld [vmem:[#allocation10 + $0x66c] sm:$0xf]
    %v1877 = vld [vmem:[#allocation10 + $0x670] sm:$0xf]
    %v1878 = vld [vmem:[#allocation10 + $0x674] sm:$0xf]
    %v1879 = vld [vmem:[#allocation10 + $0x678] sm:$0xf]
    %v1880 = vld [vmem:[#allocation10 + $0x67c] sm:$0xf]
    %v1881 = vld [vmem:[#allocation10 + $0x680] sm:$0xf]
    %v1882 = vld [vmem:[#allocation10 + $0x684] sm:$0xf]
    %v1883 = vld [vmem:[#allocation10 + $0x688] sm:$0xf]
    %v1884 = vld [vmem:[#allocation10 + $0x68c] sm:$0xf]
    %v1885 = vld [vmem:[#allocation10 + $0x690] sm:$0xf]
    %v1886 = vld [vmem:[#allocation10 + $0x694] sm:$0xf]
    %v1887 = vld [vmem:[#allocation10 + $0x698] sm:$0xf]
    %v1888 = vld [vmem:[#allocation10 + $0x69c] sm:$0xf]
    %v1889 = vld [vmem:[#allocation10 + $0x6a0] sm:$0xf]
    %v1890 = vld [vmem:[#allocation10 + $0x6a4] sm:$0xf]
    %v1891 = vld [vmem:[#allocation10 + $0x6a8] sm:$0xf]
    %v1892 = vld [vmem:[#allocation10 + $0x6ac] sm:$0xf]
    %v1893 = vld [vmem:[#allocation10 + $0x6b0] sm:$0xf]
    %v1894 = vld [vmem:[#allocation10 + $0x6b4] sm:$0xf]
    %v1895 = vld [vmem:[#allocation10 + $0x6b8] sm:$0xf]
    %v1896 = vld [vmem:[#allocation10 + $0x6bc] sm:$0xf]
    %v1897 = vld [vmem:[#allocation10 + $0x6c0] sm:$0xf]
    %v1898 = vld [vmem:[#allocation10 + $0x6c4] sm:$0xf]
    %v1899 = vld [vmem:[#allocation10 + $0x6c8] sm:$0xf]
    %v1900 = vld [vmem:[#allocation10 + $0x6cc] sm:$0xf]
    %v1901 = vld [vmem:[#allocation10 + $0x6d0] sm:$0xf]
    %v1902 = vld [vmem:[#allocation10 + $0x6d4] sm:$0xf]
    %v1903 = vld [vmem:[#allocation10 + $0x6d8] sm:$0xf]
    %v1904 = vld [vmem:[#allocation10 + $0x6dc] sm:$0xf]
    %v1905 = vld [vmem:[#allocation10 + $0x6e0] sm:$0xf]
    %v1906 = vld [vmem:[#allocation10 + $0x6e4] sm:$0xf]
    %v1907 = vld [vmem:[#allocation10 + $0x6e8] sm:$0xf]
    %v1908 = vld [vmem:[#allocation10 + $0x6ec] sm:$0xf]
    %v1909 = vld [vmem:[#allocation10 + $0x6f0] sm:$0xf]
    %v1910 = vld [vmem:[#allocation10 + $0x6f4] sm:$0xf]
    %v1911 = vld [vmem:[#allocation10 + $0x6f8] sm:$0xf]
    %v1912 = vld [vmem:[#allocation10 + $0x6fc] sm:$0xf]
    %v1913 = vld [vmem:[#allocation10 + $0x700] sm:$0xf]
    %v1914 = vld [vmem:[#allocation10 + $0x704] sm:$0xf]
    %v1915 = vld [vmem:[#allocation10 + $0x708] sm:$0xf]
    %v1916 = vld [vmem:[#allocation10 + $0x70c] sm:$0xf]
    %v1917 = vld [vmem:[#allocation10 + $0x710] sm:$0xf]
    %v1918 = vld [vmem:[#allocation10 + $0x714] sm:$0xf]
    %v1919 = vld [vmem:[#allocation10 + $0x718] sm:$0xf]
    %v1920 = vld [vmem:[#allocation10 + $0x71c] sm:$0xf]
    %v1921 = vld [vmem:[#allocation10 + $0x720] sm:$0xf]
    %v1922 = vld [vmem:[#allocation10 + $0x724] sm:$0xf]
    %v1923 = vld [vmem:[#allocation10 + $0x728] sm:$0xf]
    %v1924 = vld [vmem:[#allocation10 + $0x72c] sm:$0xf]
    %v1925 = vld [vmem:[#allocation10 + $0x730] sm:$0xf]
    %v1926 = vld [vmem:[#allocation10 + $0x734] sm:$0xf]
    %v1927 = vld [vmem:[#allocation10 + $0x738] sm:$0xf]
    %v1928 = vld [vmem:[#allocation10 + $0x73c] sm:$0xf]
    %v1929 = vld [vmem:[#allocation10 + $0x740] sm:$0xf]
    %v1930 = vld [vmem:[#allocation10 + $0x744] sm:$0xf]
    %v1931 = vld [vmem:[#allocation10 + $0x748] sm:$0xf]
    %v1932 = vld [vmem:[#allocation10 + $0x74c] sm:$0xf]
    %v1933 = vld [vmem:[#allocation10 + $0x750] sm:$0xf]
    %v1934 = vld [vmem:[#allocation10 + $0x754] sm:$0xf]
    %v1935 = vld [vmem:[#allocation10 + $0x758] sm:$0xf]
    %v1936 = vld [vmem:[#allocation10 + $0x75c] sm:$0xf]
    %v1937 = vld [vmem:[#allocation10 + $0x760] sm:$0xf]
    %v1938 = vld [vmem:[#allocation10 + $0x764] sm:$0xf]
    %v1939 = vld [vmem:[#allocation10 + $0x768] sm:$0xf]
    %v1940 = vld [vmem:[#allocation10 + $0x76c] sm:$0xf]
    %v1941 = vld [vmem:[#allocation10 + $0x770] sm:$0xf]
    %v1942 = vld [vmem:[#allocation10 + $0x774] sm:$0xf]
    %v1943 = vld [vmem:[#allocation10 + $0x778] sm:$0xf]
    %v1944 = vld [vmem:[#allocation10 + $0x77c] sm:$0xf]
    %v1945 = vld [vmem:[#allocation10 + $0x780] sm:$0xf]
    %v1946 = vld [vmem:[#allocation10 + $0x784] sm:$0xf]
    %v1947 = vld [vmem:[#allocation10 + $0x788] sm:$0xf]
    %v1948 = vld [vmem:[#allocation10 + $0x78c] sm:$0xf]
    %v1949 = vld [vmem:[#allocation10 + $0x790] sm:$0xf]
    %v1950 = vld [vmem:[#allocation10 + $0x794] sm:$0xf]
    %v1951 = vld [vmem:[#allocation10 + $0x798] sm:$0xf]
    %v1952 = vld [vmem:[#allocation10 + $0x79c] sm:$0xf]
    %v1953 = vld [vmem:[#allocation10 + $0x7a0] sm:$0xf]
    %v1954 = vld [vmem:[#allocation10 + $0x7a4] sm:$0xf]
    %v1955 = vld [vmem:[#allocation10 + $0x7a8] sm:$0xf]
    %v1956 = vld [vmem:[#allocation10 + $0x7ac] sm:$0xf]
    %v1957 = vld [vmem:[#allocation10 + $0x7b0] sm:$0xf]
    %v1958 = vld [vmem:[#allocation10 + $0x7b4] sm:$0xf]
    %v1959 = vld [vmem:[#allocation10 + $0x7b8] sm:$0xf]
    %v1960 = vld [vmem:[#allocation10 + $0x7bc] sm:$0xf]
    %v1961 = vld [vmem:[#allocation10 + $0x7c0] sm:$0xf]
    %v1962 = vld [vmem:[#allocation10 + $0x7c4] sm:$0xf]
    %v1963 = vld [vmem:[#allocation10 + $0x7c8] sm:$0xf]
    %v1964 = vld [vmem:[#allocation10 + $0x7cc] sm:$0xf]
    %v1965 = vld [vmem:[#allocation10 + $0x7d0] sm:$0xf]
    %v1966 = vld [vmem:[#allocation10 + $0x7d4] sm:$0xf]
    %v1967 = vld [vmem:[#allocation10 + $0x7d8] sm:$0xf]
    %v1968 = vld [vmem:[#allocation10 + $0x7dc] sm:$0xf]
    %v1969 = vld [vmem:[#allocation10 + $0x7e0] sm:$0xf]
    %v1970 = vld [vmem:[#allocation10 + $0x7e4] sm:$0xf]
    %v1971 = vld [vmem:[#allocation10 + $0x7e8] sm:$0xf]
    %v1972 = vld [vmem:[#allocation10 + $0x7ec] sm:$0xf]
    %v1973 = vld [vmem:[#allocation10 + $0x7f0] sm:$0xf]
    %v1974 = vld [vmem:[#allocation10 + $0x7f4] sm:$0xf]
    %v1975 = vld [vmem:[#allocation10 + $0x7f8] sm:$0xf]
    %v1976 = vld [vmem:[#allocation10 + $0x7fc] sm:$0xf]
    %v1977 = vld [vmem:[%s6] sm:$0x1]
    %v1979 = vlaneseq
    %v1980 = vshrl.u32 %v1979, 7
    %v1981 = vsub.s32 0, %v1980
    %v1982 = vrot.slane %v1977, %v1981
    %v2496 = vunpack.c.l.b16 %v1465
    %v2497 = vunpack.c.l.b16 %v1466
    %v2498 = vunpack.c.l.b16 %v1467
    %v2499 = vunpack.c.l.b16 %v1468
    %v2500 = vunpack.c.l.b16 %v1469
    %v2501 = vunpack.c.l.b16 %v1470
    %v2502 = vunpack.c.l.b16 %v1471
    %v2503 = vunpack.c.l.b16 %v1472
    %v2504 = vunpack.c.l.b16 %v1473
    %v2505 = vunpack.c.l.b16 %v1474
    %v2506 = vunpack.c.l.b16 %v1475
    %v2507 = vunpack.c.l.b16 %v1476
    %v2508 = vunpack.c.l.b16 %v1477
    %v2509 = vunpack.c.l.b16 %v1478
    %v2510 = vunpack.c.l.b16 %v1479
    %v2511 = vunpack.c.l.b16 %v1480
    %v2512 = vunpack.c.l.b16 %v1481
    %v2513 = vunpack.c.l.b16 %v1482
    %v2514 = vunpack.c.l.b16 %v1483
    %v2515 = vunpack.c.l.b16 %v1484
    %v2516 = vunpack.c.l.b16 %v1485
    %v2517 = vunpack.c.l.b16 %v1486
    %v2518 = vunpack.c.l.b16 %v1487
    %v2519 = vunpack.c.l.b16 %v1488
    %v2520 = vunpack.c.l.b16 %v1489
    %v2521 = vunpack.c.l.b16 %v1490
    %v2522 = vunpack.c.l.b16 %v1491
    %v2523 = vunpack.c.l.b16 %v1492
    %v2524 = vunpack.c.l.b16 %v1493
    %v2525 = vunpack.c.l.b16 %v1494
    %v2526 = vunpack.c.l.b16 %v1495
    %v2527 = vunpack.c.l.b16 %v1496
    %v2528 = vunpack.c.l.b16 %v1497
    %v2529 = vunpack.c.l.b16 %v1498
    %v2530 = vunpack.c.l.b16 %v1499
    %v2531 = vunpack.c.l.b16 %v1500
    %v2532 = vunpack.c.l.b16 %v1501
    %v2533 = vunpack.c.l.b16 %v1502
    %v2534 = vunpack.c.l.b16 %v1503
    %v2535 = vunpack.c.l.b16 %v1504
    %v2536 = vunpack.c.l.b16 %v1505
    %v2537 = vunpack.c.l.b16 %v1506
    %v2538 = vunpack.c.l.b16 %v1507
    %v2539 = vunpack.c.l.b16 %v1508
    %v2540 = vunpack.c.l.b16 %v1509
    %v2541 = vunpack.c.l.b16 %v1510
    %v2542 = vunpack.c.l.b16 %v1511
    %v2543 = vunpack.c.l.b16 %v1512
    %v2544 = vunpack.c.l.b16 %v1513
    %v2545 = vunpack.c.l.b16 %v1514
    %v2546 = vunpack.c.l.b16 %v1515
    %v2547 = vunpack.c.l.b16 %v1516
    %v2548 = vunpack.c.l.b16 %v1517
    %v2549 = vunpack.c.l.b16 %v1518
    %v2550 = vunpack.c.l.b16 %v1519
    %v2551 = vunpack.c.l.b16 %v1520
    %v2552 = vunpack.c.l.b16 %v1521
    %v2553 = vunpack.c.l.b16 %v1522
    %v2554 = vunpack.c.l.b16 %v1523
    %v2555 = vunpack.c.l.b16 %v1524
    %v2556 = vunpack.c.l.b16 %v1525
    %v2557 = vunpack.c.l.b16 %v1526
    %v2558 = vunpack.c.l.b16 %v1527
    %v2559 = vunpack.c.l.b16 %v1528
    %v2560 = vunpack.c.l.b16 %v1529
    %v2561 = vunpack.c.l.b16 %v1530
    %v2562 = vunpack.c.l.b16 %v1531
    %v2563 = vunpack.c.l.b16 %v1532
    %v2564 = vunpack.c.l.b16 %v1533
    %v2565 = vunpack.c.l.b16 %v1534
    %v2566 = vunpack.c.l.b16 %v1535
    %v2567 = vunpack.c.l.b16 %v1536
    %v2568 = vunpack.c.l.b16 %v1537
    %v2569 = vunpack.c.l.b16 %v1538
    %v2570 = vunpack.c.l.b16 %v1539
    %v2571 = vunpack.c.l.b16 %v1540
    %v2572 = vunpack.c.l.b16 %v1541
    %v2573 = vunpack.c.l.b16 %v1542
    %v2574 = vunpack.c.l.b16 %v1543
    %v2575 = vunpack.c.l.b16 %v1544
    %v2576 = vunpack.c.l.b16 %v1545
    %v2577 = vunpack.c.l.b16 %v1546
    %v2578 = vunpack.c.l.b16 %v1547
    %v2579 = vunpack.c.l.b16 %v1548
    %v2580 = vunpack.c.l.b16 %v1549
    %v2581 = vunpack.c.l.b16 %v1550
    %v2582 = vunpack.c.l.b16 %v1551
    %v2583 = vunpack.c.l.b16 %v1552
    %v2584 = vunpack.c.l.b16 %v1553
    %v2585 = vunpack.c.l.b16 %v1554
    %v2586 = vunpack.c.l.b16 %v1555
    %v2587 = vunpack.c.l.b16 %v1556
    %v2588 = vunpack.c.l.b16 %v1557
    %v2589 = vunpack.c.l.b16 %v1558
    %v2590 = vunpack.c.l.b16 %v1559
    %v2591 = vunpack.c.l.b16 %v1560
    %v2592 = vunpack.c.l.b16 %v1561
    %v2593 = vunpack.c.l.b16 %v1562
    %v2594 = vunpack.c.l.b16 %v1563
    %v2595 = vunpack.c.l.b16 %v1564
    %v2596 = vunpack.c.l.b16 %v1565
    %v2597 = vunpack.c.l.b16 %v1566
    %v2598 = vunpack.c.l.b16 %v1567
    %v2599 = vunpack.c.l.b16 %v1568
    %v2600 = vunpack.c.l.b16 %v1569
    %v2601 = vunpack.c.l.b16 %v1570
    %v2602 = vunpack.c.l.b16 %v1571
    %v2603 = vunpack.c.l.b16 %v1572
    %v2604 = vunpack.c.l.b16 %v1573
    %v2605 = vunpack.c.l.b16 %v1574
    %v2606 = vunpack.c.l.b16 %v1575
    %v2607 = vunpack.c.l.b16 %v1576
    %v2608 = vunpack.c.l.b16 %v1577
    %v2609 = vunpack.c.l.b16 %v1578
    %v2610 = vunpack.c.l.b16 %v1579
    %v2611 = vunpack.c.l.b16 %v1580
    %v2612 = vunpack.c.l.b16 %v1581
    %v2613 = vunpack.c.l.b16 %v1582
    %v2614 = vunpack.c.l.b16 %v1583
    %v2615 = vunpack.c.l.b16 %v1584
    %v2616 = vunpack.c.l.b16 %v1585
    %v2617 = vunpack.c.l.b16 %v1586
    %v2618 = vunpack.c.l.b16 %v1587
    %v2619 = vunpack.c.l.b16 %v1588
    %v2620 = vunpack.c.l.b16 %v1589
    %v2621 = vunpack.c.l.b16 %v1590
    %v2622 = vunpack.c.l.b16 %v1591
    %v2623 = vunpack.c.l.b16 %v1592
    %v2624 = vunpack.c.l.b16 %v1593
    %v2625 = vunpack.c.l.b16 %v1594
    %v2626 = vunpack.c.l.b16 %v1595
    %v2627 = vunpack.c.l.b16 %v1596
    %v2628 = vunpack.c.l.b16 %v1597
    %v2629 = vunpack.c.l.b16 %v1598
    %v2630 = vunpack.c.l.b16 %v1599
    %v2631 = vunpack.c.l.b16 %v1600
    %v2632 = vunpack.c.l.b16 %v1601
    %v2633 = vunpack.c.l.b16 %v1602
    %v2634 = vunpack.c.l.b16 %v1603
    %v2635 = vunpack.c.l.b16 %v1604
    %v2636 = vunpack.c.l.b16 %v1605
    %v2637 = vunpack.c.l.b16 %v1606
    %v2638 = vunpack.c.l.b16 %v1607
    %v2639 = vunpack.c.l.b16 %v1608
    %v2640 = vunpack.c.l.b16 %v1609
    %v2641 = vunpack.c.l.b16 %v1610
    %v2642 = vunpack.c.l.b16 %v1611
    %v2643 = vunpack.c.l.b16 %v1612
    %v2644 = vunpack.c.l.b16 %v1613
    %v2645 = vunpack.c.l.b16 %v1614
    %v2646 = vunpack.c.l.b16 %v1615
    %v2647 = vunpack.c.l.b16 %v1616
    %v2648 = vunpack.c.l.b16 %v1617
    %v2649 = vunpack.c.l.b16 %v1618
    %v2650 = vunpack.c.l.b16 %v1619
    %v2651 = vunpack.c.l.b16 %v1620
    %v2652 = vunpack.c.l.b16 %v1621
    %v2653 = vunpack.c.l.b16 %v1622
    %v2654 = vunpack.c.l.b16 %v1623
    %v2655 = vunpack.c.l.b16 %v1624
    %v2656 = vunpack.c.l.b16 %v1625
    %v2657 = vunpack.c.l.b16 %v1626
    %v2658 = vunpack.c.l.b16 %v1627
    %v2659 = vunpack.c.l.b16 %v1628
    %v2660 = vunpack.c.l.b16 %v1629
    %v2661 = vunpack.c.l.b16 %v1630
    %v2662 = vunpack.c.l.b16 %v1631
    %v2663 = vunpack.c.l.b16 %v1632
    %v2664 = vunpack.c.l.b16 %v1633
    %v2665 = vunpack.c.l.b16 %v1634
    %v2666 = vunpack.c.l.b16 %v1635
    %v2667 = vunpack.c.l.b16 %v1636
    %v2668 = vunpack.c.l.b16 %v1637
    %v2669 = vunpack.c.l.b16 %v1638
    %v2670 = vunpack.c.l.b16 %v1639
    %v2671 = vunpack.c.l.b16 %v1640
    %v2672 = vunpack.c.l.b16 %v1641
    %v2673 = vunpack.c.l.b16 %v1642
    %v2674 = vunpack.c.l.b16 %v1643
    %v2675 = vunpack.c.l.b16 %v1644
    %v2676 = vunpack.c.l.b16 %v1645
    %v2677 = vunpack.c.l.b16 %v1646
    %v2678 = vunpack.c.l.b16 %v1647
    %v2679 = vunpack.c.l.b16 %v1648
    %v2680 = vunpack.c.l.b16 %v1649
    %v2681 = vunpack.c.l.b16 %v1650
    %v2682 = vunpack.c.l.b16 %v1651
    %v2683 = vunpack.c.l.b16 %v1652
    %v2684 = vunpack.c.l.b16 %v1653
    %v2685 = vunpack.c.l.b16 %v1654
    %v2686 = vunpack.c.l.b16 %v1655
    %v2687 = vunpack.c.l.b16 %v1656
    %v2688 = vunpack.c.l.b16 %v1657
    %v2689 = vunpack.c.l.b16 %v1658
    %v2690 = vunpack.c.l.b16 %v1659
    %v2691 = vunpack.c.l.b16 %v1660
    %v2692 = vunpack.c.l.b16 %v1661
    %v2693 = vunpack.c.l.b16 %v1662
    %v2694 = vunpack.c.l.b16 %v1663
    %v2695 = vunpack.c.l.b16 %v1664
    %v2696 = vunpack.c.l.b16 %v1665
    %v2697 = vunpack.c.l.b16 %v1666
    %v2698 = vunpack.c.l.b16 %v1667
    %v2699 = vunpack.c.l.b16 %v1668
    %v2700 = vunpack.c.l.b16 %v1669
    %v2701 = vunpack.c.l.b16 %v1670
    %v2702 = vunpack.c.l.b16 %v1671
    %v2703 = vunpack.c.l.b16 %v1672
    %v2704 = vunpack.c.l.b16 %v1673
    %v2705 = vunpack.c.l.b16 %v1674
    %v2706 = vunpack.c.l.b16 %v1675
    %v2707 = vunpack.c.l.b16 %v1676
    %v2708 = vunpack.c.l.b16 %v1677
    %v2709 = vunpack.c.l.b16 %v1678
    %v2710 = vunpack.c.l.b16 %v1679
    %v2711 = vunpack.c.l.b16 %v1680
    %v2712 = vunpack.c.l.b16 %v1681
    %v2713 = vunpack.c.l.b16 %v1682
    %v2714 = vunpack.c.l.b16 %v1683
    %v2715 = vunpack.c.l.b16 %v1684
    %v2716 = vunpack.c.l.b16 %v1685
    %v2717 = vunpack.c.l.b16 %v1686
    %v2718 = vunpack.c.l.b16 %v1687
    %v2719 = vunpack.c.l.b16 %v1688
    %v2720 = vunpack.c.l.b16 %v1689
    %v2721 = vunpack.c.l.b16 %v1690
    %v2722 = vunpack.c.l.b16 %v1691
    %v2723 = vunpack.c.l.b16 %v1692
    %v2724 = vunpack.c.l.b16 %v1693
    %v2725 = vunpack.c.l.b16 %v1694
    %v2726 = vunpack.c.l.b16 %v1695
    %v2727 = vunpack.c.l.b16 %v1696
    %v2728 = vunpack.c.l.b16 %v1697
    %v2729 = vunpack.c.l.b16 %v1698
    %v2730 = vunpack.c.l.b16 %v1699
    %v2731 = vunpack.c.l.b16 %v1700
    %v2732 = vunpack.c.l.b16 %v1701
    %v2733 = vunpack.c.l.b16 %v1702
    %v2734 = vunpack.c.l.b16 %v1703
    %v2735 = vunpack.c.l.b16 %v1704
    %v2736 = vunpack.c.l.b16 %v1705
    %v2737 = vunpack.c.l.b16 %v1706
    %v2738 = vunpack.c.l.b16 %v1707
    %v2739 = vunpack.c.l.b16 %v1708
    %v2740 = vunpack.c.l.b16 %v1709
    %v2741 = vunpack.c.l.b16 %v1710
    %v2742 = vunpack.c.l.b16 %v1711
    %v2743 = vunpack.c.l.b16 %v1712
    %v2744 = vunpack.c.l.b16 %v1713
    %v2745 = vunpack.c.l.b16 %v1714
    %v2746 = vunpack.c.l.b16 %v1715
    %v2747 = vunpack.c.l.b16 %v1716
    %v2748 = vunpack.c.l.b16 %v1717
    %v2749 = vunpack.c.l.b16 %v1718
    %v2750 = vunpack.c.l.b16 %v1719
    %v2751 = vunpack.c.l.b16 %v1720
    %v2752 = vunpack.c.l.b16 %v1721
    %v2753 = vunpack.c.l.b16 %v1722
    %v2754 = vunpack.c.l.b16 %v1723
    %v2755 = vunpack.c.l.b16 %v1724
    %v2756 = vunpack.c.l.b16 %v1725
    %v2757 = vunpack.c.l.b16 %v1726
    %v2758 = vunpack.c.l.b16 %v1727
    %v2759 = vunpack.c.l.b16 %v1728
    %v2760 = vunpack.c.l.b16 %v1729
    %v2761 = vunpack.c.l.b16 %v1730
    %v2762 = vunpack.c.l.b16 %v1731
    %v2763 = vunpack.c.l.b16 %v1732
    %v2764 = vunpack.c.l.b16 %v1733
    %v2765 = vunpack.c.l.b16 %v1734
    %v2766 = vunpack.c.l.b16 %v1735
    %v2767 = vunpack.c.l.b16 %v1736
    %v2768 = vunpack.c.l.b16 %v1737
    %v2769 = vunpack.c.l.b16 %v1738
    %v2770 = vunpack.c.l.b16 %v1739
    %v2771 = vunpack.c.l.b16 %v1740
    %v2772 = vunpack.c.l.b16 %v1741
    %v2773 = vunpack.c.l.b16 %v1742
    %v2774 = vunpack.c.l.b16 %v1743
    %v2775 = vunpack.c.l.b16 %v1744
    %v2776 = vunpack.c.l.b16 %v1745
    %v2777 = vunpack.c.l.b16 %v1746
    %v2778 = vunpack.c.l.b16 %v1747
    %v2779 = vunpack.c.l.b16 %v1748
    %v2780 = vunpack.c.l.b16 %v1749
    %v2781 = vunpack.c.l.b16 %v1750
    %v2782 = vunpack.c.l.b16 %v1751
    %v2783 = vunpack.c.l.b16 %v1752
    %v2784 = vunpack.c.l.b16 %v1753
    %v2785 = vunpack.c.l.b16 %v1754
    %v2786 = vunpack.c.l.b16 %v1755
    %v2787 = vunpack.c.l.b16 %v1756
    %v2788 = vunpack.c.l.b16 %v1757
    %v2789 = vunpack.c.l.b16 %v1758
    %v2790 = vunpack.c.l.b16 %v1759
    %v2791 = vunpack.c.l.b16 %v1760
    %v2792 = vunpack.c.l.b16 %v1761
    %v2793 = vunpack.c.l.b16 %v1762
    %v2794 = vunpack.c.l.b16 %v1763
    %v2795 = vunpack.c.l.b16 %v1764
    %v2796 = vunpack.c.l.b16 %v1765
    %v2797 = vunpack.c.l.b16 %v1766
    %v2798 = vunpack.c.l.b16 %v1767
    %v2799 = vunpack.c.l.b16 %v1768
    %v2800 = vunpack.c.l.b16 %v1769
    %v2801 = vunpack.c.l.b16 %v1770
    %v2802 = vunpack.c.l.b16 %v1771
    %v2803 = vunpack.c.l.b16 %v1772
    %v2804 = vunpack.c.l.b16 %v1773
    %v2805 = vunpack.c.l.b16 %v1774
    %v2806 = vunpack.c.l.b16 %v1775
    %v2807 = vunpack.c.l.b16 %v1776
    %v2808 = vunpack.c.l.b16 %v1777
    %v2809 = vunpack.c.l.b16 %v1778
    %v2810 = vunpack.c.l.b16 %v1779
    %v2811 = vunpack.c.l.b16 %v1780
    %v2812 = vunpack.c.l.b16 %v1781
    %v2813 = vunpack.c.l.b16 %v1782
    %v2814 = vunpack.c.l.b16 %v1783
    %v2815 = vunpack.c.l.b16 %v1784
    %v2816 = vunpack.c.l.b16 %v1785
    %v2817 = vunpack.c.l.b16 %v1786
    %v2818 = vunpack.c.l.b16 %v1787
    %v2819 = vunpack.c.l.b16 %v1788
    %v2820 = vunpack.c.l.b16 %v1789
    %v2821 = vunpack.c.l.b16 %v1790
    %v2822 = vunpack.c.l.b16 %v1791
    %v2823 = vunpack.c.l.b16 %v1792
    %v2824 = vunpack.c.l.b16 %v1793
    %v2825 = vunpack.c.l.b16 %v1794
    %v2826 = vunpack.c.l.b16 %v1795
    %v2827 = vunpack.c.l.b16 %v1796
    %v2828 = vunpack.c.l.b16 %v1797
    %v2829 = vunpack.c.l.b16 %v1798
    %v2830 = vunpack.c.l.b16 %v1799
    %v2831 = vunpack.c.l.b16 %v1800
    %v2832 = vunpack.c.l.b16 %v1801
    %v2833 = vunpack.c.l.b16 %v1802
    %v2834 = vunpack.c.l.b16 %v1803
    %v2835 = vunpack.c.l.b16 %v1804
    %v2836 = vunpack.c.l.b16 %v1805
    %v2837 = vunpack.c.l.b16 %v1806
    %v2838 = vunpack.c.l.b16 %v1807
    %v2839 = vunpack.c.l.b16 %v1808
    %v2840 = vunpack.c.l.b16 %v1809
    %v2841 = vunpack.c.l.b16 %v1810
    %v2842 = vunpack.c.l.b16 %v1811
    %v2843 = vunpack.c.l.b16 %v1812
    %v2844 = vunpack.c.l.b16 %v1813
    %v2845 = vunpack.c.l.b16 %v1814
    %v2846 = vunpack.c.l.b16 %v1815
    %v2847 = vunpack.c.l.b16 %v1816
    %v2848 = vunpack.c.l.b16 %v1817
    %v2849 = vunpack.c.l.b16 %v1818
    %v2850 = vunpack.c.l.b16 %v1819
    %v2851 = vunpack.c.l.b16 %v1820
    %v2852 = vunpack.c.l.b16 %v1821
    %v2853 = vunpack.c.l.b16 %v1822
    %v2854 = vunpack.c.l.b16 %v1823
    %v2855 = vunpack.c.l.b16 %v1824
    %v2856 = vunpack.c.l.b16 %v1825
    %v2857 = vunpack.c.l.b16 %v1826
    %v2858 = vunpack.c.l.b16 %v1827
    %v2859 = vunpack.c.l.b16 %v1828
    %v2860 = vunpack.c.l.b16 %v1829
    %v2861 = vunpack.c.l.b16 %v1830
    %v2862 = vunpack.c.l.b16 %v1831
    %v2863 = vunpack.c.l.b16 %v1832
    %v2864 = vunpack.c.l.b16 %v1833
    %v2865 = vunpack.c.l.b16 %v1834
    %v2866 = vunpack.c.l.b16 %v1835
    %v2867 = vunpack.c.l.b16 %v1836
    %v2868 = vunpack.c.l.b16 %v1837
    %v2869 = vunpack.c.l.b16 %v1838
    %v2870 = vunpack.c.l.b16 %v1839
    %v2871 = vunpack.c.l.b16 %v1840
    %v2872 = vunpack.c.l.b16 %v1841
    %v2873 = vunpack.c.l.b16 %v1842
    %v2874 = vunpack.c.l.b16 %v1843
    %v2875 = vunpack.c.l.b16 %v1844
    %v2876 = vunpack.c.l.b16 %v1845
    %v2877 = vunpack.c.l.b16 %v1846
    %v2878 = vunpack.c.l.b16 %v1847
    %v2879 = vunpack.c.l.b16 %v1848
    %v2880 = vunpack.c.l.b16 %v1849
    %v2881 = vunpack.c.l.b16 %v1850
    %v2882 = vunpack.c.l.b16 %v1851
    %v2883 = vunpack.c.l.b16 %v1852
    %v2884 = vunpack.c.l.b16 %v1853
    %v2885 = vunpack.c.l.b16 %v1854
    %v2886 = vunpack.c.l.b16 %v1855
    %v2887 = vunpack.c.l.b16 %v1856
    %v2888 = vunpack.c.l.b16 %v1857
    %v2889 = vunpack.c.l.b16 %v1858
    %v2890 = vunpack.c.l.b16 %v1859
    %v2891 = vunpack.c.l.b16 %v1860
    %v2892 = vunpack.c.l.b16 %v1861
    %v2893 = vunpack.c.l.b16 %v1862
    %v2894 = vunpack.c.l.b16 %v1863
    %v2895 = vunpack.c.l.b16 %v1864
    %v2896 = vunpack.c.l.b16 %v1865
    %v2897 = vunpack.c.l.b16 %v1866
    %v2898 = vunpack.c.l.b16 %v1867
    %v2899 = vunpack.c.l.b16 %v1868
    %v2900 = vunpack.c.l.b16 %v1869
    %v2901 = vunpack.c.l.b16 %v1870
    %v2902 = vunpack.c.l.b16 %v1871
    %v2903 = vunpack.c.l.b16 %v1872
    %v2904 = vunpack.c.l.b16 %v1873
    %v2905 = vunpack.c.l.b16 %v1874
    %v2906 = vunpack.c.l.b16 %v1875
    %v2907 = vunpack.c.l.b16 %v1876
    %v2908 = vunpack.c.l.b16 %v1877
    %v2909 = vunpack.c.l.b16 %v1878
    %v2910 = vunpack.c.l.b16 %v1879
    %v2911 = vunpack.c.l.b16 %v1880
    %v2912 = vunpack.c.l.b16 %v1881
    %v2913 = vunpack.c.l.b16 %v1882
    %v2914 = vunpack.c.l.b16 %v1883
    %v2915 = vunpack.c.l.b16 %v1884
    %v2916 = vunpack.c.l.b16 %v1885
    %v2917 = vunpack.c.l.b16 %v1886
    %v2918 = vunpack.c.l.b16 %v1887
    %v2919 = vunpack.c.l.b16 %v1888
    %v2920 = vunpack.c.l.b16 %v1889
    %v2921 = vunpack.c.l.b16 %v1890
    %v2922 = vunpack.c.l.b16 %v1891
    %v2923 = vunpack.c.l.b16 %v1892
    %v2924 = vunpack.c.l.b16 %v1893
    %v2925 = vunpack.c.l.b16 %v1894
    %v2926 = vunpack.c.l.b16 %v1895
    %v2927 = vunpack.c.l.b16 %v1896
    %v2928 = vunpack.c.l.b16 %v1897
    %v2929 = vunpack.c.l.b16 %v1898
    %v2930 = vunpack.c.l.b16 %v1899
    %v2931 = vunpack.c.l.b16 %v1900
    %v2932 = vunpack.c.l.b16 %v1901
    %v2933 = vunpack.c.l.b16 %v1902
    %v2934 = vunpack.c.l.b16 %v1903
    %v2935 = vunpack.c.l.b16 %v1904
    %v2936 = vunpack.c.l.b16 %v1905
    %v2937 = vunpack.c.l.b16 %v1906
    %v2938 = vunpack.c.l.b16 %v1907
    %v2939 = vunpack.c.l.b16 %v1908
    %v2940 = vunpack.c.l.b16 %v1909
    %v2941 = vunpack.c.l.b16 %v1910
    %v2942 = vunpack.c.l.b16 %v1911
    %v2943 = vunpack.c.l.b16 %v1912
    %v2944 = vunpack.c.l.b16 %v1913
    %v2945 = vunpack.c.l.b16 %v1914
    %v2946 = vunpack.c.l.b16 %v1915
    %v2947 = vunpack.c.l.b16 %v1916
    %v2948 = vunpack.c.l.b16 %v1917
    %v2949 = vunpack.c.l.b16 %v1918
    %v2950 = vunpack.c.l.b16 %v1919
    %v2951 = vunpack.c.l.b16 %v1920
    %v2952 = vunpack.c.l.b16 %v1921
    %v2953 = vunpack.c.l.b16 %v1922
    %v2954 = vunpack.c.l.b16 %v1923
    %v2955 = vunpack.c.l.b16 %v1924
    %v2956 = vunpack.c.l.b16 %v1925
    %v2957 = vunpack.c.l.b16 %v1926
    %v2958 = vunpack.c.l.b16 %v1927
    %v2959 = vunpack.c.l.b16 %v1928
    %v2960 = vunpack.c.l.b16 %v1929
    %v2961 = vunpack.c.l.b16 %v1930
    %v2962 = vunpack.c.l.b16 %v1931
    %v2963 = vunpack.c.l.b16 %v1932
    %v2964 = vunpack.c.l.b16 %v1933
    %v2965 = vunpack.c.l.b16 %v1934
    %v2966 = vunpack.c.l.b16 %v1935
    %v2967 = vunpack.c.l.b16 %v1936
    %v2968 = vunpack.c.l.b16 %v1937
    %v2969 = vunpack.c.l.b16 %v1938
    %v2970 = vunpack.c.l.b16 %v1939
    %v2971 = vunpack.c.l.b16 %v1940
    %v2972 = vunpack.c.l.b16 %v1941
    %v2973 = vunpack.c.l.b16 %v1942
    %v2974 = vunpack.c.l.b16 %v1943
    %v2975 = vunpack.c.l.b16 %v1944
    %v2976 = vunpack.c.l.b16 %v1945
    %v2977 = vunpack.c.l.b16 %v1946
    %v2978 = vunpack.c.l.b16 %v1947
    %v2979 = vunpack.c.l.b16 %v1948
    %v2980 = vunpack.c.l.b16 %v1949
    %v2981 = vunpack.c.l.b16 %v1950
    %v2982 = vunpack.c.l.b16 %v1951
    %v2983 = vunpack.c.l.b16 %v1952
    %v2984 = vunpack.c.l.b16 %v1953
    %v2985 = vunpack.c.l.b16 %v1954
    %v2986 = vunpack.c.l.b16 %v1955
    %v2987 = vunpack.c.l.b16 %v1956
    %v2988 = vunpack.c.l.b16 %v1957
    %v2989 = vunpack.c.l.b16 %v1958
    %v2990 = vunpack.c.l.b16 %v1959
    %v2991 = vunpack.c.l.b16 %v1960
    %v2992 = vunpack.c.l.b16 %v1961
    %v2993 = vunpack.c.l.b16 %v1962
    %v2994 = vunpack.c.l.b16 %v1963
    %v2995 = vunpack.c.l.b16 %v1964
    %v2996 = vunpack.c.l.b16 %v1965
    %v2997 = vunpack.c.l.b16 %v1966
    %v2998 = vunpack.c.l.b16 %v1967
    %v2999 = vunpack.c.l.b16 %v1968
    %v3000 = vunpack.c.l.b16 %v1969
    %v3001 = vunpack.c.l.b16 %v1970
    %v3002 = vunpack.c.l.b16 %v1971
    %v3003 = vunpack.c.l.b16 %v1972
    %v3004 = vunpack.c.l.b16 %v1973
    %v3005 = vunpack.c.l.b16 %v1974
    %v3006 = vunpack.c.l.b16 %v1975
    %v3007 = vunpack.c.l.b16 %v1976
    %v3008 = vpack.c.b16 %v2497, %v2496
    %v3009 = vpack.c.b16 %v2499, %v2498
    %v3010 = vpack.c.b16 %v2501, %v2500
    %v3011 = vpack.c.b16 %v2503, %v2502
    %v3012 = vpack.c.b16 %v2505, %v2504
    %v3013 = vpack.c.b16 %v2507, %v2506
    %v3014 = vpack.c.b16 %v2509, %v2508
    %v3015 = vpack.c.b16 %v2511, %v2510
    %v3016 = vpack.c.b16 %v2513, %v2512
    %v3017 = vpack.c.b16 %v2515, %v2514
    %v3018 = vpack.c.b16 %v2517, %v2516
    %v3019 = vpack.c.b16 %v2519, %v2518
    %v3020 = vpack.c.b16 %v2521, %v2520
    %v3021 = vpack.c.b16 %v2523, %v2522
    %v3022 = vpack.c.b16 %v2525, %v2524
    %v3023 = vpack.c.b16 %v2527, %v2526
    %v3024 = vpack.c.b16 %v2529, %v2528
    %v3025 = vpack.c.b16 %v2531, %v2530
    %v3026 = vpack.c.b16 %v2533, %v2532
    %v3027 = vpack.c.b16 %v2535, %v2534
    %v3028 = vpack.c.b16 %v2537, %v2536
    %v3029 = vpack.c.b16 %v2539, %v2538
    %v3030 = vpack.c.b16 %v2541, %v2540
    %v3031 = vpack.c.b16 %v2543, %v2542
    %v3032 = vpack.c.b16 %v2545, %v2544
    %v3033 = vpack.c.b16 %v2547, %v2546
    %v3034 = vpack.c.b16 %v2549, %v2548
    %v3035 = vpack.c.b16 %v2551, %v2550
    %v3036 = vpack.c.b16 %v2553, %v2552
    %v3037 = vpack.c.b16 %v2555, %v2554
    %v3038 = vpack.c.b16 %v2557, %v2556
    %v3039 = vpack.c.b16 %v2559, %v2558
    %v3040 = vpack.c.b16 %v2561, %v2560
    %v3041 = vpack.c.b16 %v2563, %v2562
    %v3042 = vpack.c.b16 %v2565, %v2564
    %v3043 = vpack.c.b16 %v2567, %v2566
    %v3044 = vpack.c.b16 %v2569, %v2568
    %v3045 = vpack.c.b16 %v2571, %v2570
    %v3046 = vpack.c.b16 %v2573, %v2572
    %v3047 = vpack.c.b16 %v2575, %v2574
    %v3048 = vpack.c.b16 %v2577, %v2576
    %v3049 = vpack.c.b16 %v2579, %v2578
    %v3050 = vpack.c.b16 %v2581, %v2580
    %v3051 = vpack.c.b16 %v2583, %v2582
    %v3052 = vpack.c.b16 %v2585, %v2584
    %v3053 = vpack.c.b16 %v2587, %v2586
    %v3054 = vpack.c.b16 %v2589, %v2588
    %v3055 = vpack.c.b16 %v2591, %v2590
    %v3056 = vpack.c.b16 %v2593, %v2592
    %v3057 = vpack.c.b16 %v2595, %v2594
    %v3058 = vpack.c.b16 %v2597, %v2596
    %v3059 = vpack.c.b16 %v2599, %v2598
    %v3060 = vpack.c.b16 %v2601, %v2600
    %v3061 = vpack.c.b16 %v2603, %v2602
    %v3062 = vpack.c.b16 %v2605, %v2604
    %v3063 = vpack.c.b16 %v2607, %v2606
    %v3064 = vpack.c.b16 %v2609, %v2608
    %v3065 = vpack.c.b16 %v2611, %v2610
    %v3066 = vpack.c.b16 %v2613, %v2612
    %v3067 = vpack.c.b16 %v2615, %v2614
    %v3068 = vpack.c.b16 %v2617, %v2616
    %v3069 = vpack.c.b16 %v2619, %v2618
    %v3070 = vpack.c.b16 %v2621, %v2620
    %v3071 = vpack.c.b16 %v2623, %v2622
    %v3072 = vpack.c.b16 %v2625, %v2624
    %v3073 = vpack.c.b16 %v2627, %v2626
    %v3074 = vpack.c.b16 %v2629, %v2628
    %v3075 = vpack.c.b16 %v2631, %v2630
    %v3076 = vpack.c.b16 %v2633, %v2632
    %v3077 = vpack.c.b16 %v2635, %v2634
    %v3078 = vpack.c.b16 %v2637, %v2636
    %v3079 = vpack.c.b16 %v2639, %v2638
    %v3080 = vpack.c.b16 %v2641, %v2640
    %v3081 = vpack.c.b16 %v2643, %v2642
    %v3082 = vpack.c.b16 %v2645, %v2644
    %v3083 = vpack.c.b16 %v2647, %v2646
    %v3084 = vpack.c.b16 %v2649, %v2648
    %v3085 = vpack.c.b16 %v2651, %v2650
    %v3086 = vpack.c.b16 %v2653, %v2652
    %v3087 = vpack.c.b16 %v2655, %v2654
    %v3088 = vpack.c.b16 %v2657, %v2656
    %v3089 = vpack.c.b16 %v2659, %v2658
    %v3090 = vpack.c.b16 %v2661, %v2660
    %v3091 = vpack.c.b16 %v2663, %v2662
    %v3092 = vpack.c.b16 %v2665, %v2664
    %v3093 = vpack.c.b16 %v2667, %v2666
    %v3094 = vpack.c.b16 %v2669, %v2668
    %v3095 = vpack.c.b16 %v2671, %v2670
    %v3096 = vpack.c.b16 %v2673, %v2672
    %v3097 = vpack.c.b16 %v2675, %v2674
    %v3098 = vpack.c.b16 %v2677, %v2676
    %v3099 = vpack.c.b16 %v2679, %v2678
    %v3100 = vpack.c.b16 %v2681, %v2680
    %v3101 = vpack.c.b16 %v2683, %v2682
    %v3102 = vpack.c.b16 %v2685, %v2684
    %v3103 = vpack.c.b16 %v2687, %v2686
    %v3104 = vpack.c.b16 %v2689, %v2688
    %v3105 = vpack.c.b16 %v2691, %v2690
    %v3106 = vpack.c.b16 %v2693, %v2692
    %v3107 = vpack.c.b16 %v2695, %v2694
    %v3108 = vpack.c.b16 %v2697, %v2696
    %v3109 = vpack.c.b16 %v2699, %v2698
    %v3110 = vpack.c.b16 %v2701, %v2700
    %v3111 = vpack.c.b16 %v2703, %v2702
    %v3112 = vpack.c.b16 %v2705, %v2704
    %v3113 = vpack.c.b16 %v2707, %v2706
    %v3114 = vpack.c.b16 %v2709, %v2708
    %v3115 = vpack.c.b16 %v2711, %v2710
    %v3116 = vpack.c.b16 %v2713, %v2712
    %v3117 = vpack.c.b16 %v2715, %v2714
    %v3118 = vpack.c.b16 %v2717, %v2716
    %v3119 = vpack.c.b16 %v2719, %v2718
    %v3120 = vpack.c.b16 %v2721, %v2720
    %v3121 = vpack.c.b16 %v2723, %v2722
    %v3122 = vpack.c.b16 %v2725, %v2724
    %v3123 = vpack.c.b16 %v2727, %v2726
    %v3124 = vpack.c.b16 %v2729, %v2728
    %v3125 = vpack.c.b16 %v2731, %v2730
    %v3126 = vpack.c.b16 %v2733, %v2732
    %v3127 = vpack.c.b16 %v2735, %v2734
    %v3128 = vpack.c.b16 %v2737, %v2736
    %v3129 = vpack.c.b16 %v2739, %v2738
    %v3130 = vpack.c.b16 %v2741, %v2740
    %v3131 = vpack.c.b16 %v2743, %v2742
    %v3132 = vpack.c.b16 %v2745, %v2744
    %v3133 = vpack.c.b16 %v2747, %v2746
    %v3134 = vpack.c.b16 %v2749, %v2748
    %v3135 = vpack.c.b16 %v2751, %v2750
    %v3136 = vpack.c.b16 %v2753, %v2752
    %v3137 = vpack.c.b16 %v2755, %v2754
    %v3138 = vpack.c.b16 %v2757, %v2756
    %v3139 = vpack.c.b16 %v2759, %v2758
    %v3140 = vpack.c.b16 %v2761, %v2760
    %v3141 = vpack.c.b16 %v2763, %v2762
    %v3142 = vpack.c.b16 %v2765, %v2764
    %v3143 = vpack.c.b16 %v2767, %v2766
    %v3144 = vpack.c.b16 %v2769, %v2768
    %v3145 = vpack.c.b16 %v2771, %v2770
    %v3146 = vpack.c.b16 %v2773, %v2772
    %v3147 = vpack.c.b16 %v2775, %v2774
    %v3148 = vpack.c.b16 %v2777, %v2776
    %v3149 = vpack.c.b16 %v2779, %v2778
    %v3150 = vpack.c.b16 %v2781, %v2780
    %v3151 = vpack.c.b16 %v2783, %v2782
    %v3152 = vpack.c.b16 %v2785, %v2784
    %v3153 = vpack.c.b16 %v2787, %v2786
    %v3154 = vpack.c.b16 %v2789, %v2788
    %v3155 = vpack.c.b16 %v2791, %v2790
    %v3156 = vpack.c.b16 %v2793, %v2792
    %v3157 = vpack.c.b16 %v2795, %v2794
    %v3158 = vpack.c.b16 %v2797, %v2796
    %v3159 = vpack.c.b16 %v2799, %v2798
    %v3160 = vpack.c.b16 %v2801, %v2800
    %v3161 = vpack.c.b16 %v2803, %v2802
    %v3162 = vpack.c.b16 %v2805, %v2804
    %v3163 = vpack.c.b16 %v2807, %v2806
    %v3164 = vpack.c.b16 %v2809, %v2808
    %v3165 = vpack.c.b16 %v2811, %v2810
    %v3166 = vpack.c.b16 %v2813, %v2812
    %v3167 = vpack.c.b16 %v2815, %v2814
    %v3168 = vpack.c.b16 %v2817, %v2816
    %v3169 = vpack.c.b16 %v2819, %v2818
    %v3170 = vpack.c.b16 %v2821, %v2820
    %v3171 = vpack.c.b16 %v2823, %v2822
    %v3172 = vpack.c.b16 %v2825, %v2824
    %v3173 = vpack.c.b16 %v2827, %v2826
    %v3174 = vpack.c.b16 %v2829, %v2828
    %v3175 = vpack.c.b16 %v2831, %v2830
    %v3176 = vpack.c.b16 %v2833, %v2832
    %v3177 = vpack.c.b16 %v2835, %v2834
    %v3178 = vpack.c.b16 %v2837, %v2836
    %v3179 = vpack.c.b16 %v2839, %v2838
    %v3180 = vpack.c.b16 %v2841, %v2840
    %v3181 = vpack.c.b16 %v2843, %v2842
    %v3182 = vpack.c.b16 %v2845, %v2844
    %v3183 = vpack.c.b16 %v2847, %v2846
    %v3184 = vpack.c.b16 %v2849, %v2848
    %v3185 = vpack.c.b16 %v2851, %v2850
    %v3186 = vpack.c.b16 %v2853, %v2852
    %v3187 = vpack.c.b16 %v2855, %v2854
    %v3188 = vpack.c.b16 %v2857, %v2856
    %v3189 = vpack.c.b16 %v2859, %v2858
    %v3190 = vpack.c.b16 %v2861, %v2860
    %v3191 = vpack.c.b16 %v2863, %v2862
    %v3192 = vpack.c.b16 %v2865, %v2864
    %v3193 = vpack.c.b16 %v2867, %v2866
    %v3194 = vpack.c.b16 %v2869, %v2868
    %v3195 = vpack.c.b16 %v2871, %v2870
    %v3196 = vpack.c.b16 %v2873, %v2872
    %v3197 = vpack.c.b16 %v2875, %v2874
    %v3198 = vpack.c.b16 %v2877, %v2876
    %v3199 = vpack.c.b16 %v2879, %v2878
    %v3200 = vpack.c.b16 %v2881, %v2880
    %v3201 = vpack.c.b16 %v2883, %v2882
    %v3202 = vpack.c.b16 %v2885, %v2884
    %v3203 = vpack.c.b16 %v2887, %v2886
    %v3204 = vpack.c.b16 %v2889, %v2888
    %v3205 = vpack.c.b16 %v2891, %v2890
    %v3206 = vpack.c.b16 %v2893, %v2892
    %v3207 = vpack.c.b16 %v2895, %v2894
    %v3208 = vpack.c.b16 %v2897, %v2896
    %v3209 = vpack.c.b16 %v2899, %v2898
    %v3210 = vpack.c.b16 %v2901, %v2900
    %v3211 = vpack.c.b16 %v2903, %v2902
    %v3212 = vpack.c.b16 %v2905, %v2904
    %v3213 = vpack.c.b16 %v2907, %v2906
    %v3214 = vpack.c.b16 %v2909, %v2908
    %v3215 = vpack.c.b16 %v2911, %v2910
    %v3216 = vpack.c.b16 %v2913, %v2912
    %v3217 = vpack.c.b16 %v2915, %v2914
    %v3218 = vpack.c.b16 %v2917, %v2916
    %v3219 = vpack.c.b16 %v2919, %v2918
    %v3220 = vpack.c.b16 %v2921, %v2920
    %v3221 = vpack.c.b16 %v2923, %v2922
    %v3222 = vpack.c.b16 %v2925, %v2924
    %v3223 = vpack.c.b16 %v2927, %v2926
    %v3224 = vpack.c.b16 %v2929, %v2928
    %v3225 = vpack.c.b16 %v2931, %v2930
    %v3226 = vpack.c.b16 %v2933, %v2932
    %v3227 = vpack.c.b16 %v2935, %v2934
    %v3228 = vpack.c.b16 %v2937, %v2936
    %v3229 = vpack.c.b16 %v2939, %v2938
    %v3230 = vpack.c.b16 %v2941, %v2940
    %v3231 = vpack.c.b16 %v2943, %v2942
    %v3232 = vpack.c.b16 %v2945, %v2944
    %v3233 = vpack.c.b16 %v2947, %v2946
    %v3234 = vpack.c.b16 %v2949, %v2948
    %v3235 = vpack.c.b16 %v2951, %v2950
    %v3236 = vpack.c.b16 %v2953, %v2952
    %v3237 = vpack.c.b16 %v2955, %v2954
    %v3238 = vpack.c.b16 %v2957, %v2956
    %v3239 = vpack.c.b16 %v2959, %v2958
    %v3240 = vpack.c.b16 %v2961, %v2960
    %v3241 = vpack.c.b16 %v2963, %v2962
    %v3242 = vpack.c.b16 %v2965, %v2964
    %v3243 = vpack.c.b16 %v2967, %v2966
    %v3244 = vpack.c.b16 %v2969, %v2968
    %v3245 = vpack.c.b16 %v2971, %v2970
    %v3246 = vpack.c.b16 %v2973, %v2972
    %v3247 = vpack.c.b16 %v2975, %v2974
    %v3248 = vpack.c.b16 %v2977, %v2976
    %v3249 = vpack.c.b16 %v2979, %v2978
    %v3250 = vpack.c.b16 %v2981, %v2980
    %v3251 = vpack.c.b16 %v2983, %v2982
    %v3252 = vpack.c.b16 %v2985, %v2984
    %v3253 = vpack.c.b16 %v2987, %v2986
    %v3254 = vpack.c.b16 %v2989, %v2988
    %v3255 = vpack.c.b16 %v2991, %v2990
    %v3256 = vpack.c.b16 %v2993, %v2992
    %v3257 = vpack.c.b16 %v2995, %v2994
    %v3258 = vpack.c.b16 %v2997, %v2996
    %v3259 = vpack.c.b16 %v2999, %v2998
    %v3260 = vpack.c.b16 %v3001, %v3000
    %v3261 = vpack.c.b16 %v3003, %v3002
    %v3262 = vpack.c.b16 %v3005, %v3004
    %v3263 = vpack.c.b16 %v3007, %v3006
    %3520 = vmatprep.subr.bf16.mxu0 0
    %3521 = vmatpush1.bf16.msra.mxu0 %v3008
    %3522 = vmatprep.subr.bf16.mxu0 0
    %3523 = vmatpush1.bf16.msra.mxu0 %v3009
    %3524 = vmatprep.subr.bf16.mxu0 0
    %3525 = vmatpush1.bf16.msra.mxu0 %v3010
    %3526 = vmatprep.subr.bf16.mxu0 0
    %3527 = vmatpush1.bf16.msra.mxu0 %v3011
    %3528 = vmatprep.subr.bf16.mxu0 0
    %3529 = vmatpush1.bf16.msra.mxu0 %v3012
    %3530 = vmatprep.subr.bf16.mxu0 0
    %3531 = vmatpush1.bf16.msra.mxu0 %v3013
    %3532 = vmatprep.subr.bf16.mxu0 0
    %3533 = vmatpush1.bf16.msra.mxu0 %v3014
    %3534 = vmatprep.subr.bf16.mxu0 0
    %3535 = vmatpush1.bf16.msra.mxu0 %v3015
    %3536 = vmatprep.subr.bf16.mxu0 0
    %3537 = vmatpush1.bf16.msra.mxu0 %v3016
    %3538 = vmatprep.subr.bf16.mxu0 0
    %3539 = vmatpush1.bf16.msra.mxu0 %v3017
    %3540 = vmatprep.subr.bf16.mxu0 0
    %3541 = vmatpush1.bf16.msra.mxu0 %v3018
    %3542 = vmatprep.subr.bf16.mxu0 0
    %3543 = vmatpush1.bf16.msra.mxu0 %v3019
    %3544 = vmatprep.subr.bf16.mxu0 0
    %3545 = vmatpush1.bf16.msra.mxu0 %v3020
    %3546 = vmatprep.subr.bf16.mxu0 0
    %3547 = vmatpush1.bf16.msra.mxu0 %v3021
    %3548 = vmatprep.subr.bf16.mxu0 0
    %3549 = vmatpush1.bf16.msra.mxu0 %v3022
    %3550 = vmatprep.subr.bf16.mxu0 0
    %3551 = vmatpush1.bf16.msra.mxu0 %v3023
    %3552 = vmatprep.mubr.bf16.mxu0 %v1434
    %3553 = vmatmul.mubr.bf16.gmra.mrb[0].mxu0 %v1433
    %v3554 = vpop.f32.mrb[0].mxu0
    %v3555 = vadd.f32 %v1982, %v3554
    %v3556 = vpop.f32.mrb[0].mxu0
    %v3557 = vpop.f32.mrb[0].mxu0
    %v3558 = vpop.f32.mrb[0].mxu0
    %3559 = vdwg.mxu0
    %3560 = vmatprep.subr.bf16.mxu0 0
    %3561 = vmatpush1.bf16.msra.mxu0 %v3024
    %3562 = vmatprep.subr.bf16.mxu0 0
    %3563 = vmatpush1.bf16.msra.mxu0 %v3025
    %3564 = vmatprep.subr.bf16.mxu0 0
    %3565 = vmatpush1.bf16.msra.mxu0 %v3026
    %3566 = vmatprep.subr.bf16.mxu0 0
    %3567 = vmatpush1.bf16.msra.mxu0 %v3027
    %3568 = vmatprep.subr.bf16.mxu0 0
    %3569 = vmatpush1.bf16.msra.mxu0 %v3028
    %3570 = vmatprep.subr.bf16.mxu0 0
    %3571 = vmatpush1.bf16.msra.mxu0 %v3029
    %3572 = vmatprep.subr.bf16.mxu0 0
    %3573 = vmatpush1.bf16.msra.mxu0 %v3030
    %3574 = vmatprep.subr.bf16.mxu0 0
    %3575 = vmatpush1.bf16.msra.mxu0 %v3031
    %3576 = vmatprep.subr.bf16.mxu0 0
    %3577 = vmatpush1.bf16.msra.mxu0 %v3032
    %3578 = vmatprep.subr.bf16.mxu0 0
    %3579 = vmatpush1.bf16.msra.mxu0 %v3033
    %3580 = vmatprep.subr.bf16.mxu0 0
    %3581 = vmatpush1.bf16.msra.mxu0 %v3034
    %3582 = vmatprep.subr.bf16.mxu0 0
    %3583 = vmatpush1.bf16.msra.mxu0 %v3035
    %3584 = vmatprep.subr.bf16.mxu0 0
    %3585 = vmatpush1.bf16.msra.mxu0 %v3036
    %3586 = vmatprep.subr.bf16.mxu0 0
    %3587 = vmatpush1.bf16.msra.mxu0 %v3037
    %3588 = vmatprep.subr.bf16.mxu0 0
    %3589 = vmatpush1.bf16.msra.mxu0 %v3038
    %3590 = vmatprep.subr.bf16.mxu0 0
    %3591 = vmatpush1.bf16.msra.mxu0 %v3039
    %3592 = vmatprep.mubr.bf16.mxu0 %v1436
    %3593 = vmatmul.mubr.bf16.gmra.mrb[0].mxu0 %v1435
    %v3594 = vpop.f32.mrb[0].mxu0
    %v3595 = vadd.f32 %v3555, %v3594
    %v3596 = vpop.f32.mrb[0].mxu0
    %v3597 = vpop.f32.mrb[0].mxu0
    %v3598 = vpop.f32.mrb[0].mxu0
    %3599 = vdwg.mxu0
    %3600 = vmatprep.subr.bf16.mxu0 0
    %3601 = vmatpush1.bf16.msra.mxu0 %v3040
    %3602 = vmatprep.subr.bf16.mxu0 0
    %3603 = vmatpush1.bf16.msra.mxu0 %v3041
    %3604 = vmatprep.subr.bf16.mxu0 0
    %3605 = vmatpush1.bf16.msra.mxu0 %v3042
    %3606 = vmatprep.subr.bf16.mxu0 0
    %3607 = vmatpush1.bf16.msra.mxu0 %v3043
    %3608 = vmatprep.subr.bf16.mxu0 0
    %3609 = vmatpush1.bf16.msra.mxu0 %v3044
    %3610 = vmatprep.subr.bf16.mxu0 0
    %3611 = vmatpush1.bf16.msra.mxu0 %v3045
    %3612 = vmatprep.subr.bf16.mxu0 0
    %3613 = vmatpush1.bf16.msra.mxu0 %v3046
    %3614 = vmatprep.subr.bf16.mxu0 0
    %3615 = vmatpush1.bf16.msra.mxu0 %v3047
    %3616 = vmatprep.subr.bf16.mxu0 0
    %3617 = vmatpush1.bf16.msra.mxu0 %v3048
    %3618 = vmatprep.subr.bf16.mxu0 0
    %3619 = vmatpush1.bf16.msra.mxu0 %v3049
    %3620 = vmatprep.subr.bf16.mxu0 0
    %3621 = vmatpush1.bf16.msra.mxu0 %v3050
    %3622 = vmatprep.subr.bf16.mxu0 0
    %3623 = vmatpush1.bf16.msra.mxu0 %v3051
    %3624 = vmatprep.subr.bf16.mxu0 0
    %3625 = vmatpush1.bf16.msra.mxu0 %v3052
    %3626 = vmatprep.subr.bf16.mxu0 0
    %3627 = vmatpush1.bf16.msra.mxu0 %v3053
    %3628 = vmatprep.subr.bf16.mxu0 0
    %3629 = vmatpush1.bf16.msra.mxu0 %v3054
    %3630 = vmatprep.subr.bf16.mxu0 0
    %3631 = vmatpush1.bf16.msra.mxu0 %v3055
    %3632 = vmatprep.mubr.bf16.mxu0 %v1438
    %3633 = vmatmul.mubr.bf16.gmra.mrb[0].mxu0 %v1437
    %v3634 = vpop.f32.mrb[0].mxu0
    %v3635 = vadd.f32 %v3595, %v3634
    %v3636 = vpop.f32.mrb[0].mxu0
    %v3637 = vpop.f32.mrb[0].mxu0
    %v3638 = vpop.f32.mrb[0].mxu0
    %3639 = vdwg.mxu0
    %3640 = vmatprep.subr.bf16.mxu0 0
    %3641 = vmatpush1.bf16.msra.mxu0 %v3056
    %3642 = vmatprep.subr.bf16.mxu0 0
    %3643 = vmatpush1.bf16.msra.mxu0 %v3057
    %3644 = vmatprep.subr.bf16.mxu0 0
    %3645 = vmatpush1.bf16.msra.mxu0 %v3058
    %3646 = vmatprep.subr.bf16.mxu0 0
    %3647 = vmatpush1.bf16.msra.mxu0 %v3059
    %3648 = vmatprep.subr.bf16.mxu0 0
    %3649 = vmatpush1.bf16.msra.mxu0 %v3060
    %3650 = vmatprep.subr.bf16.mxu0 0
    %3651 = vmatpush1.bf16.msra.mxu0 %v3061
    %3652 = vmatprep.subr.bf16.mxu0 0
    %3653 = vmatpush1.bf16.msra.mxu0 %v3062
    %3654 = vmatprep.subr.bf16.mxu0 0
    %3655 = vmatpush1.bf16.msra.mxu0 %v3063
    %3656 = vmatprep.subr.bf16.mxu0 0
    %3657 = vmatpush1.bf16.msra.mxu0 %v3064
    %3658 = vmatprep.subr.bf16.mxu0 0
    %3659 = vmatpush1.bf16.msra.mxu0 %v3065
    %3660 = vmatprep.subr.bf16.mxu0 0
    %3661 = vmatpush1.bf16.msra.mxu0 %v3066
    %3662 = vmatprep.subr.bf16.mxu0 0
    %3663 = vmatpush1.bf16.msra.mxu0 %v3067
    %3664 = vmatprep.subr.bf16.mxu0 0
    %3665 = vmatpush1.bf16.msra.mxu0 %v3068
    %3666 = vmatprep.subr.bf16.mxu0 0
    %3667 = vmatpush1.bf16.msra.mxu0 %v3069
    %3668 = vmatprep.subr.bf16.mxu0 0
    %3669 = vmatpush1.bf16.msra.mxu0 %v3070
    %3670 = vmatprep.subr.bf16.mxu0 0
    %3671 = vmatpush1.bf16.msra.mxu0 %v3071
    %3672 = vmatprep.mubr.bf16.mxu0 %v1440
    %3673 = vmatmul.mubr.bf16.gmra.mrb[0].mxu0 %v1439
    %v3674 = vpop.f32.mrb[0].mxu0
    %v3675 = vadd.f32 %v3635, %v3674
    %v3676 = vpop.f32.mrb[0].mxu0
    %v3677 = vpop.f32.mrb[0].mxu0
    %v3678 = vpop.f32.mrb[0].mxu0
    %3679 = vdwg.mxu0
    %3680 = vmatprep.subr.bf16.mxu0 0
    %3681 = vmatpush1.bf16.msra.mxu0 %v3072
    %3682 = vmatprep.subr.bf16.mxu0 0
    %3683 = vmatpush1.bf16.msra.mxu0 %v3073
    %3684 = vmatprep.subr.bf16.mxu0 0
    %3685 = vmatpush1.bf16.msra.mxu0 %v3074
    %3686 = vmatprep.subr.bf16.mxu0 0
    %3687 = vmatpush1.bf16.msra.mxu0 %v3075
    %3688 = vmatprep.subr.bf16.mxu0 0
    %3689 = vmatpush1.bf16.msra.mxu0 %v3076
    %3690 = vmatprep.subr.bf16.mxu0 0
    %3691 = vmatpush1.bf16.msra.mxu0 %v3077
    %3692 = vmatprep.subr.bf16.mxu0 0
    %3693 = vmatpush1.bf16.msra.mxu0 %v3078
    %3694 = vmatprep.subr.bf16.mxu0 0
    %3695 = vmatpush1.bf16.msra.mxu0 %v3079
    %3696 = vmatprep.subr.bf16.mxu0 0
    %3697 = vmatpush1.bf16.msra.mxu0 %v3080
    %3698 = vmatprep.subr.bf16.mxu0 0
    %3699 = vmatpush1.bf16.msra.mxu0 %v3081
    %3700 = vmatprep.subr.bf16.mxu0 0
    %3701 = vmatpush1.bf16.msra.mxu0 %v3082
    %3702 = vmatprep.subr.bf16.mxu0 0
    %3703 = vmatpush1.bf16.msra.mxu0 %v3083
    %3704 = vmatprep.subr.bf16.mxu0 0
    %3705 = vmatpush1.bf16.msra.mxu0 %v3084
    %3706 = vmatprep.subr.bf16.mxu0 0
    %3707 = vmatpush1.bf16.msra.mxu0 %v3085
    %3708 = vmatprep.subr.bf16.mxu0 0
    %3709 = vmatpush1.bf16.msra.mxu0 %v3086
    %3710 = vmatprep.subr.bf16.mxu0 0
    %3711 = vmatpush1.bf16.msra.mxu0 %v3087
    %3712 = vmatprep.mubr.bf16.mxu0 %v1442
    %3713 = vmatmul.mubr.bf16.gmra.mrb[0].mxu0 %v1441
    %v3714 = vpop.f32.mrb[0].mxu0
    %v3715 = vadd.f32 %v3675, %v3714
    %v3716 = vpop.f32.mrb[0].mxu0
    %v3717 = vpop.f32.mrb[0].mxu0
    %v3718 = vpop.f32.mrb[0].mxu0
    %3719 = vdwg.mxu0
    %3720 = vmatprep.subr.bf16.mxu0 0
    %3721 = vmatpush1.bf16.msra.mxu0 %v3088
    %3722 = vmatprep.subr.bf16.mxu0 0
    %3723 = vmatpush1.bf16.msra.mxu0 %v3089
    %3724 = vmatprep.subr.bf16.mxu0 0
    %3725 = vmatpush1.bf16.msra.mxu0 %v3090
    %3726 = vmatprep.subr.bf16.mxu0 0
    %3727 = vmatpush1.bf16.msra.mxu0 %v3091
    %3728 = vmatprep.subr.bf16.mxu0 0
    %3729 = vmatpush1.bf16.msra.mxu0 %v3092
    %3730 = vmatprep.subr.bf16.mxu0 0
    %3731 = vmatpush1.bf16.msra.mxu0 %v3093
    %3732 = vmatprep.subr.bf16.mxu0 0
    %3733 = vmatpush1.bf16.msra.mxu0 %v3094
    %3734 = vmatprep.subr.bf16.mxu0 0
    %3735 = vmatpush1.bf16.msra.mxu0 %v3095
    %3736 = vmatprep.subr.bf16.mxu0 0
    %3737 = vmatpush1.bf16.msra.mxu0 %v3096
    %3738 = vmatprep.subr.bf16.mxu0 0
    %3739 = vmatpush1.bf16.msra.mxu0 %v3097
    %3740 = vmatprep.subr.bf16.mxu0 0
    %3741 = vmatpush1.bf16.msra.mxu0 %v3098
    %3742 = vmatprep.subr.bf16.mxu0 0
    %3743 = vmatpush1.bf16.msra.mxu0 %v3099
    %3744 = vmatprep.subr.bf16.mxu0 0
    %3745 = vmatpush1.bf16.msra.mxu0 %v3100
    %3746 = vmatprep.subr.bf16.mxu0 0
    %3747 = vmatpush1.bf16.msra.mxu0 %v3101
    %3748 = vmatprep.subr.bf16.mxu0 0
    %3749 = vmatpush1.bf16.msra.mxu0 %v3102
    %3750 = vmatprep.subr.bf16.mxu0 0
    %3751 = vmatpush1.bf16.msra.mxu0 %v3103
    %3752 = vmatprep.mubr.bf16.mxu0 %v1444
    %3753 = vmatmul.mubr.bf16.gmra.mrb[0].mxu0 %v1443
    %v3754 = vpop.f32.mrb[0].mxu0
    %v3755 = vadd.f32 %v3715, %v3754
    %v3756 = vpop.f32.mrb[0].mxu0
    %v3757 = vpop.f32.mrb[0].mxu0
    %v3758 = vpop.f32.mrb[0].mxu0
    %3759 = vdwg.mxu0
    %3760 = vmatprep.subr.bf16.mxu0 0
    %3761 = vmatpush1.bf16.msra.mxu0 %v3104
    %3762 = vmatprep.subr.bf16.mxu0 0
    %3763 = vmatpush1.bf16.msra.mxu0 %v3105
    %3764 = vmatprep.subr.bf16.mxu0 0
    %3765 = vmatpush1.bf16.msra.mxu0 %v3106
    %3766 = vmatprep.subr.bf16.mxu0 0
    %3767 = vmatpush1.bf16.msra.mxu0 %v3107
    %3768 = vmatprep.subr.bf16.mxu0 0
    %3769 = vmatpush1.bf16.msra.mxu0 %v3108
    %3770 = vmatprep.subr.bf16.mxu0 0
    %3771 = vmatpush1.bf16.msra.mxu0 %v3109
    %3772 = vmatprep.subr.bf16.mxu0 0
    %3773 = vmatpush1.bf16.msra.mxu0 %v3110
    %3774 = vmatprep.subr.bf16.mxu0 0
    %3775 = vmatpush1.bf16.msra.mxu0 %v3111
    %3776 = vmatprep.subr.bf16.mxu0 0
    %3777 = vmatpush1.bf16.msra.mxu0 %v3112
    %3778 = vmatprep.subr.bf16.mxu0 0
    %3779 = vmatpush1.bf16.msra.mxu0 %v3113
    %3780 = vmatprep.subr.bf16.mxu0 0
    %3781 = vmatpush1.bf16.msra.mxu0 %v3114
    %3782 = vmatprep.subr.bf16.mxu0 0
    %3783 = vmatpush1.bf16.msra.mxu0 %v3115
    %3784 = vmatprep.subr.bf16.mxu0 0
    %3785 = vmatpush1.bf16.msra.mxu0 %v3116
    %3786 = vmatprep.subr.bf16.mxu0 0
    %3787 = vmatpush1.bf16.msra.mxu0 %v3117
    %3788 = vmatprep.subr.bf16.mxu0 0
    %3789 = vmatpush1.bf16.msra.mxu0 %v3118
    %3790 = vmatprep.subr.bf16.mxu0 0
    %3791 = vmatpush1.bf16.msra.mxu0 %v3119
    %3792 = vmatprep.mubr.bf16.mxu0 %v1446
    %3793 = vmatmul.mubr.bf16.gmra.mrb[0].mxu0 %v1445
    %v3794 = vpop.f32.mrb[0].mxu0
    %v3795 = vadd.f32 %v3755, %v3794
    %v3796 = vpop.f32.mrb[0].mxu0
    %v3797 = vpop.f32.mrb[0].mxu0
    %v3798 = vpop.f32.mrb[0].mxu0
    %3799 = vdwg.mxu0
    %3800 = vmatprep.subr.bf16.mxu0 0
    %3801 = vmatpush1.bf16.msra.mxu0 %v3120
    %3802 = vmatprep.subr.bf16.mxu0 0
    %3803 = vmatpush1.bf16.msra.mxu0 %v3121
    %3804 = vmatprep.subr.bf16.mxu0 0
    %3805 = vmatpush1.bf16.msra.mxu0 %v3122
    %3806 = vmatprep.subr.bf16.mxu0 0
    %3807 = vmatpush1.bf16.msra.mxu0 %v3123
    %3808 = vmatprep.subr.bf16.mxu0 0
    %3809 = vmatpush1.bf16.msra.mxu0 %v3124
    %3810 = vmatprep.subr.bf16.mxu0 0
    %3811 = vmatpush1.bf16.msra.mxu0 %v3125
    %3812 = vmatprep.subr.bf16.mxu0 0
    %3813 = vmatpush1.bf16.msra.mxu0 %v3126
    %3814 = vmatprep.subr.bf16.mxu0 0
    %3815 = vmatpush1.bf16.msra.mxu0 %v3127
    %3816 = vmatprep.subr.bf16.mxu0 0
    %3817 = vmatpush1.bf16.msra.mxu0 %v3128
    %3818 = vmatprep.subr.bf16.mxu0 0
    %3819 = vmatpush1.bf16.msra.mxu0 %v3129
    %3820 = vmatprep.subr.bf16.mxu0 0
    %3821 = vmatpush1.bf16.msra.mxu0 %v3130
    %3822 = vmatprep.subr.bf16.mxu0 0
    %3823 = vmatpush1.bf16.msra.mxu0 %v3131
    %3824 = vmatprep.subr.bf16.mxu0 0
    %3825 = vmatpush1.bf16.msra.mxu0 %v3132
    %3826 = vmatprep.subr.bf16.mxu0 0
    %3827 = vmatpush1.bf16.msra.mxu0 %v3133
    %3828 = vmatprep.subr.bf16.mxu0 0
    %3829 = vmatpush1.bf16.msra.mxu0 %v3134
    %3830 = vmatprep.subr.bf16.mxu0 0
    %3831 = vmatpush1.bf16.msra.mxu0 %v3135
    %3832 = vmatprep.mubr.bf16.mxu0 %v1448
    %3833 = vmatmul.mubr.bf16.gmra.mrb[0].mxu0 %v1447
    %v3834 = vpop.f32.mrb[0].mxu0
    %v3835 = vadd.f32 %v3795, %v3834
    %v3836 = vpop.f32.mrb[0].mxu0
    %v3837 = vpop.f32.mrb[0].mxu0
    %v3838 = vpop.f32.mrb[0].mxu0
    %3839 = vdwg.mxu0
    %3840 = vmatprep.subr.bf16.mxu0 0
    %3841 = vmatpush1.bf16.msra.mxu0 %v3136
    %3842 = vmatprep.subr.bf16.mxu0 0
    %3843 = vmatpush1.bf16.msra.mxu0 %v3137
    %3844 = vmatprep.subr.bf16.mxu0 0
    %3845 = vmatpush1.bf16.msra.mxu0 %v3138
    %3846 = vmatprep.subr.bf16.mxu0 0
    %3847 = vmatpush1.bf16.msra.mxu0 %v3139
    %3848 = vmatprep.subr.bf16.mxu0 0
    %3849 = vmatpush1.bf16.msra.mxu0 %v3140
    %3850 = vmatprep.subr.bf16.mxu0 0
    %3851 = vmatpush1.bf16.msra.mxu0 %v3141
    %3852 = vmatprep.subr.bf16.mxu0 0
    %3853 = vmatpush1.bf16.msra.mxu0 %v3142
    %3854 = vmatprep.subr.bf16.mxu0 0
    %3855 = vmatpush1.bf16.msra.mxu0 %v3143
    %3856 = vmatprep.subr.bf16.mxu0 0
    %3857 = vmatpush1.bf16.msra.mxu0 %v3144
    %3858 = vmatprep.subr.bf16.mxu0 0
    %3859 = vmatpush1.bf16.msra.mxu0 %v3145
    %3860 = vmatprep.subr.bf16.mxu0 0
    %3861 = vmatpush1.bf16.msra.mxu0 %v3146
    %3862 = vmatprep.subr.bf16.mxu0 0
    %3863 = vmatpush1.bf16.msra.mxu0 %v3147
    %3864 = vmatprep.subr.bf16.mxu0 0
    %3865 = vmatpush1.bf16.msra.mxu0 %v3148
    %3866 = vmatprep.subr.bf16.mxu0 0
    %3867 = vmatpush1.bf16.msra.mxu0 %v3149
    %3868 = vmatprep.subr.bf16.mxu0 0
    %3869 = vmatpush1.bf16.msra.mxu0 %v3150
    %3870 = vmatprep.subr.bf16.mxu0 0
    %3871 = vmatpush1.bf16.msra.mxu0 %v3151
    %3872 = vmatprep.mubr.bf16.mxu0 %v1450
    %3873 = vmatmul.mubr.bf16.gmra.mrb[0].mxu0 %v1449
    %v3874 = vpop.f32.mrb[0].mxu0
    %v3875 = vadd.f32 %v3835, %v3874
    %v3876 = vpop.f32.mrb[0].mxu0
    %v3877 = vpop.f32.mrb[0].mxu0
    %v3878 = vpop.f32.mrb[0].mxu0
    %3879 = vdwg.mxu0
    %3880 = vmatprep.subr.bf16.mxu0 0
    %3881 = vmatpush1.bf16.msra.mxu0 %v3152
    %3882 = vmatprep.subr.bf16.mxu0 0
    %3883 = vmatpush1.bf16.msra.mxu0 %v3153
    %3884 = vmatprep.subr.bf16.mxu0 0
    %3885 = vmatpush1.bf16.msra.mxu0 %v3154
    %3886 = vmatprep.subr.bf16.mxu0 0
    %3887 = vmatpush1.bf16.msra.mxu0 %v3155
    %3888 = vmatprep.subr.bf16.mxu0 0
    %3889 = vmatpush1.bf16.msra.mxu0 %v3156
    %3890 = vmatprep.subr.bf16.mxu0 0
    %3891 = vmatpush1.bf16.msra.mxu0 %v3157
    %3892 = vmatprep.subr.bf16.mxu0 0
    %3893 = vmatpush1.bf16.msra.mxu0 %v3158
    %3894 = vmatprep.subr.bf16.mxu0 0
    %3895 = vmatpush1.bf16.msra.mxu0 %v3159
    %3896 = vmatprep.subr.bf16.mxu0 0
    %3897 = vmatpush1.bf16.msra.mxu0 %v3160
    %3898 = vmatprep.subr.bf16.mxu0 0
    %3899 = vmatpush1.bf16.msra.mxu0 %v3161
    %3900 = vmatprep.subr.bf16.mxu0 0
    %3901 = vmatpush1.bf16.msra.mxu0 %v3162
    %3902 = vmatprep.subr.bf16.mxu0 0
    %3903 = vmatpush1.bf16.msra.mxu0 %v3163
    %3904 = vmatprep.subr.bf16.mxu0 0
    %3905 = vmatpush1.bf16.msra.mxu0 %v3164
    %3906 = vmatprep.subr.bf16.mxu0 0
    %3907 = vmatpush1.bf16.msra.mxu0 %v3165
    %3908 = vmatprep.subr.bf16.mxu0 0
    %3909 = vmatpush1.bf16.msra.mxu0 %v3166
    %3910 = vmatprep.subr.bf16.mxu0 0
    %3911 = vmatpush1.bf16.msra.mxu0 %v3167
    %3912 = vmatprep.mubr.bf16.mxu0 %v1452
    %3913 = vmatmul.mubr.bf16.gmra.mrb[0].mxu0 %v1451
    %v3914 = vpop.f32.mrb[0].mxu0
    %v3915 = vadd.f32 %v3875, %v3914
    %v3916 = vpop.f32.mrb[0].mxu0
    %v3917 = vpop.f32.mrb[0].mxu0
    %v3918 = vpop.f32.mrb[0].mxu0
    %3919 = vdwg.mxu0
    %3920 = vmatprep.subr.bf16.mxu0 0
    %3921 = vmatpush1.bf16.msra.mxu0 %v3168
    %3922 = vmatprep.subr.bf16.mxu0 0
    %3923 = vmatpush1.bf16.msra.mxu0 %v3169
    %3924 = vmatprep.subr.bf16.mxu0 0
    %3925 = vmatpush1.bf16.msra.mxu0 %v3170
    %3926 = vmatprep.subr.bf16.mxu0 0
    %3927 = vmatpush1.bf16.msra.mxu0 %v3171
    %3928 = vmatprep.subr.bf16.mxu0 0
    %3929 = vmatpush1.bf16.msra.mxu0 %v3172
    %3930 = vmatprep.subr.bf16.mxu0 0
    %3931 = vmatpush1.bf16.msra.mxu0 %v3173
    %3932 = vmatprep.subr.bf16.mxu0 0
    %3933 = vmatpush1.bf16.msra.mxu0 %v3174
    %3934 = vmatprep.subr.bf16.mxu0 0
    %3935 = vmatpush1.bf16.msra.mxu0 %v3175
    %3936 = vmatprep.subr.bf16.mxu0 0
    %3937 = vmatpush1.bf16.msra.mxu0 %v3176
    %3938 = vmatprep.subr.bf16.mxu0 0
    %3939 = vmatpush1.bf16.msra.mxu0 %v3177
    %3940 = vmatprep.subr.bf16.mxu0 0
    %3941 = vmatpush1.bf16.msra.mxu0 %v3178
    %3942 = vmatprep.subr.bf16.mxu0 0
    %3943 = vmatpush1.bf16.msra.mxu0 %v3179
    %3944 = vmatprep.subr.bf16.mxu0 0
    %3945 = vmatpush1.bf16.msra.mxu0 %v3180
    %3946 = vmatprep.subr.bf16.mxu0 0
    %3947 = vmatpush1.bf16.msra.mxu0 %v3181
    %3948 = vmatprep.subr.bf16.mxu0 0
    %3949 = vmatpush1.bf16.msra.mxu0 %v3182
    %3950 = vmatprep.subr.bf16.mxu0 0
    %3951 = vmatpush1.bf16.msra.mxu0 %v3183
    %3952 = vmatprep.mubr.bf16.mxu0 %v1454
    %3953 = vmatmul.mubr.bf16.gmra.mrb[0].mxu0 %v1453
    %v3954 = vpop.f32.mrb[0].mxu0
    %v3955 = vadd.f32 %v3915, %v3954
    %v3956 = vpop.f32.mrb[0].mxu0
    %v3957 = vpop.f32.mrb[0].mxu0
    %v3958 = vpop.f32.mrb[0].mxu0
    %3959 = vdwg.mxu0
    %3960 = vmatprep.subr.bf16.mxu0 0
    %3961 = vmatpush1.bf16.msra.mxu0 %v3184
    %3962 = vmatprep.subr.bf16.mxu0 0
    %3963 = vmatpush1.bf16.msra.mxu0 %v3185
    %3964 = vmatprep.subr.bf16.mxu0 0
    %3965 = vmatpush1.bf16.msra.mxu0 %v3186
    %3966 = vmatprep.subr.bf16.mxu0 0
    %3967 = vmatpush1.bf16.msra.mxu0 %v3187
    %3968 = vmatprep.subr.bf16.mxu0 0
    %3969 = vmatpush1.bf16.msra.mxu0 %v3188
    %3970 = vmatprep.subr.bf16.mxu0 0
    %3971 = vmatpush1.bf16.msra.mxu0 %v3189
    %3972 = vmatprep.subr.bf16.mxu0 0
    %3973 = vmatpush1.bf16.msra.mxu0 %v3190
    %3974 = vmatprep.subr.bf16.mxu0 0
    %3975 = vmatpush1.bf16.msra.mxu0 %v3191
    %3976 = vmatprep.subr.bf16.mxu0 0
    %3977 = vmatpush1.bf16.msra.mxu0 %v3192
    %3978 = vmatprep.subr.bf16.mxu0 0
    %3979 = vmatpush1.bf16.msra.mxu0 %v3193
    %3980 = vmatprep.subr.bf16.mxu0 0
    %3981 = vmatpush1.bf16.msra.mxu0 %v3194
    %3982 = vmatprep.subr.bf16.mxu0 0
    %3983 = vmatpush1.bf16.msra.mxu0 %v3195
    %3984 = vmatprep.subr.bf16.mxu0 0
    %3985 = vmatpush1.bf16.msra.mxu0 %v3196
    %3986 = vmatprep.subr.bf16.mxu0 0
    %3987 = vmatpush1.bf16.msra.mxu0 %v3197
    %3988 = vmatprep.subr.bf16.mxu0 0
    %3989 = vmatpush1.bf16.msra.mxu0 %v3198
    %3990 = vmatprep.subr.bf16.mxu0 0
    %3991 = vmatpush1.bf16.msra.mxu0 %v3199
    %3992 = vmatprep.mubr.bf16.mxu0 %v1456
    %3993 = vmatmul.mubr.bf16.gmra.mrb[0].mxu0 %v1455
    %v3994 = vpop.f32.mrb[0].mxu0
    %v3995 = vadd.f32 %v3955, %v3994
    %v3996 = vpop.f32.mrb[0].mxu0
    %v3997 = vpop.f32.mrb[0].mxu0
    %v3998 = vpop.f32.mrb[0].mxu0
    %3999 = vdwg.mxu0
    %4000 = vmatprep.subr.bf16.mxu0 0
    %4001 = vmatpush1.bf16.msra.mxu0 %v3200
    %4002 = vmatprep.subr.bf16.mxu0 0
    %4003 = vmatpush1.bf16.msra.mxu0 %v3201
    %4004 = vmatprep.subr.bf16.mxu0 0
    %4005 = vmatpush1.bf16.msra.mxu0 %v3202
    %4006 = vmatprep.subr.bf16.mxu0 0
    %4007 = vmatpush1.bf16.msra.mxu0 %v3203
    %4008 = vmatprep.subr.bf16.mxu0 0
    %4009 = vmatpush1.bf16.msra.mxu0 %v3204
    %4010 = vmatprep.subr.bf16.mxu0 0
    %4011 = vmatpush1.bf16.msra.mxu0 %v3205
    %4012 = vmatprep.subr.bf16.mxu0 0
    %4013 = vmatpush1.bf16.msra.mxu0 %v3206
    %4014 = vmatprep.subr.bf16.mxu0 0
    %4015 = vmatpush1.bf16.msra.mxu0 %v3207
    %4016 = vmatprep.subr.bf16.mxu0 0
    %4017 = vmatpush1.bf16.msra.mxu0 %v3208
    %4018 = vmatprep.subr.bf16.mxu0 0
    %4019 = vmatpush1.bf16.msra.mxu0 %v3209
    %4020 = vmatprep.subr.bf16.mxu0 0
    %4021 = vmatpush1.bf16.msra.mxu0 %v3210
    %4022 = vmatprep.subr.bf16.mxu0 0
    %4023 = vmatpush1.bf16.msra.mxu0 %v3211
    %4024 = vmatprep.subr.bf16.mxu0 0
    %4025 = vmatpush1.bf16.msra.mxu0 %v3212
    %4026 = vmatprep.subr.bf16.mxu0 0
    %4027 = vmatpush1.bf16.msra.mxu0 %v3213
    %4028 = vmatprep.subr.bf16.mxu0 0
    %4029 = vmatpush1.bf16.msra.mxu0 %v3214
    %4030 = vmatprep.subr.bf16.mxu0 0
    %4031 = vmatpush1.bf16.msra.mxu0 %v3215
    %4032 = vmatprep.mubr.bf16.mxu0 %v1458
    %4033 = vmatmul.mubr.bf16.gmra.mrb[0].mxu0 %v1457
    %v4034 = vpop.f32.mrb[0].mxu0
    %v4035 = vadd.f32 %v3995, %v4034
    %v4036 = vpop.f32.mrb[0].mxu0
    %v4037 = vpop.f32.mrb[0].mxu0
    %v4038 = vpop.f32.mrb[0].mxu0
    %4039 = vdwg.mxu0
    %4040 = vmatprep.subr.bf16.mxu0 0
    %4041 = vmatpush1.bf16.msra.mxu0 %v3216
    %4042 = vmatprep.subr.bf16.mxu0 0
    %4043 = vmatpush1.bf16.msra.mxu0 %v3217
    %4044 = vmatprep.subr.bf16.mxu0 0
    %4045 = vmatpush1.bf16.msra.mxu0 %v3218
    %4046 = vmatprep.subr.bf16.mxu0 0
    %4047 = vmatpush1.bf16.msra.mxu0 %v3219
    %4048 = vmatprep.subr.bf16.mxu0 0
    %4049 = vmatpush1.bf16.msra.mxu0 %v3220
    %4050 = vmatprep.subr.bf16.mxu0 0
    %4051 = vmatpush1.bf16.msra.mxu0 %v3221
    %4052 = vmatprep.subr.bf16.mxu0 0
    %4053 = vmatpush1.bf16.msra.mxu0 %v3222
    %4054 = vmatprep.subr.bf16.mxu0 0
    %4055 = vmatpush1.bf16.msra.mxu0 %v3223
    %4056 = vmatprep.subr.bf16.mxu0 0
    %4057 = vmatpush1.bf16.msra.mxu0 %v3224
    %4058 = vmatprep.subr.bf16.mxu0 0
    %4059 = vmatpush1.bf16.msra.mxu0 %v3225
    %4060 = vmatprep.subr.bf16.mxu0 0
    %4061 = vmatpush1.bf16.msra.mxu0 %v3226
    %4062 = vmatprep.subr.bf16.mxu0 0
    %4063 = vmatpush1.bf16.msra.mxu0 %v3227
    %4064 = vmatprep.subr.bf16.mxu0 0
    %4065 = vmatpush1.bf16.msra.mxu0 %v3228
    %4066 = vmatprep.subr.bf16.mxu0 0
    %4067 = vmatpush1.bf16.msra.mxu0 %v3229
    %4068 = vmatprep.subr.bf16.mxu0 0
    %4069 = vmatpush1.bf16.msra.mxu0 %v3230
    %4070 = vmatprep.subr.bf16.mxu0 0
    %4071 = vmatpush1.bf16.msra.mxu0 %v3231
    %4072 = vmatprep.mubr.bf16.mxu0 %v1460
    %4073 = vmatmul.mubr.bf16.gmra.mrb[0].mxu0 %v1459
    %v4074 = vpop.f32.mrb[0].mxu0
    %v4075 = vadd.f32 %v4035, %v4074
    %v4076 = vpop.f32.mrb[0].mxu0
    %v4077 = vpop.f32.mrb[0].mxu0
    %v4078 = vpop.f32.mrb[0].mxu0
    %4079 = vdwg.mxu0
    %4080 = vmatprep.subr.bf16.mxu0 0
    %4081 = vmatpush1.bf16.msra.mxu0 %v3232
    %4082 = vmatprep.subr.bf16.mxu0 0
    %4083 = vmatpush1.bf16.msra.mxu0 %v3233
    %4084 = vmatprep.subr.bf16.mxu0 0
    %4085 = vmatpush1.bf16.msra.mxu0 %v3234
    %4086 = vmatprep.subr.bf16.mxu0 0
    %4087 = vmatpush1.bf16.msra.mxu0 %v3235
    %4088 = vmatprep.subr.bf16.mxu0 0
    %4089 = vmatpush1.bf16.msra.mxu0 %v3236
    %4090 = vmatprep.subr.bf16.mxu0 0
    %4091 = vmatpush1.bf16.msra.mxu0 %v3237
    %4092 = vmatprep.subr.bf16.mxu0 0
    %4093 = vmatpush1.bf16.msra.mxu0 %v3238
    %4094 = vmatprep.subr.bf16.mxu0 0
    %4095 = vmatpush1.bf16.msra.mxu0 %v3239
    %4096 = vmatprep.subr.bf16.mxu0 0
    %4097 = vmatpush1.bf16.msra.mxu0 %v3240
    %4098 = vmatprep.subr.bf16.mxu0 0
    %4099 = vmatpush1.bf16.msra.mxu0 %v3241
    %4100 = vmatprep.subr.bf16.mxu0 0
    %4101 = vmatpush1.bf16.msra.mxu0 %v3242
    %4102 = vmatprep.subr.bf16.mxu0 0
    %4103 = vmatpush1.bf16.msra.mxu0 %v3243
    %4104 = vmatprep.subr.bf16.mxu0 0
    %4105 = vmatpush1.bf16.msra.mxu0 %v3244
    %4106 = vmatprep.subr.bf16.mxu0 0
    %4107 = vmatpush1.bf16.msra.mxu0 %v3245
    %4108 = vmatprep.subr.bf16.mxu0 0
    %4109 = vmatpush1.bf16.msra.mxu0 %v3246
    %4110 = vmatprep.subr.bf16.mxu0 0
    %4111 = vmatpush1.bf16.msra.mxu0 %v3247
    %4112 = vmatprep.mubr.bf16.mxu0 %v1462
    %4113 = vmatmul.mubr.bf16.gmra.mrb[0].mxu0 %v1461
    %v4114 = vpop.f32.mrb[0].mxu0
    %v4115 = vadd.f32 %v4075, %v4114
    %v4116 = vpop.f32.mrb[0].mxu0
    %v4117 = vpop.f32.mrb[0].mxu0
    %v4118 = vpop.f32.mrb[0].mxu0
    %4119 = vdwg.mxu0
    %4120 = vmatprep.subr.bf16.mxu0 0
    %4121 = vmatpush1.bf16.msra.mxu0 %v3248
    %4122 = vmatprep.subr.bf16.mxu0 0
    %4123 = vmatpush1.bf16.msra.mxu0 %v3249
    %4124 = vmatprep.subr.bf16.mxu0 0
    %4125 = vmatpush1.bf16.msra.mxu0 %v3250
    %4126 = vmatprep.subr.bf16.mxu0 0
    %4127 = vmatpush1.bf16.msra.mxu0 %v3251
    %4128 = vmatprep.subr.bf16.mxu0 0
    %4129 = vmatpush1.bf16.msra.mxu0 %v3252
    %4130 = vmatprep.subr.bf16.mxu0 0
    %4131 = vmatpush1.bf16.msra.mxu0 %v3253
    %4132 = vmatprep.subr.bf16.mxu0 0
    %4133 = vmatpush1.bf16.msra.mxu0 %v3254
    %4134 = vmatprep.subr.bf16.mxu0 0
    %4135 = vmatpush1.bf16.msra.mxu0 %v3255
    %4136 = vmatprep.subr.bf16.mxu0 0
    %4137 = vmatpush1.bf16.msra.mxu0 %v3256
    %4138 = vmatprep.subr.bf16.mxu0 0
    %4139 = vmatpush1.bf16.msra.mxu0 %v3257
    %4140 = vmatprep.subr.bf16.mxu0 0
    %4141 = vmatpush1.bf16.msra.mxu0 %v3258
    %4142 = vmatprep.subr.bf16.mxu0 0
    %4143 = vmatpush1.bf16.msra.mxu0 %v3259
    %4144 = vmatprep.subr.bf16.mxu0 0
    %4145 = vmatpush1.bf16.msra.mxu0 %v3260
    %4146 = vmatprep.subr.bf16.mxu0 0
    %4147 = vmatpush1.bf16.msra.mxu0 %v3261
    %4148 = vmatprep.subr.bf16.mxu0 0
    %4149 = vmatpush1.bf16.msra.mxu0 %v3262
    %4150 = vmatprep.subr.bf16.mxu0 0
    %4151 = vmatpush1.bf16.msra.mxu0 %v3263
    %4152 = vmatprep.mubr.bf16.mxu0 %v1464
    %4153 = vmatmul.mubr.bf16.gmra.mrb[0].mxu0 %v1463
    %v4154 = vpop.f32.mrb[0].mxu0
    %v4155 = vadd.f32 %v4115, %v4154
    %v4156 = vpop.f32.mrb[0].mxu0
    %v4157 = vpop.f32.mrb[0].mxu0
    %v4158 = vpop.f32.mrb[0].mxu0
    %4159 = vdwg.mxu0
    %v4160 = vmax.f32 %v4155, 0.0
    %v4161 = vpack.c.bf16 %v4160, %v4160
    %v4162 = vld [vmem:[%s7] sm:$0xf]
    %v4163 = vld [vmem:[%s7 + $0x4] sm:$0xf]
    %v4164 = vld [vmem:[%s7 + $0x8] sm:$0xf]
    %v4165 = vld [vmem:[%s7 + $0xc] sm:$0xf]
    %v4166 = vld [vmem:[%s7 + $0x10] sm:$0xf]
    %v4167 = vld [vmem:[%s7 + $0x14] sm:$0xf]
    %v4168 = vld [vmem:[%s7 + $0x18] sm:$0xf]
    %v4169 = vld [vmem:[%s7 + $0x1c] sm:$0xf]
    %v4170 = vld [vmem:[%s7 + $0x20] sm:$0xf]
    %v4171 = vld [vmem:[%s7 + $0x24] sm:$0xf]
    %v4172 = vld [vmem:[%s7 + $0x28] sm:$0xf]
    %v4173 = vld [vmem:[%s7 + $0x2c] sm:$0xf]
    %v4174 = vld [vmem:[%s7 + $0x30] sm:$0xf]
    %v4175 = vld [vmem:[%s7 + $0x34] sm:$0xf]
    %v4176 = vld [vmem:[%s7 + $0x38] sm:$0xf]
    %v4177 = vld [vmem:[%s7 + $0x3c] sm:$0xf]
    %v4178 = vld [vmem:[%s8] sm:$0x1]
    %v4180 = vlaneseq
    %v4181 = vshrl.u32 %v4180, 7
    %v4182 = vsub.s32 0, %v4181
    %v4183 = vrot.slane %v4178, %v4182
    %v4201 = vunpack.c.l.b16 %v4162
    %v4202 = vunpack.c.l.b16 %v4163
    %v4203 = vunpack.c.l.b16 %v4164
    %v4204 = vunpack.c.l.b16 %v4165
    %v4205 = vunpack.c.l.b16 %v4166
    %v4206 = vunpack.c.l.b16 %v4167
    %v4207 = vunpack.c.l.b16 %v4168
    %v4208 = vunpack.c.l.b16 %v4169
    %v4209 = vunpack.c.l.b16 %v4170
    %v4210 = vunpack.c.l.b16 %v4171
    %v4211 = vunpack.c.l.b16 %v4172
    %v4212 = vunpack.c.l.b16 %v4173
    %v4213 = vunpack.c.l.b16 %v4174
    %v4214 = vunpack.c.l.b16 %v4175
    %v4215 = vunpack.c.l.b16 %v4176
    %v4216 = vunpack.c.l.b16 %v4177
    %v4217 = vpack.c.b16 %v4202, %v4201
    %v4218 = vpack.c.b16 %v4204, %v4203
    %v4219 = vpack.c.b16 %v4206, %v4205
    %v4220 = vpack.c.b16 %v4208, %v4207
    %v4221 = vpack.c.b16 %v4210, %v4209
    %v4222 = vpack.c.b16 %v4212, %v4211
    %v4223 = vpack.c.b16 %v4214, %v4213
    %v4224 = vpack.c.b16 %v4216, %v4215
    %4233 = vmatprep.subr.bf16.mxu0 0
    %4234 = vmatpush1.bf16.msra.mxu0 %v4217
    %4235 = vmatprep.subr.bf16.mxu0 0
    %4236 = vmatpush1.bf16.msra.mxu0 %v4218
    %4237 = vmatprep.subr.bf16.mxu0 0
    %4238 = vmatpush1.bf16.msra.mxu0 %v4219
    %4239 = vmatprep.subr.bf16.mxu0 0
    %4240 = vmatpush1.bf16.msra.mxu0 %v4220
    %4241 = vmatprep.subr.bf16.mxu0 0
    %4242 = vmatpush1.bf16.msra.mxu0 %v4221
    %4243 = vmatprep.subr.bf16.mxu0 0
    %4244 = vmatpush1.bf16.msra.mxu0 %v4222
    %4245 = vmatprep.subr.bf16.mxu0 0
    %4246 = vmatpush1.bf16.msra.mxu0 %v4223
    %4247 = vmatprep.subr.bf16.mxu0 0
    %4248 = vmatpush1.bf16.msra.mxu0 %v4224
    %4249 = vmatprep.subr.bf16.mxu0 0
    %4250 = vmatpush1.bf16.msra.mxu0 0
    %4251 = vmatprep.subr.bf16.mxu0 0
    %4252 = vmatpush1.bf16.msra.mxu0 0
    %4253 = vmatprep.subr.bf16.mxu0 0
    %4254 = vmatpush1.bf16.msra.mxu0 0
    %4255 = vmatprep.subr.bf16.mxu0 0
    %4256 = vmatpush1.bf16.msra.mxu0 0
    %4257 = vmatprep.subr.bf16.mxu0 0
    %4258 = vmatpush1.bf16.msra.mxu0 0
    %4259 = vmatprep.subr.bf16.mxu0 0
    %4260 = vmatpush1.bf16.msra.mxu0 0
    %4261 = vmatprep.subr.bf16.mxu0 0
    %4262 = vmatpush1.bf16.msra.mxu0 0
    %4263 = vmatprep.subr.bf16.mxu0 0
    %4264 = vmatpush1.bf16.msra.mxu0 0
    %4265 = vmatprep.mubr.bf16.mxu0 0
    %4266 = vmatmul.mubr.bf16.gmra.mrb[0].mxu0 %v4161
    %v4267 = vpop.f32.mrb[0].mxu0
    %v4268 = vadd.f32 %v4183, %v4267
    %v4269 = vpop.f32.mrb[0].mxu0
    %v4270 = vpop.f32.mrb[0].mxu0
    %v4271 = vpop.f32.mrb[0].mxu0
    %4272 = vdwg.mxu0
    %v4273 = vmax.f32 %v4268, 0.0
    %4274 = vst [vmem:[#allocation11] sm:$0x3] %v4273
    // Predicated region
    $region50: #{_forward.1} parent=1 // pred_check
      _
    $region51: #{_forward.1} parent=1 // pred_check_branch
      %4276 = sbr.rel (0) target = $region53
    $region52: #{_forward.1} parent=1 // pred_region
      %s4278 = ssub.s32 32, 32
      %4279 = vsyncadd [#allocation7], %s4278
      %s4281 = sshll.u32 [#allocation11], 4
      %s4282 = int_to_ptr.vmem [resolvable:$true] %s4281
      %4284 = dma.vmem_to_hbm [thread:$0]  %s4282, 32, %s9, [#allocation7]
    $region53: #{_forward.1} parent=1 // pred_fallthru
      _
    // Predicated region
    $region54: #{_forward.1} parent=1 // pred_check
      _
    $region55: #{_forward.1} parent=1 // pred_check_branch
      %4286 = sbr.rel (0) target = $region57
    $region56: #{_forward.1} parent=1 // pred_region
      %4287 = dma.done [#allocation7], 32
    $region57: #{_forward.1} parent=1 // pred_fallthru
      _
    %4288 = vsyncpa [#allocation6], 1
    %4289 = vsyncpa [#allocation9], 1
    %4290 = vsyncpa [#allocation7], 1

</llo_original>
